<compile_context>
chip_gen: v7x
topology: tpu7x:2x2x1
jax: 0.10.0
libtpu: 0.0.40
codegen_flags: <defaults>
</compile_context>

<pallas_src>
import functools

import jax
import jax.numpy as jnp
from jax import lax
from jax.experimental import pallas as pl
from jax.experimental.pallas import tpu as pltpu


def _round_up(x, m):
    return (x + m - 1) // m * m


# ---------------------------------------------------------------------------
# Fused conv kernel (stride == 1): in-VMEM im2col + ONE MXU dot + bias + ReLU.
# ---------------------------------------------------------------------------
def _conv_fused_kernel(x_ref, w_ref, b_ref, o_ref, patch_ref,
                       *, KH, KW, CIN, TH, WOP):
    # x_ref:     (1, Hp, Wp, Cin)      bf16  (full padded image, resident across j)
    # w_ref:     (KH*KW*Cin, Coutp)    bf16  (pre-flattened in the wrapper)
    # b_ref:     (1, Coutp)            f32
    # o_ref:     (1, TH*WOP, Coutp)    f32   (row tile of flattened output pixels)
    # patch_ref: (TH*WOP, KH*KW*Cin)   bf16  VMEM scratch (in-VMEM im2col)
    j = pl.program_id(1)
    row0 = j * TH
    # Assemble the patch matrix: column block t = (kh, kw) holds the CIN input
    # channels of that tap for every output pixel of this row tile.
    for kh in range(KH):
        for kw in range(KW):
            t = kh * KW + kw
            tap = x_ref[0, pl.ds(row0 + kh, TH), pl.ds(kw, WOP), :]  # (TH,WOP,CIN)
            patch_ref[:, t * CIN:(t + 1) * CIN] = tap.reshape(TH * WOP, CIN)
    # Single contraction over K = KH*KW*Cin (MXU fill/drain once per tile).
    acc = jnp.dot(patch_ref[...], w_ref[...], preferred_element_type=jnp.float32)
    o_ref[0] = jnp.maximum(acc + b_ref[...], 0.0).astype(o_ref.dtype)


def _conv_relu_nhwc_fused(x_nhwc, w_hwio, bias, *, padding):
    """stride==1 conv+bias+ReLU, NHWC in / NHWC out, fused Pallas kernel."""
    N, H, W, Cin = x_nhwc.shape
    KH, KW, _, Cout = w_hwio.shape
    Ho = H + 2 * padding - KH + 1
    Wo = W + 2 * padding - KW + 1
    Kdim = KH * KW * Cin

    # Lane-dense output columns; widen to 256 where Cout permits (v6e/v7x MXU).
    Coutp = _round_up(Cout, 256) if Cout >= 256 else _round_up(Cout, 128)
    Wop = _round_up(Wo, 16)                      # bf16 sublane-tile aligned width
    TH = max(1, min(Ho, pl.cdiv(256, Wop)))      # ~256 output pixels per grid step
    n_tiles = pl.cdiv(Ho, TH)
    Ho_pad = n_tiles * TH

    Hp = Ho_pad + KH - 1                         # every tile window stays in-bounds
    Wp = Wop + KW - 1

    x_pad = jnp.pad(
        x_nhwc.astype(jnp.bfloat16),
        ((0, 0),
         (padding, Hp - H - padding),
         (padding, Wp - W - padding),
         (0, 0)))
    # Weight pre-flattened to the patch column order (kh, kw, cin).
    w2d = w_hwio.astype(jnp.bfloat16).reshape(Kdim, Cout)
    w2d = jnp.pad(w2d, ((0, 0), (0, Coutp - Cout)))
    b2d = jnp.pad(bias.astype(jnp.float32), (0, Coutp - Cout)).reshape(1, Coutp)

    kernel = functools.partial(_conv_fused_kernel, KH=KH, KW=KW, CIN=Cin,
                               TH=TH, WOP=Wop)

    # Honest (layout-padded) VMEM accounting: Cin lives in the lane dim
    # (padded to 128), Wp in the sublane dim (padded to 16 for bf16); x2 for
    # double buffering of every BlockSpec operand.
    x_blk = Hp * _round_up(Wp, 16) * _round_up(Cin, 128) * 2
    w_blk = _round_up(Kdim, 16) * Coutp * 2
    b_blk = 8 * Coutp * 4
    o_blk = TH * Wop * Coutp * 4
    patch_blk = _round_up(TH * Wop, 16) * _round_up(Kdim, 128) * 2
    vmem_need = 2 * (x_blk + w_blk + b_blk + o_blk) + patch_blk
    vmem_limit = int(min(48 * 2 ** 20,
                         max(32 * 2 ** 20, int(1.5 * vmem_need) + (4 << 20))))
    # TODO(synk): for very large images / Cin, H-tile the x block with a halo
    # (manual row-slab DMA) and merge W*Cin into the lane dim; full-image
    # residency + Cin lane padding can exceed v7x's 64 MiB VMEM.

    flops = 2 * N * Ho * Wo * Cout * Kdim
    bytes_accessed = (x_pad.size * 2 + w2d.size * 2 + b2d.size * 4
                      + N * Ho_pad * Wop * Coutp * 4)

    out = pl.pallas_call(
        kernel,
        out_shape=jax.ShapeDtypeStruct((N, Ho_pad * Wop, Coutp), jnp.float32),
        grid_spec=pltpu.PrefetchScalarGridSpec(
            num_scalar_prefetch=0,
            grid=(N, n_tiles),
            in_specs=[
                pl.BlockSpec((1, Hp, Wp, Cin), lambda n, j: (n, 0, 0, 0)),
                pl.BlockSpec((Kdim, Coutp), lambda n, j: (0, 0)),
                pl.BlockSpec((1, Coutp), lambda n, j: (0, 0)),
            ],
            out_specs=pl.BlockSpec((1, TH * Wop, Coutp), lambda n, j: (n, j, 0)),
            scratch_shapes=[pltpu.VMEM((TH * Wop, Kdim), jnp.bfloat16)],
        ),
        compiler_params=pltpu.CompilerParams(
            dimension_semantics=("parallel", "parallel"),
            vmem_limit_bytes=vmem_limit),
        cost_estimate=pl.CostEstimate(flops=int(flops), transcendentals=0,
                                      bytes_accessed=int(bytes_accessed)),
    )(x_pad, w2d, b2d)

    out = out.reshape(N, Ho_pad, Wop, Coutp)
    # Padded rows/cols/channels hold ReLU(bias) garbage; must be sliced before use.
    return out[:, :Ho, :Wo, :Cout]               # (N, Ho, Wo, Cout) NHWC


# ---------------------------------------------------------------------------
# Generic-stride fallback: im2col (XLA) + K-tiled Pallas matmul/bias/ReLU.
# ---------------------------------------------------------------------------
def _mm_bias_relu_kernel(a_ref, w_ref, b_ref, o_ref, acc_ref):
    k = pl.program_id(1)

    @pl.when(k == 0)
    def _():
        acc_ref[...] = jnp.zeros_like(acc_ref)

    acc_ref[...] += jnp.dot(a_ref[...], w_ref[...],
                            preferred_element_type=jnp.float32)

    @pl.when(k == pl.num_programs(1) - 1)
    def _():
        o_ref[...] = jnp.maximum(acc_ref[...] + b_ref[...], 0.0).astype(o_ref.dtype)


def _conv_relu_nhwc_im2col(x_nhwc, w_hwio, bias, *, stride, padding):
    # TODO(synk): replace this HBM-expanding im2col with the fused kernel using
    # strided windows so the KH*KW-expanded matrix is never written to HBM.
    N, H, W, Cin = x_nhwc.shape
    KH, KW, _, Cout = w_hwio.shape
    Ho = (H + 2 * padding - KH) // stride + 1
    Wo = (W + 2 * padding - KW) // stride + 1
    Kdim = KH * KW * Cin
    Coutp = _round_up(Cout, 256) if Cout >= 256 else _round_up(Cout, 128)

    x_pad = jnp.pad(x_nhwc.astype(jnp.bfloat16),
                    ((0, 0), (padding, padding), (padding, padding), (0, 0)))
    cols = []
    for kh in range(KH):
        for kw in range(KW):
            cols.append(x_pad[:, kh:kh + stride * Ho:stride,
                              kw:kw + stride * Wo:stride, :])
    a = jnp.concatenate(cols, axis=-1).reshape(N * Ho * Wo, Kdim)

    w2d = w_hwio.astype(jnp.bfloat16).reshape(Kdim, Cout)
    w2d = jnp.pad(w2d, ((0, 0), (0, Coutp - Cout)))
    b2d = jnp.pad(bias.astype(jnp.float32), (0, Coutp - Cout)).reshape(1, Coutp)

    Kp = _round_up(Kdim, 128)
    if Kp != Kdim:
        a = jnp.pad(a, ((0, 0), (0, Kp - Kdim)))
        w2d = jnp.pad(w2d, ((0, Kp - Kdim), (0, 0)))
    tk = 512 if Kp % 512 == 0 else (256 if Kp % 256 == 0 else 128)

    M = N * Ho * Wo
    tm = min(512, _round_up(M, 128))
    M_pad = _round_up(M, tm)
    if M_pad != M:
        a = jnp.pad(a, ((0, M_pad - M), (0, 0)))

    flops = 2 * M * Kdim * Cout
    bytes_accessed = a.size * 2 + w2d.size * 2 + b2d.size * 4 + M_pad * Coutp * 4
    vmem_need = (2 * (tm * tk * 2 + tk * Coutp * 2 + 8 * Coutp * 4
                      + tm * Coutp * 4) + tm * Coutp * 4)
    vmem_limit = int(min(48 * 2 ** 20, max(32 * 2 ** 20, 2 * vmem_need)))

    out = pl.pallas_call(
        _mm_bias_relu_kernel,
        out_shape=jax.ShapeDtypeStruct((M_pad, Coutp), jnp.float32),
        grid_spec=pltpu.PrefetchScalarGridSpec(
            num_scalar_prefetch=0,
            grid=(M_pad // tm, Kp // tk),
            in_specs=[
                pl.BlockSpec((tm, tk), lambda i, k: (i, k)),
                pl.BlockSpec((tk, Coutp), lambda i, k: (k, 0)),
                pl.BlockSpec((1, Coutp), lambda i, k: (0, 0)),
            ],
            out_specs=pl.BlockSpec((tm, Coutp), lambda i, k: (i, 0)),
            scratch_shapes=[pltpu.VMEM((tm, Coutp), jnp.float32)],
        ),
        compiler_params=pltpu.CompilerParams(
            dimension_semantics=("parallel", "arbitrary"),
            vmem_limit_bytes=vmem_limit),
        cost_estimate=pl.CostEstimate(flops=int(flops), transcendentals=0,
                                      bytes_accessed=int(bytes_accessed)),
    )(a, w2d, b2d)
    return out[:M, :Cout].reshape(N, Ho, Wo, Cout)


# ---------------------------------------------------------------------------
# Public wrapper: PyTorch NCHW / OIHW convention (layout glue only).
# ---------------------------------------------------------------------------
@functools.partial(jax.jit, static_argnames=("stride", "padding"))
def conv_forward(x, weight, bias, *, stride=1, padding=0):
    """ReLU(conv2d(x, weight) + bias); x: (N,Cin,H,W), weight: (Cout,Cin,KH,KW)."""
    x_nhwc = jnp.transpose(x, (0, 2, 3, 1))
    w_hwio = jnp.transpose(weight, (2, 3, 1, 0))          # (KH, KW, Cin, Cout)
    if stride == 1:
        out_nhwc = _conv_relu_nhwc_fused(x_nhwc, w_hwio, bias, padding=padding)
    else:
        out_nhwc = _conv_relu_nhwc_im2col(x_nhwc, w_hwio, bias,
                                          stride=stride, padding=padding)
    return jnp.transpose(out_nhwc, (0, 3, 1, 2))


# ---------------------------------------------------------------------------
# Demo / self-check
# ---------------------------------------------------------------------------
if __name__ == "__main__":
    # CONV(input_channels=4, output_channels=8, kernel_size=3, stride=1,
    #      padding=1, act='relu', batch_norm=False)
    N, Cin, H, W = 2, 4, 16, 16
    Cout, K = 8, 3

    key = jax.random.PRNGKey(0)
    kx, kw_, kb = jax.random.split(key, 3)
    x = jax.random.normal(kx, (N, Cin, H, W), dtype=jnp.float32)
    weight = jax.random.normal(kw_, (Cout, Cin, K, K), dtype=jnp.float32) * 0.1
    bias = jax.random.normal(kb, (Cout,), dtype=jnp.float32) * 0.1

    def reference(x, weight, bias, stride, padding):
        r = lax.conv_general_dilated(
            x, weight, window_strides=(stride, stride),
            padding=[(padding, padding), (padding, padding)],
            dimension_numbers=("NCHW", "OIHW", "NCHW"))
        return jnp.maximum(r + bias[None, :, None, None], 0.0)

    # Main path: stride=1, padding=1 (fused in-VMEM im2col kernel).
    y = jax.block_until_ready(conv_forward(x, weight, bias, stride=1, padding=1))
    ref = reference(x, weight, bias, 1, 1)
    assert y.shape == (N, Cout, H, W)
    # bf16 matmul inputs (f32 accumulation) -> looser tolerance than pure f32.
    assert jnp.allclose(y, ref, atol=5e-2, rtol=5e-2), "stride-1 mismatch"

    # Generic-stride fallback path (im2col + K-tiled Pallas matmul), stride=2.
    y2 = jax.block_until_ready(conv_forward(x, weight, bias, stride=2, padding=1))
    ref2 = reference(x, weight, bias, 2, 1)
    assert y2.shape == ref2.shape
    assert jnp.allclose(y2, ref2, atol=5e-2, rtol=5e-2), "stride-2 mismatch"

    # TODO(synk): batch_norm=True branch (BatchNorm2d) and non-ReLU activations
    # from get_activation() (elu/celu/mish/gelu/leaky_relu/silu) are not wired
    # in; this implements the module's default path (bias conv + ReLU).
    print("KERNEL_OK")
</pallas_src>

<mosaic_0001>
module attributes {stable_mosaic.version = 11 : i64} {
  func.func @_conv_fused_kernel(%arg0: i32, %arg1: i32, %arg2: memref<1x18x18x4xbf16, #tpu.memory_space<vmem>>, %arg3: memref<36x128xbf16, #tpu.memory_space<vmem>>, %arg4: memref<1x128xf32, #tpu.memory_space<vmem>>, %arg5: memref<1x256x128xf32, #tpu.memory_space<vmem>>, %arg6: memref<256x36xbf16, #tpu.memory_space<vmem>>) attributes {dimension_semantics = [#tpu.dimension_semantics<parallel>, #tpu.dimension_semantics<parallel>], iteration_bounds = array<i64: 2, 1>, scalar_prefetch = 0 : i64, scratch_operands = 1 : i64, tpu.core_type = #tpu.core_type<tc>, window_params = [{transform_indices = @transform_0, window_bounds = array<i64: 1, 18, 18, 4>}, {pipeline_mode = #tpu.pipeline_mode<synchronous>, transform_indices = @transform_1, window_bounds = array<i64: 36, 128>}, {pipeline_mode = #tpu.pipeline_mode<synchronous>, transform_indices = @transform_2, window_bounds = array<i64: 1, 128>}, {transform_indices = @transform_3, window_bounds = array<i64: 1, 256, 128>}]} {
    %c16_i32 = arith.constant 16 : i32
    %0 = arith.muli %arg1, %c16_i32 : i32
    %c0_i32 = arith.constant 0 : i32
    %1 = arith.addi %0, %c0_i32 : i32
    %c0 = arith.constant 0 : index
    %2 = arith.index_cast %1 : i32 to index
    %c0_0 = arith.constant 0 : index
    %c0_1 = arith.constant 0 : index
    %3 = vector.load %arg2[%c0, %2, %c0_0, %c0_1] : memref<1x18x18x4xbf16, #tpu.memory_space<vmem>>, vector<1x16x16x4xbf16>
    %4 = vector.shape_cast %3 : vector<1x16x16x4xbf16> to vector<16x16x4xbf16>
    %5 = vector.shape_cast %4 : vector<16x16x4xbf16> to vector<256x4xbf16>
    %c0_2 = arith.constant 0 : index
    %c0_3 = arith.constant 0 : index
    %6 = vector.load %arg6[%c0_2, %c0_3] : memref<256x36xbf16, #tpu.memory_space<vmem>>, vector<256x4xbf16>
    tpu.vector_store %arg6[%c0_2, %c0_3], %5 {strides = array<i32>} : memref<256x36xbf16, #tpu.memory_space<vmem>>, vector<256x4xbf16>,
    %c0_i32_4 = arith.constant 0 : i32
    %7 = arith.addi %0, %c0_i32_4 : i32
    %c0_5 = arith.constant 0 : index
    %8 = arith.index_cast %7 : i32 to index
    %c1 = arith.constant 1 : index
    %c0_6 = arith.constant 0 : index
    %9 = vector.load %arg2[%c0_5, %8, %c1, %c0_6] : memref<1x18x18x4xbf16, #tpu.memory_space<vmem>>, vector<1x16x16x4xbf16>
    %10 = vector.shape_cast %9 : vector<1x16x16x4xbf16> to vector<16x16x4xbf16>
    %11 = vector.shape_cast %10 : vector<16x16x4xbf16> to vector<256x4xbf16>
    %c0_7 = arith.constant 0 : index
    %c4 = arith.constant 4 : index
    %12 = vector.load %arg6[%c0_7, %c4] : memref<256x36xbf16, #tpu.memory_space<vmem>>, vector<256x4xbf16>
    tpu.vector_store %arg6[%c0_7, %c4], %11 {strides = array<i32>} : memref<256x36xbf16, #tpu.memory_space<vmem>>, vector<256x4xbf16>,
    %c0_i32_8 = arith.constant 0 : i32
    %13 = arith.addi %0, %c0_i32_8 : i32
    %c0_9 = arith.constant 0 : index
    %14 = arith.index_cast %13 : i32 to index
    %c2 = arith.constant 2 : index
    %c0_10 = arith.constant 0 : index
    %15 = vector.load %arg2[%c0_9, %14, %c2, %c0_10] : memref<1x18x18x4xbf16, #tpu.memory_space<vmem>>, vector<1x16x16x4xbf16>
    %16 = vector.shape_cast %15 : vector<1x16x16x4xbf16> to vector<16x16x4xbf16>
    %17 = vector.shape_cast %16 : vector<16x16x4xbf16> to vector<256x4xbf16>
    %c0_11 = arith.constant 0 : index
    %c8 = arith.constant 8 : index
    %18 = vector.load %arg6[%c0_11, %c8] : memref<256x36xbf16, #tpu.memory_space<vmem>>, vector<256x4xbf16>
    tpu.vector_store %arg6[%c0_11, %c8], %17 {strides = array<i32>} : memref<256x36xbf16, #tpu.memory_space<vmem>>, vector<256x4xbf16>,
    %c1_i32 = arith.constant 1 : i32
    %19 = arith.addi %0, %c1_i32 : i32
    %c0_12 = arith.constant 0 : index
    %20 = arith.index_cast %19 : i32 to index
    %c0_13 = arith.constant 0 : index
    %c0_14 = arith.constant 0 : index
    %21 = vector.load %arg2[%c0_12, %20, %c0_13, %c0_14] : memref<1x18x18x4xbf16, #tpu.memory_space<vmem>>, vector<1x16x16x4xbf16>
    %22 = vector.shape_cast %21 : vector<1x16x16x4xbf16> to vector<16x16x4xbf16>
    %23 = vector.shape_cast %22 : vector<16x16x4xbf16> to vector<256x4xbf16>
    %c0_15 = arith.constant 0 : index
    %c12 = arith.constant 12 : index
    %24 = vector.load %arg6[%c0_15, %c12] : memref<256x36xbf16, #tpu.memory_space<vmem>>, vector<256x4xbf16>
    tpu.vector_store %arg6[%c0_15, %c12], %23 {strides = array<i32>} : memref<256x36xbf16, #tpu.memory_space<vmem>>, vector<256x4xbf16>,
    %c1_i32_16 = arith.constant 1 : i32
    %25 = arith.addi %0, %c1_i32_16 : i32
    %c0_17 = arith.constant 0 : index
    %26 = arith.index_cast %25 : i32 to index
    %c1_18 = arith.constant 1 : index
    %c0_19 = arith.constant 0 : index
    %27 = vector.load %arg2[%c0_17, %26, %c1_18, %c0_19] : memref<1x18x18x4xbf16, #tpu.memory_space<vmem>>, vector<1x16x16x4xbf16>
    %28 = vector.shape_cast %27 : vector<1x16x16x4xbf16> to vector<16x16x4xbf16>
    %29 = vector.shape_cast %28 : vector<16x16x4xbf16> to vector<256x4xbf16>
    %c0_20 = arith.constant 0 : index
    %c16 = arith.constant 16 : index
    %30 = vector.load %arg6[%c0_20, %c16] : memref<256x36xbf16, #tpu.memory_space<vmem>>, vector<256x4xbf16>
    tpu.vector_store %arg6[%c0_20, %c16], %29 {strides = array<i32>} : memref<256x36xbf16, #tpu.memory_space<vmem>>, vector<256x4xbf16>,
    %c1_i32_21 = arith.constant 1 : i32
    %31 = arith.addi %0, %c1_i32_21 : i32
    %c0_22 = arith.constant 0 : index
    %32 = arith.index_cast %31 : i32 to index
    %c2_23 = arith.constant 2 : index
    %c0_24 = arith.constant 0 : index
    %33 = vector.load %arg2[%c0_22, %32, %c2_23, %c0_24] : memref<1x18x18x4xbf16, #tpu.memory_space<vmem>>, vector<1x16x16x4xbf16>
    %34 = vector.shape_cast %33 : vector<1x16x16x4xbf16> to vector<16x16x4xbf16>
    %35 = vector.shape_cast %34 : vector<16x16x4xbf16> to vector<256x4xbf16>
    %c0_25 = arith.constant 0 : index
    %c20 = arith.constant 20 : index
    %36 = vector.load %arg6[%c0_25, %c20] : memref<256x36xbf16, #tpu.memory_space<vmem>>, vector<256x4xbf16>
    tpu.vector_store %arg6[%c0_25, %c20], %35 {strides = array<i32>} : memref<256x36xbf16, #tpu.memory_space<vmem>>, vector<256x4xbf16>,
    %c2_i32 = arith.constant 2 : i32
    %37 = arith.addi %0, %c2_i32 : i32
    %c0_26 = arith.constant 0 : index
    %38 = arith.index_cast %37 : i32 to index
    %c0_27 = arith.constant 0 : index
    %c0_28 = arith.constant 0 : index
    %39 = vector.load %arg2[%c0_26, %38, %c0_27, %c0_28] : memref<1x18x18x4xbf16, #tpu.memory_space<vmem>>, vector<1x16x16x4xbf16>
    %40 = vector.shape_cast %39 : vector<1x16x16x4xbf16> to vector<16x16x4xbf16>
    %41 = vector.shape_cast %40 : vector<16x16x4xbf16> to vector<256x4xbf16>
    %c0_29 = arith.constant 0 : index
    %c24 = arith.constant 24 : index
    %42 = vector.load %arg6[%c0_29, %c24] : memref<256x36xbf16, #tpu.memory_space<vmem>>, vector<256x4xbf16>
    tpu.vector_store %arg6[%c0_29, %c24], %41 {strides = array<i32>} : memref<256x36xbf16, #tpu.memory_space<vmem>>, vector<256x4xbf16>,
    %c2_i32_30 = arith.constant 2 : i32
    %43 = arith.addi %0, %c2_i32_30 : i32
    %c0_31 = arith.constant 0 : index
    %44 = arith.index_cast %43 : i32 to index
    %c1_32 = arith.constant 1 : index
    %c0_33 = arith.constant 0 : index
    %45 = vector.load %arg2[%c0_31, %44, %c1_32, %c0_33] : memref<1x18x18x4xbf16, #tpu.memory_space<vmem>>, vector<1x16x16x4xbf16>
    %46 = vector.shape_cast %45 : vector<1x16x16x4xbf16> to vector<16x16x4xbf16>
    %47 = vector.shape_cast %46 : vector<16x16x4xbf16> to vector<256x4xbf16>
    %c0_34 = arith.constant 0 : index
    %c28 = arith.constant 28 : index
    %48 = vector.load %arg6[%c0_34, %c28] : memref<256x36xbf16, #tpu.memory_space<vmem>>, vector<256x4xbf16>
    tpu.vector_store %arg6[%c0_34, %c28], %47 {strides = array<i32>} : memref<256x36xbf16, #tpu.memory_space<vmem>>, vector<256x4xbf16>,
    %c2_i32_35 = arith.constant 2 : i32
    %49 = arith.addi %0, %c2_i32_35 : i32
    %c0_36 = arith.constant 0 : index
    %50 = arith.index_cast %49 : i32 to index
    %c2_37 = arith.constant 2 : index
    %c0_38 = arith.constant 0 : index
    %51 = vector.load %arg2[%c0_36, %50, %c2_37, %c0_38] : memref<1x18x18x4xbf16, #tpu.memory_space<vmem>>, vector<1x16x16x4xbf16>
    %52 = vector.shape_cast %51 : vector<1x16x16x4xbf16> to vector<16x16x4xbf16>
    %53 = vector.shape_cast %52 : vector<16x16x4xbf16> to vector<256x4xbf16>
    %c0_39 = arith.constant 0 : index
    %c32 = arith.constant 32 : index
    %54 = vector.load %arg6[%c0_39, %c32] : memref<256x36xbf16, #tpu.memory_space<vmem>>, vector<256x4xbf16>
    tpu.vector_store %arg6[%c0_39, %c32], %53 {strides = array<i32>} : memref<256x36xbf16, #tpu.memory_space<vmem>>, vector<256x4xbf16>,
    %c0_40 = arith.constant 0 : index
    %c0_41 = arith.constant 0 : index
    %55 = vector.load %arg6[%c0_40, %c0_41] : memref<256x36xbf16, #tpu.memory_space<vmem>>, vector<256x36xbf16>
    %c0_42 = arith.constant 0 : index
    %c0_43 = arith.constant 0 : index
    %56 = vector.load %arg3[%c0_42, %c0_43] : memref<36x128xbf16, #tpu.memory_space<vmem>>, vector<36x128xbf16>
    %cst = arith.constant dense<0.000000e+00> : vector<256x128xf32>
    %57 = tpu.matmul %55, %56, %cst {dimension_numbers = #tpu.dot_dimension_numbers<[1], [0], [0], [1], [0, 0, 1, 1], [], []>} : vector<256x36xbf16>, vector<36x128xbf16>, vector<256x128xf32> -> vector<256x128xf32>
    %c0_44 = arith.constant 0 : index
    %c0_45 = arith.constant 0 : index
    %58 = vector.load %arg4[%c0_44, %c0_45] : memref<1x128xf32, #tpu.memory_space<vmem>>, vector<1x128xf32>
    %59 = vector.broadcast %58 : vector<1x128xf32> to vector<256x128xf32>
    %60 = arith.addf %57, %59 : vector<256x128xf32>
    %cst_46 = arith.constant 0.000000e+00 : f32
    %61 = vector.broadcast %cst_46 : f32 to vector<256x128xf32>
    %62 = arith.maximumf %60, %61 : vector<256x128xf32>
    %c0_47 = arith.constant 0 : index
    %c0_48 = arith.constant 0 : index
    %c0_49 = arith.constant 0 : index
    %63 = vector.load %arg5[%c0_47, %c0_48, %c0_49] : memref<1x256x128xf32, #tpu.memory_space<vmem>>, vector<1x256x128xf32>
    %64 = vector.shape_cast %63 : vector<1x256x128xf32> to vector<256x128xf32>
    %65 = vector.shape_cast %62 : vector<256x128xf32> to vector<1x256x128xf32>
    tpu.vector_store %arg5[%c0_47, %c0_48, %c0_49], %65 {strides = array<i32>} : memref<1x256x128xf32, #tpu.memory_space<vmem>>, vector<1x256x128xf32>,
    return
  }
  func.func @transform_0(%arg0: i32, %arg1: i32) -> (i32, i32, i32, i32) {
    %c0_i32 = arith.constant 0 : i32
    %c0_i32_0 = arith.constant 0 : i32
    %c0_i32_1 = arith.constant 0 : i32
    %c0_i32_2 = arith.constant 0 : i32
    return %arg0, %c0_i32, %c0_i32_0, %c0_i32_1 : i32, i32, i32, i32
  }
  func.func @transform_1(%arg0: i32, %arg1: i32) -> (i32, i32) {
    %c0_i32 = arith.constant 0 : i32
    %c0_i32_0 = arith.constant 0 : i32
    %c0_i32_1 = arith.constant 0 : i32
    return %c0_i32, %c0_i32_0 : i32, i32
  }
  func.func @transform_2(%arg0: i32, %arg1: i32) -> (i32, i32) {
    %c0_i32 = arith.constant 0 : i32
    %c0_i32_0 = arith.constant 0 : i32
    %c0_i32_1 = arith.constant 0 : i32
    return %c0_i32, %c0_i32_0 : i32, i32
  }
  func.func @transform_3(%arg0: i32, %arg1: i32) -> (i32, i32, i32) {
    %c0_i32 = arith.constant 0 : i32
    %c0_i32_0 = arith.constant 0 : i32
    return %arg0, %arg1, %c0_i32 : i32, i32, i32
  }
}

</mosaic_0001>

<llo_original>
// kernel: conv_forward.1
$region0: #{conv_forward.1}
  #allocation0 [shape = 'u32[]', space=smem, size = 0x4, offset = 0x4, fixed_abs, tag = 'smem constant byte address 0x4 - core index']
  #allocation1 [shape = 'u32[144,128]{1,0:T(1,128)}', space=vmem, size = 0x12000, scoped, tag = 'internal scratch']
  #allocation2 [shape = 'bf16[256,36]{1,0:T(16,128)(2,1)}', space=vmem, size = 0x10000, scoped, tag = 'scratch operand']
  %s0 = inlined_call_operand.vmem [shape: bf16[2,18,18,4], index: 0, kind: input, shape index: {}]
  %s1 = inlined_call_operand.vmem [shape: bf16[36,128], index: 1, kind: input, shape index: {}]
  %s2 = inlined_call_operand.vmem [shape: f32[1,128], index: 2, kind: input, shape index: {}]
  %s3 = inlined_call_operand.vmem [shape: f32[2,256,128], index: 3, kind: output, shape index: {}]
  %s4 = sld [smem:[#allocation0]]
  $region45: #{conv_forward.1} parent=0
    _
  %s6 = ssub.s32 1, %s4
  %s7 = scalar_select 0, %s6, %s4
  loop: start=0, step=1, limit=4
  $region2: #{conv_forward.1} parent=0 // loop_pre_header
    _
  $region3: #{conv_forward.1} parent=0 // loop_header
    %s9 = sphi 0, %s13
    %p10 = scmp.ge.s32.totalorder %s9, 4
    %s16 = sphi 0, %s28
    %s17 = sphi 0, %s24
    %s18 = sphi 0, %s16
    %s19 = sphi 0, %s17
    %s20 = sphi 0, %s18
    %s21 = sphi 0, %s19
    %s31 = sphi 0, %s33
    %s34 = sphi 0, %s31
    %s35 = sphi 0, %s34
    %s51 = sphi 0, %s35
    %s55 = sphi 0, %s55
    %s57 = sphi 0, %s55
    %s58 = sphi 0, %s57
    %s72 = sphi 0, %s58
    %s76 = sphi 0, %s76
    %s78 = sphi 0, %s76
    %s79 = sphi 0, %s78
    %s93 = sphi 0, %s79
    %s101 = sphi 0, %s103
    %s104 = sphi 0, %s101
    %s105 = sphi 0, %s104
    %s121 = sphi 0, %s105
  $region4: #{conv_forward.1} parent=0 // loop_header_branch
    %12 = sbr.rel (%p10) target = $region8
  $region5: #{conv_forward.1} parent=0 // loop_body
    %s14 = ssub.s32 %s9, 1
    %s15 = ssub.s32 %s9, 2
    %s22 = sadd.s32 1, %s17
    %p23 = scmp.ge.s32.totalorder %s22, 1
    %s24 = scalar_select %p23, 0, %s22
    %s25 = sadd.s32 1, %s16
    %s26 = scalar_select %p23, %s25, %s16
    %p27 = scmp.ge.s32.totalorder %s26, 2
    %s28 = scalar_select %p27, 0, %s26
    %s29 = ssub.s32 %s16, %s28
    %p30 = scmp.eq.s32.totalorder %s29, 0
    %s32 = sadd.s32 %s31, 1
    %s33 = scalar_select %p30, %s31, %s32
    %p36 = pneg %p30
    %p37 = scmp.eq.s32.totalorder %s9, 1
    %p38 = por %p36, %p37
    %p39 = scmp.ne.s32.totalorder %s31, %s34
    %p40 = scmp.eq.s32.totalorder %s9, 0
    %p41 = por %p39, %p40
    %p42 = scmp.ne.s32.totalorder %s31, %s34
    %p43 = scmp.eq.s32.totalorder %s14, 1
    %p44 = por %p42, %p43
    %p45 = scmp.ne.s32.totalorder %s34, %s35
    %p46 = scmp.eq.s32.totalorder %s14, 0
    %p47 = por %p45, %p46
    %p48 = scmp.ne.s32.totalorder %s34, %s35
    %p49 = scmp.eq.s32.totalorder %s15, 1
    %p50 = por %p48, %p49
    %p52 = scmp.ne.s32.totalorder %s35, %s51
    %p53 = scmp.eq.s32.totalorder %s15, 0
    %p54 = por %p52, %p53
    %s56 = sadd.s32 %s55, 1
    %p59 = scmp.eq.s32.totalorder %s9, 1
    %p60 = scmp.ne.s32.totalorder %s55, %s57
    %p61 = scmp.eq.s32.totalorder %s9, 0
    %p62 = por %p60, %p61
    %p63 = scmp.ne.s32.totalorder %s55, %s57
    %p64 = scmp.eq.s32.totalorder %s14, 1
    %p65 = por %p63, %p64
    %p66 = scmp.ne.s32.totalorder %s57, %s58
    %p67 = scmp.eq.s32.totalorder %s14, 0
    %p68 = por %p66, %p67
    %p69 = scmp.ne.s32.totalorder %s57, %s58
    %p70 = scmp.eq.s32.totalorder %s15, 1
    %p71 = por %p69, %p70
    %p73 = scmp.ne.s32.totalorder %s58, %s72
    %p74 = scmp.eq.s32.totalorder %s15, 0
    %p75 = por %p73, %p74
    %s77 = sadd.s32 %s76, 1
    %p80 = scmp.eq.s32.totalorder %s9, 1
    %p81 = scmp.ne.s32.totalorder %s76, %s78
    %p82 = scmp.eq.s32.totalorder %s9, 0
    %p83 = por %p81, %p82
    %p84 = scmp.ne.s32.totalorder %s76, %s78
    %p85 = scmp.eq.s32.totalorder %s14, 1
    %p86 = por %p84, %p85
    %p87 = scmp.ne.s32.totalorder %s78, %s79
    %p88 = scmp.eq.s32.totalorder %s14, 0
    %p89 = por %p87, %p88
    %p90 = scmp.ne.s32.totalorder %s78, %s79
    %p91 = scmp.eq.s32.totalorder %s15, 1
    %p92 = por %p90, %p91
    %p94 = scmp.ne.s32.totalorder %s79, %s93
    %p95 = scmp.eq.s32.totalorder %s15, 0
    %p96 = por %p94, %p95
    %s97 = ssub.s32 %s16, %s28
    %s98 = ssub.s32 %s17, %s24
    %s99 = sor.u32 %s97, %s98
    %p100 = scmp.eq.s32.totalorder %s99, 0
    %s102 = sadd.s32 %s101, 1
    %s103 = scalar_select %p100, %s101, %s102
    %p106 = pneg %p100
    %p107 = scmp.eq.s32.totalorder %s9, 1
    %p108 = por %p106, %p107
    %p109 = scmp.ne.s32.totalorder %s101, %s104
    %p110 = scmp.eq.s32.totalorder %s9, 0
    %p111 = por %p109, %p110
    %p112 = scmp.ne.s32.totalorder %s101, %s104
    %p113 = scmp.eq.s32.totalorder %s14, 1
    %p114 = por %p112, %p113
    %p115 = scmp.ne.s32.totalorder %s104, %s105
    %p116 = scmp.eq.s32.totalorder %s14, 0
    %p117 = por %p115, %p116
    %p118 = scmp.ne.s32.totalorder %s104, %s105
    %p119 = scmp.eq.s32.totalorder %s15, 1
    %p120 = por %p118, %p119
    %p122 = scmp.ne.s32.totalorder %s105, %s121
    %p123 = scmp.eq.s32.totalorder %s15, 0
    %p124 = por %p122, %p123
    %p125 = scmp.le.s32.totalorder 1, %s9
    %p126 = scmp.lt.s32.totalorder %s9, 3
    %p127 = pnand %p125, %p126
    %p128 = pneg %p127
    // Predicated region
    $region9: #{conv_forward.1} parent=5 // pred_check
      _
    $region10: #{conv_forward.1} parent=5 // pred_check_branch
      %130 = sbr.rel (%p127) target = $region12
    $region11: #{conv_forward.1} parent=5 // pred_region
      %s131 = ssub.s32 %s9, 1
      // Predicated region
      $region13: #{conv_forward.1} parent=11 // pred_check
        %p132 = pneg %p68
      $region14: #{conv_forward.1} parent=11 // pred_check_branch
        %134 = sbr.rel (%p132) target = $region16
      $region15: #{conv_forward.1} parent=11 // pred_region
        _
      $region16: #{conv_forward.1} parent=11 // pred_fallthru
        _
      // Predicated region
      $region17: #{conv_forward.1} parent=11 // pred_check
        %p135 = pneg %p89
      $region18: #{conv_forward.1} parent=11 // pred_check_branch
        %137 = sbr.rel (%p135) target = $region20
      $region19: #{conv_forward.1} parent=11 // pred_region
        _
      $region20: #{conv_forward.1} parent=11 // pred_fallthru
        _
    $region12: #{conv_forward.1} parent=5 // pred_fallthru
      _
    %p138 = scmp.lt.s32.totalorder %s9, 2
    // Predicated region
    $region21: #{conv_forward.1} parent=5 // pred_check
      %p139 = pneg %p138
    $region22: #{conv_forward.1} parent=5 // pred_check_branch
      %141 = sbr.rel (%p139) target = $region24
    $region23: #{conv_forward.1} parent=5 // pred_region
      // Predicated region
      $region25: #{conv_forward.1} parent=23 // pred_check
        %p142 = pneg %p41
      $region26: #{conv_forward.1} parent=23 // pred_check_branch
        %144 = sbr.rel (%p142) target = $region28
      $region27: #{conv_forward.1} parent=23 // pred_region
        %p145 = scmp.lt.s32.totalorder %s16, 1
        %s146 = scalar_select %p145, %s16, 1
        %s147 = smul.addr %s146, 54
        %s148 = smul.addr %s147, 4
        %s149 = scalar_lea.vmem %s0, %s148
      $region28: #{conv_forward.1} parent=23 // pred_fallthru
        _
    $region24: #{conv_forward.1} parent=5 // pred_fallthru
      _
    %p150 = scmp.le.s32.totalorder 1, %s9
    %p151 = scmp.lt.s32.totalorder %s9, 3
    %p152 = pnand %p150, %p151
    %p153 = pneg %p152
    // Predicated region
    $region29: #{conv_forward.1} parent=5 // pred_check
      _
    $region30: #{conv_forward.1} parent=5 // pred_check_branch
      %155 = sbr.rel (%p152) target = $region32
    $region31: #{conv_forward.1} parent=5 // pred_region
      %s156 = ssub.s32 %s9, 1
      %p157 = scmp.lt.s32.totalorder %s18, 1
      %s158 = scalar_select %p157, %s18, 1
      %s159 = smul.addr %s158, 54
      %s160 = smul.addr %s159, 4
      %s161 = scalar_lea.vmem %s0, %s160
      %p162 = pneg %p47
      %p163 = pneg %p44
      %p164 = pneg %p68
      %p165 = pneg %p65
      %p166 = pneg %p89
      %p167 = pneg %p86
      %p168 = pneg %p117
      %p169 = pneg %p114
      %s170 = smul.u32 32, %s19
      %p171 = scmp.lt.s32.totalorder %s18, 1
      %s172 = scalar_select %p171, %s18, 1
      %p173 = scmp.lt.s32.totalorder %s170, 31
      %s174 = scalar_select %p173, %s170, 31
      %s175 = smul.addr %s172, 32
      %s176 = sadd.s32 %s174, %s175
      %s177 = smul.addr %s176, 8
      %s178 = scalar_lea.vmem %s3, %s177
      %p179 = scmp.lt.s32.totalorder %s18, 1
      %s180 = scalar_select %p179, %s18, 1
      %s181 = smul.addr %s180, 54
      %s182 = smul.addr %s181, 4
      %s183 = scalar_lea.vmem %s0, %s182
      %s184 = smul.u32 32, %s19
      %p185 = scmp.lt.s32.totalorder %s18, 1
      %s186 = scalar_select %p185, %s18, 1
      %p187 = scmp.lt.s32.totalorder %s184, 31
      %s188 = scalar_select %p187, %s184, 31
      %s189 = smul.addr %s186, 32
      %s190 = sadd.s32 %s188, %s189
      %s191 = smul.addr %s190, 8
      %s192 = scalar_lea.vmem %s3, %s191
      %s193 = smul.u32 32, %s19
      %s195 = smul.u32 %s19, 16
      %s196 = smul.u32 %s195, 3
      %s197 = smul.addr %s196, 4
      %s198 = scalar_lea.vmem %s183, %s197
      %v199 = vld [vmem:[%s198] sm:$0xf]
      %v200 = vld [vmem:[%s198 + $0x4] sm:$0xf]
      %v201 = vld [vmem:[%s198 + $0xc] sm:$0xf]
      %v202 = vld [vmem:[%s198 + $0x10] sm:$0xf]
      %v203 = vld [vmem:[%s198 + $0x18] sm:$0xf]
      %v204 = vld [vmem:[%s198 + $0x1c] sm:$0xf]
      %v205 = vld [vmem:[%s198 + $0x24] sm:$0xf]
      %v206 = vld [vmem:[%s198 + $0x28] sm:$0xf]
      %v207 = vld [vmem:[%s198 + $0x30] sm:$0xf]
      %v208 = vld [vmem:[%s198 + $0x34] sm:$0xf]
      %v209 = vld [vmem:[%s198 + $0x3c] sm:$0xf]
      %v210 = vld [vmem:[%s198 + $0x40] sm:$0xf]
      %v211 = vld [vmem:[%s198 + $0x48] sm:$0xf]
      %v212 = vld [vmem:[%s198 + $0x4c] sm:$0xf]
      %v213 = vld [vmem:[%s198 + $0x54] sm:$0xf]
      %v214 = vld [vmem:[%s198 + $0x58] sm:$0xf]
      %v215 = vld [vmem:[%s198 + $0x60] sm:$0xf]
      %v216 = vld [vmem:[%s198 + $0x64] sm:$0xf]
      %v217 = vld [vmem:[%s198 + $0x6c] sm:$0xf]
      %v218 = vld [vmem:[%s198 + $0x70] sm:$0xf]
      %v219 = vld [vmem:[%s198 + $0x78] sm:$0xf]
      %v220 = vld [vmem:[%s198 + $0x7c] sm:$0xf]
      %v221 = vld [vmem:[%s198 + $0x84] sm:$0xf]
      %v222 = vld [vmem:[%s198 + $0x88] sm:$0xf]
      %v223 = vld [vmem:[%s198 + $0x90] sm:$0xf]
      %v224 = vld [vmem:[%s198 + $0x94] sm:$0xf]
      %v225 = vld [vmem:[%s198 + $0x9c] sm:$0xf]
      %v226 = vld [vmem:[%s198 + $0xa0] sm:$0xf]
      %v227 = vld [vmem:[%s198 + $0xa8] sm:$0xf]
      %v228 = vld [vmem:[%s198 + $0xac] sm:$0xf]
      %v229 = vld [vmem:[%s198 + $0xb4] sm:$0xf]
      %v230 = vld [vmem:[%s198 + $0xb8] sm:$0xf]
      %v263 = vunpack.c.l.b16 %v199
      %v264 = vunpack.c.l.b16 %v200
      %v265 = vunpack.c.l.b16 %v201
      %v266 = vunpack.c.l.b16 %v202
      %v267 = vunpack.c.l.b16 %v203
      %v268 = vunpack.c.l.b16 %v204
      %v269 = vunpack.c.l.b16 %v205
      %v270 = vunpack.c.l.b16 %v206
      %v271 = vunpack.c.l.b16 %v207
      %v272 = vunpack.c.l.b16 %v208
      %v273 = vunpack.c.l.b16 %v209
      %v274 = vunpack.c.l.b16 %v210
      %v275 = vunpack.c.l.b16 %v211
      %v276 = vunpack.c.l.b16 %v212
      %v277 = vunpack.c.l.b16 %v213
      %v278 = vunpack.c.l.b16 %v214
      %v279 = vunpack.c.l.b16 %v215
      %v280 = vunpack.c.l.b16 %v216
      %v281 = vunpack.c.l.b16 %v217
      %v282 = vunpack.c.l.b16 %v218
      %v283 = vunpack.c.l.b16 %v219
      %v284 = vunpack.c.l.b16 %v220
      %v285 = vunpack.c.l.b16 %v221
      %v286 = vunpack.c.l.b16 %v222
      %v287 = vunpack.c.l.b16 %v223
      %v288 = vunpack.c.l.b16 %v224
      %v289 = vunpack.c.l.b16 %v225
      %v290 = vunpack.c.l.b16 %v226
      %v291 = vunpack.c.l.b16 %v227
      %v292 = vunpack.c.l.b16 %v228
      %v293 = vunpack.c.l.b16 %v229
      %v294 = vunpack.c.l.b16 %v230
      %v295 = vpack.c.b16 %v264, %v263
      %v296 = vpack.c.b16 %v266, %v265
      %v297 = vpack.c.b16 %v268, %v267
      %v298 = vpack.c.b16 %v270, %v269
      %v299 = vpack.c.b16 %v272, %v271
      %v300 = vpack.c.b16 %v274, %v273
      %v301 = vpack.c.b16 %v276, %v275
      %v302 = vpack.c.b16 %v278, %v277
      %v303 = vpack.c.b16 %v280, %v279
      %v304 = vpack.c.b16 %v282, %v281
      %v305 = vpack.c.b16 %v284, %v283
      %v306 = vpack.c.b16 %v286, %v285
      %v307 = vpack.c.b16 %v288, %v287
      %v308 = vpack.c.b16 %v290, %v289
      %v309 = vpack.c.b16 %v292, %v291
      %v310 = vpack.c.b16 %v294, %v293
      %vm327 = vcmask 31744
      %328 = vst.msk [vmem:[#allocation2] sm:$0xff] %vm327, %v295
      %329 = vst.msk [vmem:[#allocation2 + $0x8] sm:$0xff] %vm327, %v296
      %330 = vst.msk [vmem:[#allocation2 + $0x10] sm:$0xff] %vm327, %v297
      %331 = vst.msk [vmem:[#allocation2 + $0x18] sm:$0xff] %vm327, %v298
      %332 = vst.msk [vmem:[#allocation2 + $0x20] sm:$0xff] %vm327, %v299
      %333 = vst.msk [vmem:[#allocation2 + $0x28] sm:$0xff] %vm327, %v300
      %334 = vst.msk [vmem:[#allocation2 + $0x30] sm:$0xff] %vm327, %v301
      %335 = vst.msk [vmem:[#allocation2 + $0x38] sm:$0xff] %vm327, %v302
      %336 = vst.msk [vmem:[#allocation2 + $0x40] sm:$0xff] %vm327, %v303
      %337 = vst.msk [vmem:[#allocation2 + $0x48] sm:$0xff] %vm327, %v304
      %338 = vst.msk [vmem:[#allocation2 + $0x50] sm:$0xff] %vm327, %v305
      %339 = vst.msk [vmem:[#allocation2 + $0x58] sm:$0xff] %vm327, %v306
      %340 = vst.msk [vmem:[#allocation2 + $0x60] sm:$0xff] %vm327, %v307
      %341 = vst.msk [vmem:[#allocation2 + $0x68] sm:$0xff] %vm327, %v308
      %342 = vst.msk [vmem:[#allocation2 + $0x70] sm:$0xff] %vm327, %v309
      %343 = vst.msk [vmem:[#allocation2 + $0x78] sm:$0xff] %vm327, %v310
      %v344 = vld [vmem:[%s198] sm:$0xf]
      %v345 = vld [vmem:[%s198 + $0x4] sm:$0xf]
      %v346 = vld [vmem:[%s198 + $0x8] sm:$0x1]
      %v347 = vld [vmem:[%s198 + $0xc] sm:$0xf]
      %v348 = vld [vmem:[%s198 + $0x10] sm:$0xf]
      %v349 = vld [vmem:[%s198 + $0x14] sm:$0x1]
      %v350 = vld [vmem:[%s198 + $0x18] sm:$0xf]
      %v351 = vld [vmem:[%s198 + $0x1c] sm:$0xf]
      %v352 = vld [vmem:[%s198 + $0x20] sm:$0x1]
      %v353 = vld [vmem:[%s198 + $0x24] sm:$0xf]
      %v354 = vld [vmem:[%s198 + $0x28] sm:$0xf]
      %v355 = vld [vmem:[%s198 + $0x2c] sm:$0x1]
      %v356 = vld [vmem:[%s198 + $0x30] sm:$0xf]
      %v357 = vld [vmem:[%s198 + $0x34] sm:$0xf]
      %v358 = vld [vmem:[%s198 + $0x38] sm:$0x1]
      %v359 = vld [vmem:[%s198 + $0x3c] sm:$0xf]
      %v360 = vld [vmem:[%s198 + $0x40] sm:$0xf]
      %v361 = vld [vmem:[%s198 + $0x44] sm:$0x1]
      %v362 = vld [vmem:[%s198 + $0x48] sm:$0xf]
      %v363 = vld [vmem:[%s198 + $0x4c] sm:$0xf]
      %v364 = vld [vmem:[%s198 + $0x50] sm:$0x1]
      %v365 = vld [vmem:[%s198 + $0x54] sm:$0xf]
      %v366 = vld [vmem:[%s198 + $0x58] sm:$0xf]
      %v367 = vld [vmem:[%s198 + $0x5c] sm:$0x1]
      %v368 = vld [vmem:[%s198 + $0x60] sm:$0xf]
      %v369 = vld [vmem:[%s198 + $0x64] sm:$0xf]
      %v370 = vld [vmem:[%s198 + $0x68] sm:$0x1]
      %v371 = vld [vmem:[%s198 + $0x6c] sm:$0xf]
      %v372 = vld [vmem:[%s198 + $0x70] sm:$0xf]
      %v373 = vld [vmem:[%s198 + $0x74] sm:$0x1]
      %v374 = vld [vmem:[%s198 + $0x78] sm:$0xf]
      %v375 = vld [vmem:[%s198 + $0x7c] sm:$0xf]
      %v376 = vld [vmem:[%s198 + $0x80] sm:$0x1]
      %v377 = vld [vmem:[%s198 + $0x84] sm:$0xf]
      %v378 = vld [vmem:[%s198 + $0x88] sm:$0xf]
      %v379 = vld [vmem:[%s198 + $0x8c] sm:$0x1]
      %v380 = vld [vmem:[%s198 + $0x90] sm:$0xf]
      %v381 = vld [vmem:[%s198 + $0x94] sm:$0xf]
      %v382 = vld [vmem:[%s198 + $0x98] sm:$0x1]
      %v383 = vld [vmem:[%s198 + $0x9c] sm:$0xf]
      %v384 = vld [vmem:[%s198 + $0xa0] sm:$0xf]
      %v385 = vld [vmem:[%s198 + $0xa4] sm:$0x1]
      %v386 = vld [vmem:[%s198 + $0xa8] sm:$0xf]
      %v387 = vld [vmem:[%s198 + $0xac] sm:$0xf]
      %v388 = vld [vmem:[%s198 + $0xb0] sm:$0x1]
      %v389 = vld [vmem:[%s198 + $0xb4] sm:$0xf]
      %v390 = vld [vmem:[%s198 + $0xb8] sm:$0xf]
      %v391 = vld [vmem:[%s198 + $0xbc] sm:$0x1]
      %vm392 = vsmask.f32 3328
      %vm393 = vsmask.f32 7440
      %vm394 = vmor %vm392, %vm393
      %v396 = vshrl.u32 %v344, 16
      %v398 = vrot.slane %v396, 4
      %v399 = vshll.u32 %v344, 16
      %v401 = vrot.slane %v399, 5
      %v402 = vor.u32 %v398, %v401
      %v403 = vrot.slane %v402, 4
      %v405 = vshll.u32 %v345, 16
      %v407 = vrot.slane %v405, 5
      %v408 = vsel %vm394, %v403, %v407
      %v409 = vshrl.u32 %v345, 16
      %v411 = vrot.slane %v409, 4
      %v412 = vor.u32 %v411, %v407
      %v413 = vrot.slane %v412, 4
      %v415 = vshll.u32 %v346, 16
      %v417 = vrot.slane %v415, 5
      %v418 = vsel %vm394, %v413, %v417
      %v420 = vshrl.u32 %v347, 16
      %v422 = vrot.slane %v420, 4
      %v423 = vshll.u32 %v347, 16
      %v425 = vrot.slane %v423, 5
      %v426 = vor.u32 %v422, %v425
      %v427 = vrot.slane %v426, 4
      %v429 = vshll.u32 %v348, 16
      %v431 = vrot.slane %v429, 5
      %v432 = vsel %vm394, %v427, %v431
      %v433 = vshrl.u32 %v348, 16
      %v435 = vrot.slane %v433, 4
      %v436 = vor.u32 %v435, %v431
      %v437 = vrot.slane %v436, 4
      %v439 = vshll.u32 %v349, 16
      %v441 = vrot.slane %v439, 5
      %v442 = vsel %vm394, %v437, %v441
      %v444 = vshrl.u32 %v350, 16
      %v446 = vrot.slane %v444, 4
      %v447 = vshll.u32 %v350, 16
      %v449 = vrot.slane %v447, 5
      %v450 = vor.u32 %v446, %v449
      %v451 = vrot.slane %v450, 4
      %v453 = vshll.u32 %v351, 16
      %v455 = vrot.slane %v453, 5
      %v456 = vsel %vm394, %v451, %v455
      %v457 = vshrl.u32 %v351, 16
      %v459 = vrot.slane %v457, 4
      %v460 = vor.u32 %v459, %v455
      %v461 = vrot.slane %v460, 4
      %v463 = vshll.u32 %v352, 16
      %v465 = vrot.slane %v463, 5
      %v466 = vsel %vm394, %v461, %v465
      %v468 = vshrl.u32 %v353, 16
      %v470 = vrot.slane %v468, 4
      %v471 = vshll.u32 %v353, 16
      %v473 = vrot.slane %v471, 5
      %v474 = vor.u32 %v470, %v473
      %v475 = vrot.slane %v474, 4
      %v477 = vshll.u32 %v354, 16
      %v479 = vrot.slane %v477, 5
      %v480 = vsel %vm394, %v475, %v479
      %v481 = vshrl.u32 %v354, 16
      %v483 = vrot.slane %v481, 4
      %v484 = vor.u32 %v483, %v479
      %v485 = vrot.slane %v484, 4
      %v487 = vshll.u32 %v355, 16
      %v489 = vrot.slane %v487, 5
      %v490 = vsel %vm394, %v485, %v489
      %v492 = vshrl.u32 %v356, 16
      %v494 = vrot.slane %v492, 4
      %v495 = vshll.u32 %v356, 16
      %v497 = vrot.slane %v495, 5
      %v498 = vor.u32 %v494, %v497
      %v499 = vrot.slane %v498, 4
      %v501 = vshll.u32 %v357, 16
      %v503 = vrot.slane %v501, 5
      %v504 = vsel %vm394, %v499, %v503
      %v505 = vshrl.u32 %v357, 16
      %v507 = vrot.slane %v505, 4
      %v508 = vor.u32 %v507, %v503
      %v509 = vrot.slane %v508, 4
      %v511 = vshll.u32 %v358, 16
      %v513 = vrot.slane %v511, 5
      %v514 = vsel %vm394, %v509, %v513
      %v516 = vshrl.u32 %v359, 16
      %v518 = vrot.slane %v516, 4
      %v519 = vshll.u32 %v359, 16
      %v521 = vrot.slane %v519, 5
      %v522 = vor.u32 %v518, %v521
      %v523 = vrot.slane %v522, 4
      %v525 = vshll.u32 %v360, 16
      %v527 = vrot.slane %v525, 5
      %v528 = vsel %vm394, %v523, %v527
      %v529 = vshrl.u32 %v360, 16
      %v531 = vrot.slane %v529, 4
      %v532 = vor.u32 %v531, %v527
      %v533 = vrot.slane %v532, 4
      %v535 = vshll.u32 %v361, 16
      %v537 = vrot.slane %v535, 5
      %v538 = vsel %vm394, %v533, %v537
      %v540 = vshrl.u32 %v362, 16
      %v542 = vrot.slane %v540, 4
      %v543 = vshll.u32 %v362, 16
      %v545 = vrot.slane %v543, 5
      %v546 = vor.u32 %v542, %v545
      %v547 = vrot.slane %v546, 4
      %v549 = vshll.u32 %v363, 16
      %v551 = vrot.slane %v549, 5
      %v552 = vsel %vm394, %v547, %v551
      %v553 = vshrl.u32 %v363, 16
      %v555 = vrot.slane %v553, 4
      %v556 = vor.u32 %v555, %v551
      %v557 = vrot.slane %v556, 4
      %v559 = vshll.u32 %v364, 16
      %v561 = vrot.slane %v559, 5
      %v562 = vsel %vm394, %v557, %v561
      %v564 = vshrl.u32 %v365, 16
      %v566 = vrot.slane %v564, 4
      %v567 = vshll.u32 %v365, 16
      %v569 = vrot.slane %v567, 5
      %v570 = vor.u32 %v566, %v569
      %v571 = vrot.slane %v570, 4
      %v573 = vshll.u32 %v366, 16
      %v575 = vrot.slane %v573, 5
      %v576 = vsel %vm394, %v571, %v575
      %v577 = vshrl.u32 %v366, 16
      %v579 = vrot.slane %v577, 4
      %v580 = vor.u32 %v579, %v575
      %v581 = vrot.slane %v580, 4
      %v583 = vshll.u32 %v367, 16
      %v585 = vrot.slane %v583, 5
      %v586 = vsel %vm394, %v581, %v585
      %v588 = vshrl.u32 %v368, 16
      %v590 = vrot.slane %v588, 4
      %v591 = vshll.u32 %v368, 16
      %v593 = vrot.slane %v591, 5
      %v594 = vor.u32 %v590, %v593
      %v595 = vrot.slane %v594, 4
      %v597 = vshll.u32 %v369, 16
      %v599 = vrot.slane %v597, 5
      %v600 = vsel %vm394, %v595, %v599
      %v601 = vshrl.u32 %v369, 16
      %v603 = vrot.slane %v601, 4
      %v604 = vor.u32 %v603, %v599
      %v605 = vrot.slane %v604, 4
      %v607 = vshll.u32 %v370, 16
      %v609 = vrot.slane %v607, 5
      %v610 = vsel %vm394, %v605, %v609
      %v612 = vshrl.u32 %v371, 16
      %v614 = vrot.slane %v612, 4
      %v615 = vshll.u32 %v371, 16
      %v617 = vrot.slane %v615, 5
      %v618 = vor.u32 %v614, %v617
      %v619 = vrot.slane %v618, 4
      %v621 = vshll.u32 %v372, 16
      %v623 = vrot.slane %v621, 5
      %v624 = vsel %vm394, %v619, %v623
      %v625 = vshrl.u32 %v372, 16
      %v627 = vrot.slane %v625, 4
      %v628 = vor.u32 %v627, %v623
      %v629 = vrot.slane %v628, 4
      %v631 = vshll.u32 %v373, 16
      %v633 = vrot.slane %v631, 5
      %v634 = vsel %vm394, %v629, %v633
      %v636 = vshrl.u32 %v374, 16
      %v638 = vrot.slane %v636, 4
      %v639 = vshll.u32 %v374, 16
      %v641 = vrot.slane %v639, 5
      %v642 = vor.u32 %v638, %v641
      %v643 = vrot.slane %v642, 4
      %v645 = vshll.u32 %v375, 16
      %v647 = vrot.slane %v645, 5
      %v648 = vsel %vm394, %v643, %v647
      %v649 = vshrl.u32 %v375, 16
      %v651 = vrot.slane %v649, 4
      %v652 = vor.u32 %v651, %v647
      %v653 = vrot.slane %v652, 4
      %v655 = vshll.u32 %v376, 16
      %v657 = vrot.slane %v655, 5
      %v658 = vsel %vm394, %v653, %v657
      %v660 = vshrl.u32 %v377, 16
      %v662 = vrot.slane %v660, 4
      %v663 = vshll.u32 %v377, 16
      %v665 = vrot.slane %v663, 5
      %v666 = vor.u32 %v662, %v665
      %v667 = vrot.slane %v666, 4
      %v669 = vshll.u32 %v378, 16
      %v671 = vrot.slane %v669, 5
      %v672 = vsel %vm394, %v667, %v671
      %v673 = vshrl.u32 %v378, 16
      %v675 = vrot.slane %v673, 4
      %v676 = vor.u32 %v675, %v671
      %v677 = vrot.slane %v676, 4
      %v679 = vshll.u32 %v379, 16
      %v681 = vrot.slane %v679, 5
      %v682 = vsel %vm394, %v677, %v681
      %v684 = vshrl.u32 %v380, 16
      %v686 = vrot.slane %v684, 4
      %v687 = vshll.u32 %v380, 16
      %v689 = vrot.slane %v687, 5
      %v690 = vor.u32 %v686, %v689
      %v691 = vrot.slane %v690, 4
      %v693 = vshll.u32 %v381, 16
      %v695 = vrot.slane %v693, 5
      %v696 = vsel %vm394, %v691, %v695
      %v697 = vshrl.u32 %v381, 16
      %v699 = vrot.slane %v697, 4
      %v700 = vor.u32 %v699, %v695
      %v701 = vrot.slane %v700, 4
      %v703 = vshll.u32 %v382, 16
      %v705 = vrot.slane %v703, 5
      %v706 = vsel %vm394, %v701, %v705
      %v708 = vshrl.u32 %v383, 16
      %v710 = vrot.slane %v708, 4
      %v711 = vshll.u32 %v383, 16
      %v713 = vrot.slane %v711, 5
      %v714 = vor.u32 %v710, %v713
      %v715 = vrot.slane %v714, 4
      %v717 = vshll.u32 %v384, 16
      %v719 = vrot.slane %v717, 5
      %v720 = vsel %vm394, %v715, %v719
      %v721 = vshrl.u32 %v384, 16
      %v723 = vrot.slane %v721, 4
      %v724 = vor.u32 %v723, %v719
      %v725 = vrot.slane %v724, 4
      %v727 = vshll.u32 %v385, 16
      %v729 = vrot.slane %v727, 5
      %v730 = vsel %vm394, %v725, %v729
      %v732 = vshrl.u32 %v386, 16
      %v734 = vrot.slane %v732, 4
      %v735 = vshll.u32 %v386, 16
      %v737 = vrot.slane %v735, 5
      %v738 = vor.u32 %v734, %v737
      %v739 = vrot.slane %v738, 4
      %v741 = vshll.u32 %v387, 16
      %v743 = vrot.slane %v741, 5
      %v744 = vsel %vm394, %v739, %v743
      %v745 = vshrl.u32 %v387, 16
      %v747 = vrot.slane %v745, 4
      %v748 = vor.u32 %v747, %v743
      %v749 = vrot.slane %v748, 4
      %v751 = vshll.u32 %v388, 16
      %v753 = vrot.slane %v751, 5
      %v754 = vsel %vm394, %v749, %v753
      %v756 = vshrl.u32 %v389, 16
      %v758 = vrot.slane %v756, 4
      %v759 = vshll.u32 %v389, 16
      %v761 = vrot.slane %v759, 5
      %v762 = vor.u32 %v758, %v761
      %v763 = vrot.slane %v762, 4
      %v765 = vshll.u32 %v390, 16
      %v767 = vrot.slane %v765, 5
      %v768 = vsel %vm394, %v763, %v767
      %v769 = vshrl.u32 %v390, 16
      %v771 = vrot.slane %v769, 4
      %v772 = vor.u32 %v771, %v767
      %v773 = vrot.slane %v772, 4
      %v775 = vshll.u32 %v391, 16
      %v777 = vrot.slane %v775, 5
      %v778 = vsel %vm394, %v773, %v777
      %v779 = vunpack.c.l.b16 %v408
      %v780 = vunpack.c.l.b16 %v418
      %v781 = vunpack.c.l.b16 %v432
      %v782 = vunpack.c.l.b16 %v442
      %v783 = vunpack.c.l.b16 %v456
      %v784 = vunpack.c.l.b16 %v466
      %v785 = vunpack.c.l.b16 %v480
      %v786 = vunpack.c.l.b16 %v490
      %v787 = vunpack.c.l.b16 %v504
      %v788 = vunpack.c.l.b16 %v514
      %v789 = vunpack.c.l.b16 %v528
      %v790 = vunpack.c.l.b16 %v538
      %v791 = vunpack.c.l.b16 %v552
      %v792 = vunpack.c.l.b16 %v562
      %v793 = vunpack.c.l.b16 %v576
      %v794 = vunpack.c.l.b16 %v586
      %v795 = vunpack.c.l.b16 %v600
      %v796 = vunpack.c.l.b16 %v610
      %v797 = vunpack.c.l.b16 %v624
      %v798 = vunpack.c.l.b16 %v634
      %v799 = vunpack.c.l.b16 %v648
      %v800 = vunpack.c.l.b16 %v658
      %v801 = vunpack.c.l.b16 %v672
      %v802 = vunpack.c.l.b16 %v682
      %v803 = vunpack.c.l.b16 %v696
      %v804 = vunpack.c.l.b16 %v706
      %v805 = vunpack.c.l.b16 %v720
      %v806 = vunpack.c.l.b16 %v730
      %v807 = vunpack.c.l.b16 %v744
      %v808 = vunpack.c.l.b16 %v754
      %v809 = vunpack.c.l.b16 %v768
      %v810 = vunpack.c.l.b16 %v778
      %v811 = vpack.c.b16 %v780, %v779
      %v812 = vpack.c.b16 %v782, %v781
      %v813 = vpack.c.b16 %v784, %v783
      %v814 = vpack.c.b16 %v786, %v785
      %v815 = vpack.c.b16 %v788, %v787
      %v816 = vpack.c.b16 %v790, %v789
      %v817 = vpack.c.b16 %v792, %v791
      %v818 = vpack.c.b16 %v794, %v793
      %v819 = vpack.c.b16 %v796, %v795
      %v820 = vpack.c.b16 %v798, %v797
      %v821 = vpack.c.b16 %v800, %v799
      %v822 = vpack.c.b16 %v802, %v801
      %v823 = vpack.c.b16 %v804, %v803
      %v824 = vpack.c.b16 %v806, %v805
      %v825 = vpack.c.b16 %v808, %v807
      %v826 = vpack.c.b16 %v810, %v809
      %827 = vrot.lane.b32.xlu0 %v811, 4
      %v828 = vpop.permute.xlu0 %827
      %829 = vrot.lane.b32.xlu0 %v812, 4
      %v830 = vpop.permute.xlu0 %829
      %831 = vrot.lane.b32.xlu0 %v813, 4
      %v832 = vpop.permute.xlu0 %831
      %833 = vrot.lane.b32.xlu0 %v814, 4
      %v834 = vpop.permute.xlu0 %833
      %835 = vrot.lane.b32.xlu0 %v815, 4
      %v836 = vpop.permute.xlu0 %835
      %837 = vrot.lane.b32.xlu0 %v816, 4
      %v838 = vpop.permute.xlu0 %837
      %839 = vrot.lane.b32.xlu0 %v817, 4
      %v840 = vpop.permute.xlu0 %839
      %841 = vrot.lane.b32.xlu0 %v818, 4
      %v842 = vpop.permute.xlu0 %841
      %843 = vrot.lane.b32.xlu0 %v819, 4
      %v844 = vpop.permute.xlu0 %843
      %845 = vrot.lane.b32.xlu0 %v820, 4
      %v846 = vpop.permute.xlu0 %845
      %847 = vrot.lane.b32.xlu0 %v821, 4
      %v848 = vpop.permute.xlu0 %847
      %849 = vrot.lane.b32.xlu0 %v822, 4
      %v850 = vpop.permute.xlu0 %849
      %851 = vrot.lane.b32.xlu0 %v823, 4
      %v852 = vpop.permute.xlu0 %851
      %853 = vrot.lane.b32.xlu0 %v824, 4
      %v854 = vpop.permute.xlu0 %853
      %855 = vrot.lane.b32.xlu0 %v825, 4
      %v856 = vpop.permute.xlu0 %855
      %857 = vrot.lane.b32.xlu0 %v826, 4
      %v858 = vpop.permute.xlu0 %857
      %vm875 = vcmask 64544
      %876 = vst.msk [vmem:[#allocation2] sm:$0xff] %vm875, %v828
      %877 = vst.msk [vmem:[#allocation2 + $0x8] sm:$0xff] %vm875, %v830
      %878 = vst.msk [vmem:[#allocation2 + $0x10] sm:$0xff] %vm875, %v832
      %879 = vst.msk [vmem:[#allocation2 + $0x18] sm:$0xff] %vm875, %v834
      %880 = vst.msk [vmem:[#allocation2 + $0x20] sm:$0xff] %vm875, %v836
      %881 = vst.msk [vmem:[#allocation2 + $0x28] sm:$0xff] %vm875, %v838
      %882 = vst.msk [vmem:[#allocation2 + $0x30] sm:$0xff] %vm875, %v840
      %883 = vst.msk [vmem:[#allocation2 + $0x38] sm:$0xff] %vm875, %v842
      %884 = vst.msk [vmem:[#allocation2 + $0x40] sm:$0xff] %vm875, %v844
      %885 = vst.msk [vmem:[#allocation2 + $0x48] sm:$0xff] %vm875, %v846
      %886 = vst.msk [vmem:[#allocation2 + $0x50] sm:$0xff] %vm875, %v848
      %887 = vst.msk [vmem:[#allocation2 + $0x58] sm:$0xff] %vm875, %v850
      %888 = vst.msk [vmem:[#allocation2 + $0x60] sm:$0xff] %vm875, %v852
      %889 = vst.msk [vmem:[#allocation2 + $0x68] sm:$0xff] %vm875, %v854
      %890 = vst.msk [vmem:[#allocation2 + $0x70] sm:$0xff] %vm875, %v856
      %891 = vst.msk [vmem:[#allocation2 + $0x78] sm:$0xff] %vm875, %v858
      %v892 = vld [vmem:[%s198] sm:$0xe]
      %v893 = vld [vmem:[%s198 + $0x4] sm:$0xf]
      %v894 = vld [vmem:[%s198 + $0x8] sm:$0x1]
      %v895 = vld [vmem:[%s198 + $0xc] sm:$0xe]
      %v896 = vld [vmem:[%s198 + $0x10] sm:$0xf]
      %v897 = vld [vmem:[%s198 + $0x14] sm:$0x1]
      %v898 = vld [vmem:[%s198 + $0x18] sm:$0xe]
      %v899 = vld [vmem:[%s198 + $0x1c] sm:$0xf]
      %v900 = vld [vmem:[%s198 + $0x20] sm:$0x1]
      %v901 = vld [vmem:[%s198 + $0x24] sm:$0xe]
      %v902 = vld [vmem:[%s198 + $0x28] sm:$0xf]
      %v903 = vld [vmem:[%s198 + $0x2c] sm:$0x1]
      %v904 = vld [vmem:[%s198 + $0x30] sm:$0xe]
      %v905 = vld [vmem:[%s198 + $0x34] sm:$0xf]
      %v906 = vld [vmem:[%s198 + $0x38] sm:$0x1]
      %v907 = vld [vmem:[%s198 + $0x3c] sm:$0xe]
      %v908 = vld [vmem:[%s198 + $0x40] sm:$0xf]
      %v909 = vld [vmem:[%s198 + $0x44] sm:$0x1]
      %v910 = vld [vmem:[%s198 + $0x48] sm:$0xe]
      %v911 = vld [vmem:[%s198 + $0x4c] sm:$0xf]
      %v912 = vld [vmem:[%s198 + $0x50] sm:$0x1]
      %v913 = vld [vmem:[%s198 + $0x54] sm:$0xe]
      %v914 = vld [vmem:[%s198 + $0x58] sm:$0xf]
      %v915 = vld [vmem:[%s198 + $0x5c] sm:$0x1]
      %v916 = vld [vmem:[%s198 + $0x60] sm:$0xe]
      %v917 = vld [vmem:[%s198 + $0x64] sm:$0xf]
      %v918 = vld [vmem:[%s198 + $0x68] sm:$0x1]
      %v919 = vld [vmem:[%s198 + $0x6c] sm:$0xe]
      %v920 = vld [vmem:[%s198 + $0x70] sm:$0xf]
      %v921 = vld [vmem:[%s198 + $0x74] sm:$0x1]
      %v922 = vld [vmem:[%s198 + $0x78] sm:$0xe]
      %v923 = vld [vmem:[%s198 + $0x7c] sm:$0xf]
      %v924 = vld [vmem:[%s198 + $0x80] sm:$0x1]
      %v925 = vld [vmem:[%s198 + $0x84] sm:$0xe]
      %v926 = vld [vmem:[%s198 + $0x88] sm:$0xf]
      %v927 = vld [vmem:[%s198 + $0x8c] sm:$0x1]
      %v928 = vld [vmem:[%s198 + $0x90] sm:$0xe]
      %v929 = vld [vmem:[%s198 + $0x94] sm:$0xf]
      %v930 = vld [vmem:[%s198 + $0x98] sm:$0x1]
      %v931 = vld [vmem:[%s198 + $0x9c] sm:$0xe]
      %v932 = vld [vmem:[%s198 + $0xa0] sm:$0xf]
      %v933 = vld [vmem:[%s198 + $0xa4] sm:$0x1]
      %v934 = vld [vmem:[%s198 + $0xa8] sm:$0xe]
      %v935 = vld [vmem:[%s198 + $0xac] sm:$0xf]
      %v936 = vld [vmem:[%s198 + $0xb0] sm:$0x1]
      %v937 = vld [vmem:[%s198 + $0xb4] sm:$0xe]
      %v938 = vld [vmem:[%s198 + $0xb8] sm:$0xf]
      %v939 = vld [vmem:[%s198 + $0xbc] sm:$0x1]
      %vm988 = vcmask 1042432
      %vm989 = vcmask 1046532
      %vm990 = vmor %vm988, %vm989
      %v991 = vrot.slane %v892, 5
      %v992 = vrot.slane %v991, 4
      %v993 = vrot.slane %v893, 5
      %v994 = vsel %vm990, %v992, %v993
      %v995 = vrot.slane %v993, 4
      %v996 = vrot.slane %v894, 5
      %v997 = vsel %vm990, %v995, %v996
      %v998 = vrot.slane %v895, 5
      %v999 = vrot.slane %v998, 4
      %v1000 = vrot.slane %v896, 5
      %v1001 = vsel %vm990, %v999, %v1000
      %v1002 = vrot.slane %v1000, 4
      %v1003 = vrot.slane %v897, 5
      %v1004 = vsel %vm990, %v1002, %v1003
      %v1005 = vrot.slane %v898, 5
      %v1006 = vrot.slane %v1005, 4
      %v1007 = vrot.slane %v899, 5
      %v1008 = vsel %vm990, %v1006, %v1007
      %v1009 = vrot.slane %v1007, 4
      %v1010 = vrot.slane %v900, 5
      %v1011 = vsel %vm990, %v1009, %v1010
      %v1012 = vrot.slane %v901, 5
      %v1013 = vrot.slane %v1012, 4
      %v1014 = vrot.slane %v902, 5
      %v1015 = vsel %vm990, %v1013, %v1014
      %v1016 = vrot.slane %v1014, 4
      %v1017 = vrot.slane %v903, 5
      %v1018 = vsel %vm990, %v1016, %v1017
      %v1019 = vrot.slane %v904, 5
      %v1020 = vrot.slane %v1019, 4
      %v1021 = vrot.slane %v905, 5
      %v1022 = vsel %vm990, %v1020, %v1021
      %v1023 = vrot.slane %v1021, 4
      %v1024 = vrot.slane %v906, 5
      %v1025 = vsel %vm990, %v1023, %v1024
      %v1026 = vrot.slane %v907, 5
      %v1027 = vrot.slane %v1026, 4
      %v1028 = vrot.slane %v908, 5
      %v1029 = vsel %vm990, %v1027, %v1028
      %v1030 = vrot.slane %v1028, 4
      %v1031 = vrot.slane %v909, 5
      %v1032 = vsel %vm990, %v1030, %v1031
      %v1033 = vrot.slane %v910, 5
      %v1034 = vrot.slane %v1033, 4
      %v1035 = vrot.slane %v911, 5
      %v1036 = vsel %vm990, %v1034, %v1035
      %v1037 = vrot.slane %v1035, 4
      %v1038 = vrot.slane %v912, 5
      %v1039 = vsel %vm990, %v1037, %v1038
      %v1040 = vrot.slane %v913, 5
      %v1041 = vrot.slane %v1040, 4
      %v1042 = vrot.slane %v914, 5
      %v1043 = vsel %vm990, %v1041, %v1042
      %v1044 = vrot.slane %v1042, 4
      %v1045 = vrot.slane %v915, 5
      %v1046 = vsel %vm990, %v1044, %v1045
      %v1047 = vrot.slane %v916, 5
      %v1048 = vrot.slane %v1047, 4
      %v1049 = vrot.slane %v917, 5
      %v1050 = vsel %vm990, %v1048, %v1049
      %v1051 = vrot.slane %v1049, 4
      %v1052 = vrot.slane %v918, 5
      %v1053 = vsel %vm990, %v1051, %v1052
      %v1054 = vrot.slane %v919, 5
      %v1055 = vrot.slane %v1054, 4
      %v1056 = vrot.slane %v920, 5
      %v1057 = vsel %vm990, %v1055, %v1056
      %v1058 = vrot.slane %v1056, 4
      %v1059 = vrot.slane %v921, 5
      %v1060 = vsel %vm990, %v1058, %v1059
      %v1061 = vrot.slane %v922, 5
      %v1062 = vrot.slane %v1061, 4
      %v1063 = vrot.slane %v923, 5
      %v1064 = vsel %vm990, %v1062, %v1063
      %v1065 = vrot.slane %v1063, 4
      %v1066 = vrot.slane %v924, 5
      %v1067 = vsel %vm990, %v1065, %v1066
      %v1068 = vrot.slane %v925, 5
      %v1069 = vrot.slane %v1068, 4
      %v1070 = vrot.slane %v926, 5
      %v1071 = vsel %vm990, %v1069, %v1070
      %v1072 = vrot.slane %v1070, 4
      %v1073 = vrot.slane %v927, 5
      %v1074 = vsel %vm990, %v1072, %v1073
      %v1075 = vrot.slane %v928, 5
      %v1076 = vrot.slane %v1075, 4
      %v1077 = vrot.slane %v929, 5
      %v1078 = vsel %vm990, %v1076, %v1077
      %v1079 = vrot.slane %v1077, 4
      %v1080 = vrot.slane %v930, 5
      %v1081 = vsel %vm990, %v1079, %v1080
      %v1082 = vrot.slane %v931, 5
      %v1083 = vrot.slane %v1082, 4
      %v1084 = vrot.slane %v932, 5
      %v1085 = vsel %vm990, %v1083, %v1084
      %v1086 = vrot.slane %v1084, 4
      %v1087 = vrot.slane %v933, 5
      %v1088 = vsel %vm990, %v1086, %v1087
      %v1089 = vrot.slane %v934, 5
      %v1090 = vrot.slane %v1089, 4
      %v1091 = vrot.slane %v935, 5
      %v1092 = vsel %vm990, %v1090, %v1091
      %v1093 = vrot.slane %v1091, 4
      %v1094 = vrot.slane %v936, 5
      %v1095 = vsel %vm990, %v1093, %v1094
      %v1096 = vrot.slane %v937, 5
      %v1097 = vrot.slane %v1096, 4
      %v1098 = vrot.slane %v938, 5
      %v1099 = vsel %vm990, %v1097, %v1098
      %v1100 = vrot.slane %v1098, 4
      %v1101 = vrot.slane %v939, 5
      %v1102 = vsel %vm990, %v1100, %v1101
      %v1103 = vunpack.c.l.b16 %v994
      %v1104 = vunpack.c.l.b16 %v997
      %v1105 = vunpack.c.l.b16 %v1001
      %v1106 = vunpack.c.l.b16 %v1004
      %v1107 = vunpack.c.l.b16 %v1008
      %v1108 = vunpack.c.l.b16 %v1011
      %v1109 = vunpack.c.l.b16 %v1015
      %v1110 = vunpack.c.l.b16 %v1018
      %v1111 = vunpack.c.l.b16 %v1022
      %v1112 = vunpack.c.l.b16 %v1025
      %v1113 = vunpack.c.l.b16 %v1029
      %v1114 = vunpack.c.l.b16 %v1032
      %v1115 = vunpack.c.l.b16 %v1036
      %v1116 = vunpack.c.l.b16 %v1039
      %v1117 = vunpack.c.l.b16 %v1043
      %v1118 = vunpack.c.l.b16 %v1046
      %v1119 = vunpack.c.l.b16 %v1050
      %v1120 = vunpack.c.l.b16 %v1053
      %v1121 = vunpack.c.l.b16 %v1057
      %v1122 = vunpack.c.l.b16 %v1060
      %v1123 = vunpack.c.l.b16 %v1064
      %v1124 = vunpack.c.l.b16 %v1067
      %v1125 = vunpack.c.l.b16 %v1071
      %v1126 = vunpack.c.l.b16 %v1074
      %v1127 = vunpack.c.l.b16 %v1078
      %v1128 = vunpack.c.l.b16 %v1081
      %v1129 = vunpack.c.l.b16 %v1085
      %v1130 = vunpack.c.l.b16 %v1088
      %v1131 = vunpack.c.l.b16 %v1092
      %v1132 = vunpack.c.l.b16 %v1095
      %v1133 = vunpack.c.l.b16 %v1099
      %v1134 = vunpack.c.l.b16 %v1102
      %v1135 = vpack.c.b16 %v1104, %v1103
      %v1136 = vpack.c.b16 %v1106, %v1105
      %v1137 = vpack.c.b16 %v1108, %v1107
      %v1138 = vpack.c.b16 %v1110, %v1109
      %v1139 = vpack.c.b16 %v1112, %v1111
      %v1140 = vpack.c.b16 %v1114, %v1113
      %v1141 = vpack.c.b16 %v1116, %v1115
      %v1142 = vpack.c.b16 %v1118, %v1117
      %v1143 = vpack.c.b16 %v1120, %v1119
      %v1144 = vpack.c.b16 %v1122, %v1121
      %v1145 = vpack.c.b16 %v1124, %v1123
      %v1146 = vpack.c.b16 %v1126, %v1125
      %v1147 = vpack.c.b16 %v1128, %v1127
      %v1148 = vpack.c.b16 %v1130, %v1129
      %v1149 = vpack.c.b16 %v1132, %v1131
      %v1150 = vpack.c.b16 %v1134, %v1133
      %1151 = vrot.lane.b32.xlu0 %v1135, 8
      %v1152 = vpop.permute.xlu0 %1151
      %1153 = vrot.lane.b32.xlu0 %v1136, 8
      %v1154 = vpop.permute.xlu0 %1153
      %1155 = vrot.lane.b32.xlu0 %v1137, 8
      %v1156 = vpop.permute.xlu0 %1155
      %1157 = vrot.lane.b32.xlu0 %v1138, 8
      %v1158 = vpop.permute.xlu0 %1157
      %1159 = vrot.lane.b32.xlu0 %v1139, 8
      %v1160 = vpop.permute.xlu0 %1159
      %1161 = vrot.lane.b32.xlu0 %v1140, 8
      %v1162 = vpop.permute.xlu0 %1161
      %1163 = vrot.lane.b32.xlu0 %v1141, 8
      %v1164 = vpop.permute.xlu0 %1163
      %1165 = vrot.lane.b32.xlu0 %v1142, 8
      %v1166 = vpop.permute.xlu0 %1165
      %1167 = vrot.lane.b32.xlu0 %v1143, 8
      %v1168 = vpop.permute.xlu0 %1167
      %1169 = vrot.lane.b32.xlu0 %v1144, 8
      %v1170 = vpop.permute.xlu0 %1169
      %1171 = vrot.lane.b32.xlu0 %v1145, 8
      %v1172 = vpop.permute.xlu0 %1171
      %1173 = vrot.lane.b32.xlu0 %v1146, 8
      %v1174 = vpop.permute.xlu0 %1173
      %1175 = vrot.lane.b32.xlu0 %v1147, 8
      %v1176 = vpop.permute.xlu0 %1175
      %1177 = vrot.lane.b32.xlu0 %v1148, 8
      %v1178 = vpop.permute.xlu0 %1177
      %1179 = vrot.lane.b32.xlu0 %v1149, 8
      %v1180 = vpop.permute.xlu0 %1179
      %1181 = vrot.lane.b32.xlu0 %v1150, 8
      %v1182 = vpop.permute.xlu0 %1181
      %vm1199 = vcmask 97344
      %1200 = vst.msk [vmem:[#allocation2] sm:$0xff] %vm1199, %v1152
      %1201 = vst.msk [vmem:[#allocation2 + $0x8] sm:$0xff] %vm1199, %v1154
      %1202 = vst.msk [vmem:[#allocation2 + $0x10] sm:$0xff] %vm1199, %v1156
      %1203 = vst.msk [vmem:[#allocation2 + $0x18] sm:$0xff] %vm1199, %v1158
      %1204 = vst.msk [vmem:[#allocation2 + $0x20] sm:$0xff] %vm1199, %v1160
      %1205 = vst.msk [vmem:[#allocation2 + $0x28] sm:$0xff] %vm1199, %v1162
      %1206 = vst.msk [vmem:[#allocation2 + $0x30] sm:$0xff] %vm1199, %v1164
      %1207 = vst.msk [vmem:[#allocation2 + $0x38] sm:$0xff] %vm1199, %v1166
      %1208 = vst.msk [vmem:[#allocation2 + $0x40] sm:$0xff] %vm1199, %v1168
      %1209 = vst.msk [vmem:[#allocation2 + $0x48] sm:$0xff] %vm1199, %v1170
      %1210 = vst.msk [vmem:[#allocation2 + $0x50] sm:$0xff] %vm1199, %v1172
      %1211 = vst.msk [vmem:[#allocation2 + $0x58] sm:$0xff] %vm1199, %v1174
      %1212 = vst.msk [vmem:[#allocation2 + $0x60] sm:$0xff] %vm1199, %v1176
      %1213 = vst.msk [vmem:[#allocation2 + $0x68] sm:$0xff] %vm1199, %v1178
      %1214 = vst.msk [vmem:[#allocation2 + $0x70] sm:$0xff] %vm1199, %v1180
      %1215 = vst.msk [vmem:[#allocation2 + $0x78] sm:$0xff] %vm1199, %v1182
      %s1216 = sadd.s32 %s195, 1
      %s1217 = smul.u32 %s1216, 3
      %s1218 = smul.addr %s1217, 4
      %s1219 = scalar_lea.vmem %s183, %s1218
      %v1220 = vld [vmem:[%s1219] sm:$0xf]
      %v1221 = vld [vmem:[%s1219 + $0x4] sm:$0xf]
      %v1222 = vld [vmem:[%s1219 + $0xc] sm:$0xf]
      %v1223 = vld [vmem:[%s1219 + $0x10] sm:$0xf]
      %v1224 = vld [vmem:[%s1219 + $0x18] sm:$0xf]
      %v1225 = vld [vmem:[%s1219 + $0x1c] sm:$0xf]
      %v1226 = vld [vmem:[%s1219 + $0x24] sm:$0xf]
      %v1227 = vld [vmem:[%s1219 + $0x28] sm:$0xf]
      %v1228 = vld [vmem:[%s1219 + $0x30] sm:$0xf]
      %v1229 = vld [vmem:[%s1219 + $0x34] sm:$0xf]
      %v1230 = vld [vmem:[%s1219 + $0x3c] sm:$0xf]
      %v1231 = vld [vmem:[%s1219 + $0x40] sm:$0xf]
      %v1232 = vld [vmem:[%s1219 + $0x48] sm:$0xf]
      %v1233 = vld [vmem:[%s1219 + $0x4c] sm:$0xf]
      %v1234 = vld [vmem:[%s1219 + $0x54] sm:$0xf]
      %v1235 = vld [vmem:[%s1219 + $0x58] sm:$0xf]
      %v1236 = vld [vmem:[%s1219 + $0x60] sm:$0xf]
      %v1237 = vld [vmem:[%s1219 + $0x64] sm:$0xf]
      %v1238 = vld [vmem:[%s1219 + $0x6c] sm:$0xf]
      %v1239 = vld [vmem:[%s1219 + $0x70] sm:$0xf]
      %v1240 = vld [vmem:[%s1219 + $0x78] sm:$0xf]
      %v1241 = vld [vmem:[%s1219 + $0x7c] sm:$0xf]
      %v1242 = vld [vmem:[%s1219 + $0x84] sm:$0xf]
      %v1243 = vld [vmem:[%s1219 + $0x88] sm:$0xf]
      %v1244 = vld [vmem:[%s1219 + $0x90] sm:$0xf]
      %v1245 = vld [vmem:[%s1219 + $0x94] sm:$0xf]
      %v1246 = vld [vmem:[%s1219 + $0x9c] sm:$0xf]
      %v1247 = vld [vmem:[%s1219 + $0xa0] sm:$0xf]
      %v1248 = vld [vmem:[%s1219 + $0xa8] sm:$0xf]
      %v1249 = vld [vmem:[%s1219 + $0xac] sm:$0xf]
      %v1250 = vld [vmem:[%s1219 + $0xb4] sm:$0xf]
      %v1251 = vld [vmem:[%s1219 + $0xb8] sm:$0xf]
      %v1284 = vunpack.c.l.b16 %v1220
      %v1285 = vunpack.c.l.b16 %v1221
      %v1286 = vunpack.c.l.b16 %v1222
      %v1287 = vunpack.c.l.b16 %v1223
      %v1288 = vunpack.c.l.b16 %v1224
      %v1289 = vunpack.c.l.b16 %v1225
      %v1290 = vunpack.c.l.b16 %v1226
      %v1291 = vunpack.c.l.b16 %v1227
      %v1292 = vunpack.c.l.b16 %v1228
      %v1293 = vunpack.c.l.b16 %v1229
      %v1294 = vunpack.c.l.b16 %v1230
      %v1295 = vunpack.c.l.b16 %v1231
      %v1296 = vunpack.c.l.b16 %v1232
      %v1297 = vunpack.c.l.b16 %v1233
      %v1298 = vunpack.c.l.b16 %v1234
      %v1299 = vunpack.c.l.b16 %v1235
      %v1300 = vunpack.c.l.b16 %v1236
      %v1301 = vunpack.c.l.b16 %v1237
      %v1302 = vunpack.c.l.b16 %v1238
      %v1303 = vunpack.c.l.b16 %v1239
      %v1304 = vunpack.c.l.b16 %v1240
      %v1305 = vunpack.c.l.b16 %v1241
      %v1306 = vunpack.c.l.b16 %v1242
      %v1307 = vunpack.c.l.b16 %v1243
      %v1308 = vunpack.c.l.b16 %v1244
      %v1309 = vunpack.c.l.b16 %v1245
      %v1310 = vunpack.c.l.b16 %v1246
      %v1311 = vunpack.c.l.b16 %v1247
      %v1312 = vunpack.c.l.b16 %v1248
      %v1313 = vunpack.c.l.b16 %v1249
      %v1314 = vunpack.c.l.b16 %v1250
      %v1315 = vunpack.c.l.b16 %v1251
      %v1316 = vpack.c.b16 %v1285, %v1284
      %v1317 = vpack.c.b16 %v1287, %v1286
      %v1318 = vpack.c.b16 %v1289, %v1288
      %v1319 = vpack.c.b16 %v1291, %v1290
      %v1320 = vpack.c.b16 %v1293, %v1292
      %v1321 = vpack.c.b16 %v1295, %v1294
      %v1322 = vpack.c.b16 %v1297, %v1296
      %v1323 = vpack.c.b16 %v1299, %v1298
      %v1324 = vpack.c.b16 %v1301, %v1300
      %v1325 = vpack.c.b16 %v1303, %v1302
      %v1326 = vpack.c.b16 %v1305, %v1304
      %v1327 = vpack.c.b16 %v1307, %v1306
      %v1328 = vpack.c.b16 %v1309, %v1308
      %v1329 = vpack.c.b16 %v1311, %v1310
      %v1330 = vpack.c.b16 %v1313, %v1312
      %v1331 = vpack.c.b16 %v1315, %v1314
      %1332 = vrot.lane.b32.xlu0 %v1316, 12
      %v1333 = vpop.permute.xlu0 %1332
      %1334 = vrot.lane.b32.xlu0 %v1317, 12
      %v1335 = vpop.permute.xlu0 %1334
      %1336 = vrot.lane.b32.xlu0 %v1318, 12
      %v1337 = vpop.permute.xlu0 %1336
      %1338 = vrot.lane.b32.xlu0 %v1319, 12
      %v1339 = vpop.permute.xlu0 %1338
      %1340 = vrot.lane.b32.xlu0 %v1320, 12
      %v1341 = vpop.permute.xlu0 %1340
      %1342 = vrot.lane.b32.xlu0 %v1321, 12
      %v1343 = vpop.permute.xlu0 %1342
      %1344 = vrot.lane.b32.xlu0 %v1322, 12
      %v1345 = vpop.permute.xlu0 %1344
      %1346 = vrot.lane.b32.xlu0 %v1323, 12
      %v1347 = vpop.permute.xlu0 %1346
      %1348 = vrot.lane.b32.xlu0 %v1324, 12
      %v1349 = vpop.permute.xlu0 %1348
      %1350 = vrot.lane.b32.xlu0 %v1325, 12
      %v1351 = vpop.permute.xlu0 %1350
      %1352 = vrot.lane.b32.xlu0 %v1326, 12
      %v1353 = vpop.permute.xlu0 %1352
      %1354 = vrot.lane.b32.xlu0 %v1327, 12
      %v1355 = vpop.permute.xlu0 %1354
      %1356 = vrot.lane.b32.xlu0 %v1328, 12
      %v1357 = vpop.permute.xlu0 %1356
      %1358 = vrot.lane.b32.xlu0 %v1329, 12
      %v1359 = vpop.permute.xlu0 %1358
      %1360 = vrot.lane.b32.xlu0 %v1330, 12
      %v1361 = vpop.permute.xlu0 %1360
      %1362 = vrot.lane.b32.xlu0 %v1331, 12
      %v1363 = vpop.permute.xlu0 %1362
      %vm1380 = vcmask 130144
      %1381 = vst.msk [vmem:[#allocation2] sm:$0xff] %vm1380, %v1333
      %1382 = vst.msk [vmem:[#allocation2 + $0x8] sm:$0xff] %vm1380, %v1335
      %1383 = vst.msk [vmem:[#allocation2 + $0x10] sm:$0xff] %vm1380, %v1337
      %1384 = vst.msk [vmem:[#allocation2 + $0x18] sm:$0xff] %vm1380, %v1339
      %1385 = vst.msk [vmem:[#allocation2 + $0x20] sm:$0xff] %vm1380, %v1341
      %1386 = vst.msk [vmem:[#allocation2 + $0x28] sm:$0xff] %vm1380, %v1343
      %1387 = vst.msk [vmem:[#allocation2 + $0x30] sm:$0xff] %vm1380, %v1345
      %1388 = vst.msk [vmem:[#allocation2 + $0x38] sm:$0xff] %vm1380, %v1347
      %1389 = vst.msk [vmem:[#allocation2 + $0x40] sm:$0xff] %vm1380, %v1349
      %1390 = vst.msk [vmem:[#allocation2 + $0x48] sm:$0xff] %vm1380, %v1351
      %1391 = vst.msk [vmem:[#allocation2 + $0x50] sm:$0xff] %vm1380, %v1353
      %1392 = vst.msk [vmem:[#allocation2 + $0x58] sm:$0xff] %vm1380, %v1355
      %1393 = vst.msk [vmem:[#allocation2 + $0x60] sm:$0xff] %vm1380, %v1357
      %1394 = vst.msk [vmem:[#allocation2 + $0x68] sm:$0xff] %vm1380, %v1359
      %1395 = vst.msk [vmem:[#allocation2 + $0x70] sm:$0xff] %vm1380, %v1361
      %1396 = vst.msk [vmem:[#allocation2 + $0x78] sm:$0xff] %vm1380, %v1363
      %v1397 = vld [vmem:[%s1219] sm:$0xf]
      %v1398 = vld [vmem:[%s1219 + $0x4] sm:$0xf]
      %v1399 = vld [vmem:[%s1219 + $0x8] sm:$0x1]
      %v1400 = vld [vmem:[%s1219 + $0xc] sm:$0xf]
      %v1401 = vld [vmem:[%s1219 + $0x10] sm:$0xf]
      %v1402 = vld [vmem:[%s1219 + $0x14] sm:$0x1]
      %v1403 = vld [vmem:[%s1219 + $0x18] sm:$0xf]
      %v1404 = vld [vmem:[%s1219 + $0x1c] sm:$0xf]
      %v1405 = vld [vmem:[%s1219 + $0x20] sm:$0x1]
      %v1406 = vld [vmem:[%s1219 + $0x24] sm:$0xf]
      %v1407 = vld [vmem:[%s1219 + $0x28] sm:$0xf]
      %v1408 = vld [vmem:[%s1219 + $0x2c] sm:$0x1]
      %v1409 = vld [vmem:[%s1219 + $0x30] sm:$0xf]
      %v1410 = vld [vmem:[%s1219 + $0x34] sm:$0xf]
      %v1411 = vld [vmem:[%s1219 + $0x38] sm:$0x1]
      %v1412 = vld [vmem:[%s1219 + $0x3c] sm:$0xf]
      %v1413 = vld [vmem:[%s1219 + $0x40] sm:$0xf]
      %v1414 = vld [vmem:[%s1219 + $0x44] sm:$0x1]
      %v1415 = vld [vmem:[%s1219 + $0x48] sm:$0xf]
      %v1416 = vld [vmem:[%s1219 + $0x4c] sm:$0xf]
      %v1417 = vld [vmem:[%s1219 + $0x50] sm:$0x1]
      %v1418 = vld [vmem:[%s1219 + $0x54] sm:$0xf]
      %v1419 = vld [vmem:[%s1219 + $0x58] sm:$0xf]
      %v1420 = vld [vmem:[%s1219 + $0x5c] sm:$0x1]
      %v1421 = vld [vmem:[%s1219 + $0x60] sm:$0xf]
      %v1422 = vld [vmem:[%s1219 + $0x64] sm:$0xf]
      %v1423 = vld [vmem:[%s1219 + $0x68] sm:$0x1]
      %v1424 = vld [vmem:[%s1219 + $0x6c] sm:$0xf]
      %v1425 = vld [vmem:[%s1219 + $0x70] sm:$0xf]
      %v1426 = vld [vmem:[%s1219 + $0x74] sm:$0x1]
      %v1427 = vld [vmem:[%s1219 + $0x78] sm:$0xf]
      %v1428 = vld [vmem:[%s1219 + $0x7c] sm:$0xf]
      %v1429 = vld [vmem:[%s1219 + $0x80] sm:$0x1]
      %v1430 = vld [vmem:[%s1219 + $0x84] sm:$0xf]
      %v1431 = vld [vmem:[%s1219 + $0x88] sm:$0xf]
      %v1432 = vld [vmem:[%s1219 + $0x8c] sm:$0x1]
      %v1433 = vld [vmem:[%s1219 + $0x90] sm:$0xf]
      %v1434 = vld [vmem:[%s1219 + $0x94] sm:$0xf]
      %v1435 = vld [vmem:[%s1219 + $0x98] sm:$0x1]
      %v1436 = vld [vmem:[%s1219 + $0x9c] sm:$0xf]
      %v1437 = vld [vmem:[%s1219 + $0xa0] sm:$0xf]
      %v1438 = vld [vmem:[%s1219 + $0xa4] sm:$0x1]
      %v1439 = vld [vmem:[%s1219 + $0xa8] sm:$0xf]
      %v1440 = vld [vmem:[%s1219 + $0xac] sm:$0xf]
      %v1441 = vld [vmem:[%s1219 + $0xb0] sm:$0x1]
      %v1442 = vld [vmem:[%s1219 + $0xb4] sm:$0xf]
      %v1443 = vld [vmem:[%s1219 + $0xb8] sm:$0xf]
      %v1444 = vld [vmem:[%s1219 + $0xbc] sm:$0x1]
      %v1446 = vshrl.u32 %v1397, 16
      %v1448 = vrot.slane %v1446, 4
      %v1449 = vshll.u32 %v1397, 16
      %v1451 = vrot.slane %v1449, 5
      %v1452 = vor.u32 %v1448, %v1451
      %v1453 = vrot.slane %v1452, 4
      %v1455 = vshll.u32 %v1398, 16
      %v1457 = vrot.slane %v1455, 5
      %v1458 = vsel %vm394, %v1453, %v1457
      %v1459 = vshrl.u32 %v1398, 16
      %v1461 = vrot.slane %v1459, 4
      %v1462 = vor.u32 %v1461, %v1457
      %v1463 = vrot.slane %v1462, 4
      %v1465 = vshll.u32 %v1399, 16
      %v1467 = vrot.slane %v1465, 5
      %v1468 = vsel %vm394, %v1463, %v1467
      %v1470 = vshrl.u32 %v1400, 16
      %v1472 = vrot.slane %v1470, 4
      %v1473 = vshll.u32 %v1400, 16
      %v1475 = vrot.slane %v1473, 5
      %v1476 = vor.u32 %v1472, %v1475
      %v1477 = vrot.slane %v1476, 4
      %v1479 = vshll.u32 %v1401, 16
      %v1481 = vrot.slane %v1479, 5
      %v1482 = vsel %vm394, %v1477, %v1481
      %v1483 = vshrl.u32 %v1401, 16
      %v1485 = vrot.slane %v1483, 4
      %v1486 = vor.u32 %v1485, %v1481
      %v1487 = vrot.slane %v1486, 4
      %v1489 = vshll.u32 %v1402, 16
      %v1491 = vrot.slane %v1489, 5
      %v1492 = vsel %vm394, %v1487, %v1491
      %v1494 = vshrl.u32 %v1403, 16
      %v1496 = vrot.slane %v1494, 4
      %v1497 = vshll.u32 %v1403, 16
      %v1499 = vrot.slane %v1497, 5
      %v1500 = vor.u32 %v1496, %v1499
      %v1501 = vrot.slane %v1500, 4
      %v1503 = vshll.u32 %v1404, 16
      %v1505 = vrot.slane %v1503, 5
      %v1506 = vsel %vm394, %v1501, %v1505
      %v1507 = vshrl.u32 %v1404, 16
      %v1509 = vrot.slane %v1507, 4
      %v1510 = vor.u32 %v1509, %v1505
      %v1511 = vrot.slane %v1510, 4
      %v1513 = vshll.u32 %v1405, 16
      %v1515 = vrot.slane %v1513, 5
      %v1516 = vsel %vm394, %v1511, %v1515
      %v1518 = vshrl.u32 %v1406, 16
      %v1520 = vrot.slane %v1518, 4
      %v1521 = vshll.u32 %v1406, 16
      %v1523 = vrot.slane %v1521, 5
      %v1524 = vor.u32 %v1520, %v1523
      %v1525 = vrot.slane %v1524, 4
      %v1527 = vshll.u32 %v1407, 16
      %v1529 = vrot.slane %v1527, 5
      %v1530 = vsel %vm394, %v1525, %v1529
      %v1531 = vshrl.u32 %v1407, 16
      %v1533 = vrot.slane %v1531, 4
      %v1534 = vor.u32 %v1533, %v1529
      %v1535 = vrot.slane %v1534, 4
      %v1537 = vshll.u32 %v1408, 16
      %v1539 = vrot.slane %v1537, 5
      %v1540 = vsel %vm394, %v1535, %v1539
      %v1542 = vshrl.u32 %v1409, 16
      %v1544 = vrot.slane %v1542, 4
      %v1545 = vshll.u32 %v1409, 16
      %v1547 = vrot.slane %v1545, 5
      %v1548 = vor.u32 %v1544, %v1547
      %v1549 = vrot.slane %v1548, 4
      %v1551 = vshll.u32 %v1410, 16
      %v1553 = vrot.slane %v1551, 5
      %v1554 = vsel %vm394, %v1549, %v1553
      %v1555 = vshrl.u32 %v1410, 16
      %v1557 = vrot.slane %v1555, 4
      %v1558 = vor.u32 %v1557, %v1553
      %v1559 = vrot.slane %v1558, 4
      %v1561 = vshll.u32 %v1411, 16
      %v1563 = vrot.slane %v1561, 5
      %v1564 = vsel %vm394, %v1559, %v1563
      %v1566 = vshrl.u32 %v1412, 16
      %v1568 = vrot.slane %v1566, 4
      %v1569 = vshll.u32 %v1412, 16
      %v1571 = vrot.slane %v1569, 5
      %v1572 = vor.u32 %v1568, %v1571
      %v1573 = vrot.slane %v1572, 4
      %v1575 = vshll.u32 %v1413, 16
      %v1577 = vrot.slane %v1575, 5
      %v1578 = vsel %vm394, %v1573, %v1577
      %v1579 = vshrl.u32 %v1413, 16
      %v1581 = vrot.slane %v1579, 4
      %v1582 = vor.u32 %v1581, %v1577
      %v1583 = vrot.slane %v1582, 4
      %v1585 = vshll.u32 %v1414, 16
      %v1587 = vrot.slane %v1585, 5
      %v1588 = vsel %vm394, %v1583, %v1587
      %v1590 = vshrl.u32 %v1415, 16
      %v1592 = vrot.slane %v1590, 4
      %v1593 = vshll.u32 %v1415, 16
      %v1595 = vrot.slane %v1593, 5
      %v1596 = vor.u32 %v1592, %v1595
      %v1597 = vrot.slane %v1596, 4
      %v1599 = vshll.u32 %v1416, 16
      %v1601 = vrot.slane %v1599, 5
      %v1602 = vsel %vm394, %v1597, %v1601
      %v1603 = vshrl.u32 %v1416, 16
      %v1605 = vrot.slane %v1603, 4
      %v1606 = vor.u32 %v1605, %v1601
      %v1607 = vrot.slane %v1606, 4
      %v1609 = vshll.u32 %v1417, 16
      %v1611 = vrot.slane %v1609, 5
      %v1612 = vsel %vm394, %v1607, %v1611
      %v1614 = vshrl.u32 %v1418, 16
      %v1616 = vrot.slane %v1614, 4
      %v1617 = vshll.u32 %v1418, 16
      %v1619 = vrot.slane %v1617, 5
      %v1620 = vor.u32 %v1616, %v1619
      %v1621 = vrot.slane %v1620, 4
      %v1623 = vshll.u32 %v1419, 16
      %v1625 = vrot.slane %v1623, 5
      %v1626 = vsel %vm394, %v1621, %v1625
      %v1627 = vshrl.u32 %v1419, 16
      %v1629 = vrot.slane %v1627, 4
      %v1630 = vor.u32 %v1629, %v1625
      %v1631 = vrot.slane %v1630, 4
      %v1633 = vshll.u32 %v1420, 16
      %v1635 = vrot.slane %v1633, 5
      %v1636 = vsel %vm394, %v1631, %v1635
      %v1638 = vshrl.u32 %v1421, 16
      %v1640 = vrot.slane %v1638, 4
      %v1641 = vshll.u32 %v1421, 16
      %v1643 = vrot.slane %v1641, 5
      %v1644 = vor.u32 %v1640, %v1643
      %v1645 = vrot.slane %v1644, 4
      %v1647 = vshll.u32 %v1422, 16
      %v1649 = vrot.slane %v1647, 5
      %v1650 = vsel %vm394, %v1645, %v1649
      %v1651 = vshrl.u32 %v1422, 16
      %v1653 = vrot.slane %v1651, 4
      %v1654 = vor.u32 %v1653, %v1649
      %v1655 = vrot.slane %v1654, 4
      %v1657 = vshll.u32 %v1423, 16
      %v1659 = vrot.slane %v1657, 5
      %v1660 = vsel %vm394, %v1655, %v1659
      %v1662 = vshrl.u32 %v1424, 16
      %v1664 = vrot.slane %v1662, 4
      %v1665 = vshll.u32 %v1424, 16
      %v1667 = vrot.slane %v1665, 5
      %v1668 = vor.u32 %v1664, %v1667
      %v1669 = vrot.slane %v1668, 4
      %v1671 = vshll.u32 %v1425, 16
      %v1673 = vrot.slane %v1671, 5
      %v1674 = vsel %vm394, %v1669, %v1673
      %v1675 = vshrl.u32 %v1425, 16
      %v1677 = vrot.slane %v1675, 4
      %v1678 = vor.u32 %v1677, %v1673
      %v1679 = vrot.slane %v1678, 4
      %v1681 = vshll.u32 %v1426, 16
      %v1683 = vrot.slane %v1681, 5
      %v1684 = vsel %vm394, %v1679, %v1683
      %v1686 = vshrl.u32 %v1427, 16
      %v1688 = vrot.slane %v1686, 4
      %v1689 = vshll.u32 %v1427, 16
      %v1691 = vrot.slane %v1689, 5
      %v1692 = vor.u32 %v1688, %v1691
      %v1693 = vrot.slane %v1692, 4
      %v1695 = vshll.u32 %v1428, 16
      %v1697 = vrot.slane %v1695, 5
      %v1698 = vsel %vm394, %v1693, %v1697
      %v1699 = vshrl.u32 %v1428, 16
      %v1701 = vrot.slane %v1699, 4
      %v1702 = vor.u32 %v1701, %v1697
      %v1703 = vrot.slane %v1702, 4
      %v1705 = vshll.u32 %v1429, 16
      %v1707 = vrot.slane %v1705, 5
      %v1708 = vsel %vm394, %v1703, %v1707
      %v1710 = vshrl.u32 %v1430, 16
      %v1712 = vrot.slane %v1710, 4
      %v1713 = vshll.u32 %v1430, 16
      %v1715 = vrot.slane %v1713, 5
      %v1716 = vor.u32 %v1712, %v1715
      %v1717 = vrot.slane %v1716, 4
      %v1719 = vshll.u32 %v1431, 16
      %v1721 = vrot.slane %v1719, 5
      %v1722 = vsel %vm394, %v1717, %v1721
      %v1723 = vshrl.u32 %v1431, 16
      %v1725 = vrot.slane %v1723, 4
      %v1726 = vor.u32 %v1725, %v1721
      %v1727 = vrot.slane %v1726, 4
      %v1729 = vshll.u32 %v1432, 16
      %v1731 = vrot.slane %v1729, 5
      %v1732 = vsel %vm394, %v1727, %v1731
      %v1734 = vshrl.u32 %v1433, 16
      %v1736 = vrot.slane %v1734, 4
      %v1737 = vshll.u32 %v1433, 16
      %v1739 = vrot.slane %v1737, 5
      %v1740 = vor.u32 %v1736, %v1739
      %v1741 = vrot.slane %v1740, 4
      %v1743 = vshll.u32 %v1434, 16
      %v1745 = vrot.slane %v1743, 5
      %v1746 = vsel %vm394, %v1741, %v1745
      %v1747 = vshrl.u32 %v1434, 16
      %v1749 = vrot.slane %v1747, 4
      %v1750 = vor.u32 %v1749, %v1745
      %v1751 = vrot.slane %v1750, 4
      %v1753 = vshll.u32 %v1435, 16
      %v1755 = vrot.slane %v1753, 5
      %v1756 = vsel %vm394, %v1751, %v1755
      %v1758 = vshrl.u32 %v1436, 16
      %v1760 = vrot.slane %v1758, 4
      %v1761 = vshll.u32 %v1436, 16
      %v1763 = vrot.slane %v1761, 5
      %v1764 = vor.u32 %v1760, %v1763
      %v1765 = vrot.slane %v1764, 4
      %v1767 = vshll.u32 %v1437, 16
      %v1769 = vrot.slane %v1767, 5
      %v1770 = vsel %vm394, %v1765, %v1769
      %v1771 = vshrl.u32 %v1437, 16
      %v1773 = vrot.slane %v1771, 4
      %v1774 = vor.u32 %v1773, %v1769
      %v1775 = vrot.slane %v1774, 4
      %v1777 = vshll.u32 %v1438, 16
      %v1779 = vrot.slane %v1777, 5
      %v1780 = vsel %vm394, %v1775, %v1779
      %v1782 = vshrl.u32 %v1439, 16
      %v1784 = vrot.slane %v1782, 4
      %v1785 = vshll.u32 %v1439, 16
      %v1787 = vrot.slane %v1785, 5
      %v1788 = vor.u32 %v1784, %v1787
      %v1789 = vrot.slane %v1788, 4
      %v1791 = vshll.u32 %v1440, 16
      %v1793 = vrot.slane %v1791, 5
      %v1794 = vsel %vm394, %v1789, %v1793
      %v1795 = vshrl.u32 %v1440, 16
      %v1797 = vrot.slane %v1795, 4
      %v1798 = vor.u32 %v1797, %v1793
      %v1799 = vrot.slane %v1798, 4
      %v1801 = vshll.u32 %v1441, 16
      %v1803 = vrot.slane %v1801, 5
      %v1804 = vsel %vm394, %v1799, %v1803
      %v1806 = vshrl.u32 %v1442, 16
      %v1808 = vrot.slane %v1806, 4
      %v1809 = vshll.u32 %v1442, 16
      %v1811 = vrot.slane %v1809, 5
      %v1812 = vor.u32 %v1808, %v1811
      %v1813 = vrot.slane %v1812, 4
      %v1815 = vshll.u32 %v1443, 16
      %v1817 = vrot.slane %v1815, 5
      %v1818 = vsel %vm394, %v1813, %v1817
      %v1819 = vshrl.u32 %v1443, 16
      %v1821 = vrot.slane %v1819, 4
      %v1822 = vor.u32 %v1821, %v1817
      %v1823 = vrot.slane %v1822, 4
      %v1825 = vshll.u32 %v1444, 16
      %v1827 = vrot.slane %v1825, 5
      %v1828 = vsel %vm394, %v1823, %v1827
      %v1829 = vunpack.c.l.b16 %v1458
      %v1830 = vunpack.c.l.b16 %v1468
      %v1831 = vunpack.c.l.b16 %v1482
      %v1832 = vunpack.c.l.b16 %v1492
      %v1833 = vunpack.c.l.b16 %v1506
      %v1834 = vunpack.c.l.b16 %v1516
      %v1835 = vunpack.c.l.b16 %v1530
      %v1836 = vunpack.c.l.b16 %v1540
      %v1837 = vunpack.c.l.b16 %v1554
      %v1838 = vunpack.c.l.b16 %v1564
      %v1839 = vunpack.c.l.b16 %v1578
      %v1840 = vunpack.c.l.b16 %v1588
      %v1841 = vunpack.c.l.b16 %v1602
      %v1842 = vunpack.c.l.b16 %v1612
      %v1843 = vunpack.c.l.b16 %v1626
      %v1844 = vunpack.c.l.b16 %v1636
      %v1845 = vunpack.c.l.b16 %v1650
      %v1846 = vunpack.c.l.b16 %v1660
      %v1847 = vunpack.c.l.b16 %v1674
      %v1848 = vunpack.c.l.b16 %v1684
      %v1849 = vunpack.c.l.b16 %v1698
      %v1850 = vunpack.c.l.b16 %v1708
      %v1851 = vunpack.c.l.b16 %v1722
      %v1852 = vunpack.c.l.b16 %v1732
      %v1853 = vunpack.c.l.b16 %v1746
      %v1854 = vunpack.c.l.b16 %v1756
      %v1855 = vunpack.c.l.b16 %v1770
      %v1856 = vunpack.c.l.b16 %v1780
      %v1857 = vunpack.c.l.b16 %v1794
      %v1858 = vunpack.c.l.b16 %v1804
      %v1859 = vunpack.c.l.b16 %v1818
      %v1860 = vunpack.c.l.b16 %v1828
      %v1861 = vpack.c.b16 %v1830, %v1829
      %v1862 = vpack.c.b16 %v1832, %v1831
      %v1863 = vpack.c.b16 %v1834, %v1833
      %v1864 = vpack.c.b16 %v1836, %v1835
      %v1865 = vpack.c.b16 %v1838, %v1837
      %v1866 = vpack.c.b16 %v1840, %v1839
      %v1867 = vpack.c.b16 %v1842, %v1841
      %v1868 = vpack.c.b16 %v1844, %v1843
      %v1869 = vpack.c.b16 %v1846, %v1845
      %v1870 = vpack.c.b16 %v1848, %v1847
      %v1871 = vpack.c.b16 %v1850, %v1849
      %v1872 = vpack.c.b16 %v1852, %v1851
      %v1873 = vpack.c.b16 %v1854, %v1853
      %v1874 = vpack.c.b16 %v1856, %v1855
      %v1875 = vpack.c.b16 %v1858, %v1857
      %v1876 = vpack.c.b16 %v1860, %v1859
      %1877 = vrot.lane.b32.xlu0 %v1861, 16
      %v1878 = vpop.permute.xlu0 %1877
      %1879 = vrot.lane.b32.xlu0 %v1862, 16
      %v1880 = vpop.permute.xlu0 %1879
      %1881 = vrot.lane.b32.xlu0 %v1863, 16
      %v1882 = vpop.permute.xlu0 %1881
      %1883 = vrot.lane.b32.xlu0 %v1864, 16
      %v1884 = vpop.permute.xlu0 %1883
      %1885 = vrot.lane.b32.xlu0 %v1865, 16
      %v1886 = vpop.permute.xlu0 %1885
      %1887 = vrot.lane.b32.xlu0 %v1866, 16
      %v1888 = vpop.permute.xlu0 %1887
      %1889 = vrot.lane.b32.xlu0 %v1867, 16
      %v1890 = vpop.permute.xlu0 %1889
      %1891 = vrot.lane.b32.xlu0 %v1868, 16
      %v1892 = vpop.permute.xlu0 %1891
      %1893 = vrot.lane.b32.xlu0 %v1869, 16
      %v1894 = vpop.permute.xlu0 %1893
      %1895 = vrot.lane.b32.xlu0 %v1870, 16
      %v1896 = vpop.permute.xlu0 %1895
      %1897 = vrot.lane.b32.xlu0 %v1871, 16
      %v1898 = vpop.permute.xlu0 %1897
      %1899 = vrot.lane.b32.xlu0 %v1872, 16
      %v1900 = vpop.permute.xlu0 %1899
      %1901 = vrot.lane.b32.xlu0 %v1873, 16
      %v1902 = vpop.permute.xlu0 %1901
      %1903 = vrot.lane.b32.xlu0 %v1874, 16
      %v1904 = vpop.permute.xlu0 %1903
      %1905 = vrot.lane.b32.xlu0 %v1875, 16
      %v1906 = vpop.permute.xlu0 %1905
      %1907 = vrot.lane.b32.xlu0 %v1876, 16
      %v1908 = vpop.permute.xlu0 %1907
      %vm1925 = vcmask 162944
      %1926 = vst.msk [vmem:[#allocation2] sm:$0xff] %vm1925, %v1878
      %1927 = vst.msk [vmem:[#allocation2 + $0x8] sm:$0xff] %vm1925, %v1880
      %1928 = vst.msk [vmem:[#allocation2 + $0x10] sm:$0xff] %vm1925, %v1882
      %1929 = vst.msk [vmem:[#allocation2 + $0x18] sm:$0xff] %vm1925, %v1884
      %1930 = vst.msk [vmem:[#allocation2 + $0x20] sm:$0xff] %vm1925, %v1886
      %1931 = vst.msk [vmem:[#allocation2 + $0x28] sm:$0xff] %vm1925, %v1888
      %1932 = vst.msk [vmem:[#allocation2 + $0x30] sm:$0xff] %vm1925, %v1890
      %1933 = vst.msk [vmem:[#allocation2 + $0x38] sm:$0xff] %vm1925, %v1892
      %1934 = vst.msk [vmem:[#allocation2 + $0x40] sm:$0xff] %vm1925, %v1894
      %1935 = vst.msk [vmem:[#allocation2 + $0x48] sm:$0xff] %vm1925, %v1896
      %1936 = vst.msk [vmem:[#allocation2 + $0x50] sm:$0xff] %vm1925, %v1898
      %1937 = vst.msk [vmem:[#allocation2 + $0x58] sm:$0xff] %vm1925, %v1900
      %1938 = vst.msk [vmem:[#allocation2 + $0x60] sm:$0xff] %vm1925, %v1902
      %1939 = vst.msk [vmem:[#allocation2 + $0x68] sm:$0xff] %vm1925, %v1904
      %1940 = vst.msk [vmem:[#allocation2 + $0x70] sm:$0xff] %vm1925, %v1906
      %1941 = vst.msk [vmem:[#allocation2 + $0x78] sm:$0xff] %vm1925, %v1908
      %v1942 = vld [vmem:[%s1219] sm:$0xe]
      %v1943 = vld [vmem:[%s1219 + $0x4] sm:$0xf]
      %v1944 = vld [vmem:[%s1219 + $0x8] sm:$0x1]
      %v1945 = vld [vmem:[%s1219 + $0xc] sm:$0xe]
      %v1946 = vld [vmem:[%s1219 + $0x10] sm:$0xf]
      %v1947 = vld [vmem:[%s1219 + $0x14] sm:$0x1]
      %v1948 = vld [vmem:[%s1219 + $0x18] sm:$0xe]
      %v1949 = vld [vmem:[%s1219 + $0x1c] sm:$0xf]
      %v1950 = vld [vmem:[%s1219 + $0x20] sm:$0x1]
      %v1951 = vld [vmem:[%s1219 + $0x24] sm:$0xe]
      %v1952 = vld [vmem:[%s1219 + $0x28] sm:$0xf]
      %v1953 = vld [vmem:[%s1219 + $0x2c] sm:$0x1]
      %v1954 = vld [vmem:[%s1219 + $0x30] sm:$0xe]
      %v1955 = vld [vmem:[%s1219 + $0x34] sm:$0xf]
      %v1956 = vld [vmem:[%s1219 + $0x38] sm:$0x1]
      %v1957 = vld [vmem:[%s1219 + $0x3c] sm:$0xe]
      %v1958 = vld [vmem:[%s1219 + $0x40] sm:$0xf]
      %v1959 = vld [vmem:[%s1219 + $0x44] sm:$0x1]
      %v1960 = vld [vmem:[%s1219 + $0x48] sm:$0xe]
      %v1961 = vld [vmem:[%s1219 + $0x4c] sm:$0xf]
      %v1962 = vld [vmem:[%s1219 + $0x50] sm:$0x1]
      %v1963 = vld [vmem:[%s1219 + $0x54] sm:$0xe]
      %v1964 = vld [vmem:[%s1219 + $0x58] sm:$0xf]
      %v1965 = vld [vmem:[%s1219 + $0x5c] sm:$0x1]
      %v1966 = vld [vmem:[%s1219 + $0x60] sm:$0xe]
      %v1967 = vld [vmem:[%s1219 + $0x64] sm:$0xf]
      %v1968 = vld [vmem:[%s1219 + $0x68] sm:$0x1]
      %v1969 = vld [vmem:[%s1219 + $0x6c] sm:$0xe]
      %v1970 = vld [vmem:[%s1219 + $0x70] sm:$0xf]
      %v1971 = vld [vmem:[%s1219 + $0x74] sm:$0x1]
      %v1972 = vld [vmem:[%s1219 + $0x78] sm:$0xe]
      %v1973 = vld [vmem:[%s1219 + $0x7c] sm:$0xf]
      %v1974 = vld [vmem:[%s1219 + $0x80] sm:$0x1]
      %v1975 = vld [vmem:[%s1219 + $0x84] sm:$0xe]
      %v1976 = vld [vmem:[%s1219 + $0x88] sm:$0xf]
      %v1977 = vld [vmem:[%s1219 + $0x8c] sm:$0x1]
      %v1978 = vld [vmem:[%s1219 + $0x90] sm:$0xe]
      %v1979 = vld [vmem:[%s1219 + $0x94] sm:$0xf]
      %v1980 = vld [vmem:[%s1219 + $0x98] sm:$0x1]
      %v1981 = vld [vmem:[%s1219 + $0x9c] sm:$0xe]
      %v1982 = vld [vmem:[%s1219 + $0xa0] sm:$0xf]
      %v1983 = vld [vmem:[%s1219 + $0xa4] sm:$0x1]
      %v1984 = vld [vmem:[%s1219 + $0xa8] sm:$0xe]
      %v1985 = vld [vmem:[%s1219 + $0xac] sm:$0xf]
      %v1986 = vld [vmem:[%s1219 + $0xb0] sm:$0x1]
      %v1987 = vld [vmem:[%s1219 + $0xb4] sm:$0xe]
      %v1988 = vld [vmem:[%s1219 + $0xb8] sm:$0xf]
      %v1989 = vld [vmem:[%s1219 + $0xbc] sm:$0x1]
      %v2038 = vrot.slane %v1942, 5
      %v2039 = vrot.slane %v2038, 4
      %v2040 = vrot.slane %v1943, 5
      %v2041 = vsel %vm990, %v2039, %v2040
      %v2042 = vrot.slane %v2040, 4
      %v2043 = vrot.slane %v1944, 5
      %v2044 = vsel %vm990, %v2042, %v2043
      %v2045 = vrot.slane %v1945, 5
      %v2046 = vrot.slane %v2045, 4
      %v2047 = vrot.slane %v1946, 5
      %v2048 = vsel %vm990, %v2046, %v2047
      %v2049 = vrot.slane %v2047, 4
      %v2050 = vrot.slane %v1947, 5
      %v2051 = vsel %vm990, %v2049, %v2050
      %v2052 = vrot.slane %v1948, 5
      %v2053 = vrot.slane %v2052, 4
      %v2054 = vrot.slane %v1949, 5
      %v2055 = vsel %vm990, %v2053, %v2054
      %v2056 = vrot.slane %v2054, 4
      %v2057 = vrot.slane %v1950, 5
      %v2058 = vsel %vm990, %v2056, %v2057
      %v2059 = vrot.slane %v1951, 5
      %v2060 = vrot.slane %v2059, 4
      %v2061 = vrot.slane %v1952, 5
      %v2062 = vsel %vm990, %v2060, %v2061
      %v2063 = vrot.slane %v2061, 4
      %v2064 = vrot.slane %v1953, 5
      %v2065 = vsel %vm990, %v2063, %v2064
      %v2066 = vrot.slane %v1954, 5
      %v2067 = vrot.slane %v2066, 4
      %v2068 = vrot.slane %v1955, 5
      %v2069 = vsel %vm990, %v2067, %v2068
      %v2070 = vrot.slane %v2068, 4
      %v2071 = vrot.slane %v1956, 5
      %v2072 = vsel %vm990, %v2070, %v2071
      %v2073 = vrot.slane %v1957, 5
      %v2074 = vrot.slane %v2073, 4
      %v2075 = vrot.slane %v1958, 5
      %v2076 = vsel %vm990, %v2074, %v2075
      %v2077 = vrot.slane %v2075, 4
      %v2078 = vrot.slane %v1959, 5
      %v2079 = vsel %vm990, %v2077, %v2078
      %v2080 = vrot.slane %v1960, 5
      %v2081 = vrot.slane %v2080, 4
      %v2082 = vrot.slane %v1961, 5
      %v2083 = vsel %vm990, %v2081, %v2082
      %v2084 = vrot.slane %v2082, 4
      %v2085 = vrot.slane %v1962, 5
      %v2086 = vsel %vm990, %v2084, %v2085
      %v2087 = vrot.slane %v1963, 5
      %v2088 = vrot.slane %v2087, 4
      %v2089 = vrot.slane %v1964, 5
      %v2090 = vsel %vm990, %v2088, %v2089
      %v2091 = vrot.slane %v2089, 4
      %v2092 = vrot.slane %v1965, 5
      %v2093 = vsel %vm990, %v2091, %v2092
      %v2094 = vrot.slane %v1966, 5
      %v2095 = vrot.slane %v2094, 4
      %v2096 = vrot.slane %v1967, 5
      %v2097 = vsel %vm990, %v2095, %v2096
      %v2098 = vrot.slane %v2096, 4
      %v2099 = vrot.slane %v1968, 5
      %v2100 = vsel %vm990, %v2098, %v2099
      %v2101 = vrot.slane %v1969, 5
      %v2102 = vrot.slane %v2101, 4
      %v2103 = vrot.slane %v1970, 5
      %v2104 = vsel %vm990, %v2102, %v2103
      %v2105 = vrot.slane %v2103, 4
      %v2106 = vrot.slane %v1971, 5
      %v2107 = vsel %vm990, %v2105, %v2106
      %v2108 = vrot.slane %v1972, 5
      %v2109 = vrot.slane %v2108, 4
      %v2110 = vrot.slane %v1973, 5
      %v2111 = vsel %vm990, %v2109, %v2110
      %v2112 = vrot.slane %v2110, 4
      %v2113 = vrot.slane %v1974, 5
      %v2114 = vsel %vm990, %v2112, %v2113
      %v2115 = vrot.slane %v1975, 5
      %v2116 = vrot.slane %v2115, 4
      %v2117 = vrot.slane %v1976, 5
      %v2118 = vsel %vm990, %v2116, %v2117
      %v2119 = vrot.slane %v2117, 4
      %v2120 = vrot.slane %v1977, 5
      %v2121 = vsel %vm990, %v2119, %v2120
      %v2122 = vrot.slane %v1978, 5
      %v2123 = vrot.slane %v2122, 4
      %v2124 = vrot.slane %v1979, 5
      %v2125 = vsel %vm990, %v2123, %v2124
      %v2126 = vrot.slane %v2124, 4
      %v2127 = vrot.slane %v1980, 5
      %v2128 = vsel %vm990, %v2126, %v2127
      %v2129 = vrot.slane %v1981, 5
      %v2130 = vrot.slane %v2129, 4
      %v2131 = vrot.slane %v1982, 5
      %v2132 = vsel %vm990, %v2130, %v2131
      %v2133 = vrot.slane %v2131, 4
      %v2134 = vrot.slane %v1983, 5
      %v2135 = vsel %vm990, %v2133, %v2134
      %v2136 = vrot.slane %v1984, 5
      %v2137 = vrot.slane %v2136, 4
      %v2138 = vrot.slane %v1985, 5
      %v2139 = vsel %vm990, %v2137, %v2138
      %v2140 = vrot.slane %v2138, 4
      %v2141 = vrot.slane %v1986, 5
      %v2142 = vsel %vm990, %v2140, %v2141
      %v2143 = vrot.slane %v1987, 5
      %v2144 = vrot.slane %v2143, 4
      %v2145 = vrot.slane %v1988, 5
      %v2146 = vsel %vm990, %v2144, %v2145
      %v2147 = vrot.slane %v2145, 4
      %v2148 = vrot.slane %v1989, 5
      %v2149 = vsel %vm990, %v2147, %v2148
      %v2150 = vunpack.c.l.b16 %v2041
      %v2151 = vunpack.c.l.b16 %v2044
      %v2152 = vunpack.c.l.b16 %v2048
      %v2153 = vunpack.c.l.b16 %v2051
      %v2154 = vunpack.c.l.b16 %v2055
      %v2155 = vunpack.c.l.b16 %v2058
      %v2156 = vunpack.c.l.b16 %v2062
      %v2157 = vunpack.c.l.b16 %v2065
      %v2158 = vunpack.c.l.b16 %v2069
      %v2159 = vunpack.c.l.b16 %v2072
      %v2160 = vunpack.c.l.b16 %v2076
      %v2161 = vunpack.c.l.b16 %v2079
      %v2162 = vunpack.c.l.b16 %v2083
      %v2163 = vunpack.c.l.b16 %v2086
      %v2164 = vunpack.c.l.b16 %v2090
      %v2165 = vunpack.c.l.b16 %v2093
      %v2166 = vunpack.c.l.b16 %v2097
      %v2167 = vunpack.c.l.b16 %v2100
      %v2168 = vunpack.c.l.b16 %v2104
      %v2169 = vunpack.c.l.b16 %v2107
      %v2170 = vunpack.c.l.b16 %v2111
      %v2171 = vunpack.c.l.b16 %v2114
      %v2172 = vunpack.c.l.b16 %v2118
      %v2173 = vunpack.c.l.b16 %v2121
      %v2174 = vunpack.c.l.b16 %v2125
      %v2175 = vunpack.c.l.b16 %v2128
      %v2176 = vunpack.c.l.b16 %v2132
      %v2177 = vunpack.c.l.b16 %v2135
      %v2178 = vunpack.c.l.b16 %v2139
      %v2179 = vunpack.c.l.b16 %v2142
      %v2180 = vunpack.c.l.b16 %v2146
      %v2181 = vunpack.c.l.b16 %v2149
      %v2182 = vpack.c.b16 %v2151, %v2150
      %v2183 = vpack.c.b16 %v2153, %v2152
      %v2184 = vpack.c.b16 %v2155, %v2154
      %v2185 = vpack.c.b16 %v2157, %v2156
      %v2186 = vpack.c.b16 %v2159, %v2158
      %v2187 = vpack.c.b16 %v2161, %v2160
      %v2188 = vpack.c.b16 %v2163, %v2162
      %v2189 = vpack.c.b16 %v2165, %v2164
      %v2190 = vpack.c.b16 %v2167, %v2166
      %v2191 = vpack.c.b16 %v2169, %v2168
      %v2192 = vpack.c.b16 %v2171, %v2170
      %v2193 = vpack.c.b16 %v2173, %v2172
      %v2194 = vpack.c.b16 %v2175, %v2174
      %v2195 = vpack.c.b16 %v2177, %v2176
      %v2196 = vpack.c.b16 %v2179, %v2178
      %v2197 = vpack.c.b16 %v2181, %v2180
      %2198 = vrot.lane.b32.xlu0 %v2182, 20
      %v2199 = vpop.permute.xlu0 %2198
      %2200 = vrot.lane.b32.xlu0 %v2183, 20
      %v2201 = vpop.permute.xlu0 %2200
      %2202 = vrot.lane.b32.xlu0 %v2184, 20
      %v2203 = vpop.permute.xlu0 %2202
      %2204 = vrot.lane.b32.xlu0 %v2185, 20
      %v2205 = vpop.permute.xlu0 %2204
      %2206 = vrot.lane.b32.xlu0 %v2186, 20
      %v2207 = vpop.permute.xlu0 %2206
      %2208 = vrot.lane.b32.xlu0 %v2187, 20
      %v2209 = vpop.permute.xlu0 %2208
      %2210 = vrot.lane.b32.xlu0 %v2188, 20
      %v2211 = vpop.permute.xlu0 %2210
      %2212 = vrot.lane.b32.xlu0 %v2189, 20
      %v2213 = vpop.permute.xlu0 %2212
      %2214 = vrot.lane.b32.xlu0 %v2190, 20
      %v2215 = vpop.permute.xlu0 %2214
      %2216 = vrot.lane.b32.xlu0 %v2191, 20
      %v2217 = vpop.permute.xlu0 %2216
      %2218 = vrot.lane.b32.xlu0 %v2192, 20
      %v2219 = vpop.permute.xlu0 %2218
      %2220 = vrot.lane.b32.xlu0 %v2193, 20
      %v2221 = vpop.permute.xlu0 %2220
      %2222 = vrot.lane.b32.xlu0 %v2194, 20
      %v2223 = vpop.permute.xlu0 %2222
      %2224 = vrot.lane.b32.xlu0 %v2195, 20
      %v2225 = vpop.permute.xlu0 %2224
      %2226 = vrot.lane.b32.xlu0 %v2196, 20
      %v2227 = vpop.permute.xlu0 %2226
      %2228 = vrot.lane.b32.xlu0 %v2197, 20
      %v2229 = vpop.permute.xlu0 %2228
      %vm2246 = vcmask 195744
      %2247 = vst.msk [vmem:[#allocation2] sm:$0xff] %vm2246, %v2199
      %2248 = vst.msk [vmem:[#allocation2 + $0x8] sm:$0xff] %vm2246, %v2201
      %2249 = vst.msk [vmem:[#allocation2 + $0x10] sm:$0xff] %vm2246, %v2203
      %2250 = vst.msk [vmem:[#allocation2 + $0x18] sm:$0xff] %vm2246, %v2205
      %2251 = vst.msk [vmem:[#allocation2 + $0x20] sm:$0xff] %vm2246, %v2207
      %2252 = vst.msk [vmem:[#allocation2 + $0x28] sm:$0xff] %vm2246, %v2209
      %2253 = vst.msk [vmem:[#allocation2 + $0x30] sm:$0xff] %vm2246, %v2211
      %2254 = vst.msk [vmem:[#allocation2 + $0x38] sm:$0xff] %vm2246, %v2213
      %2255 = vst.msk [vmem:[#allocation2 + $0x40] sm:$0xff] %vm2246, %v2215
      %2256 = vst.msk [vmem:[#allocation2 + $0x48] sm:$0xff] %vm2246, %v2217
      %2257 = vst.msk [vmem:[#allocation2 + $0x50] sm:$0xff] %vm2246, %v2219
      %2258 = vst.msk [vmem:[#allocation2 + $0x58] sm:$0xff] %vm2246, %v2221
      %2259 = vst.msk [vmem:[#allocation2 + $0x60] sm:$0xff] %vm2246, %v2223
      %2260 = vst.msk [vmem:[#allocation2 + $0x68] sm:$0xff] %vm2246, %v2225
      %2261 = vst.msk [vmem:[#allocation2 + $0x70] sm:$0xff] %vm2246, %v2227
      %2262 = vst.msk [vmem:[#allocation2 + $0x78] sm:$0xff] %vm2246, %v2229
      %s2263 = sadd.s32 %s195, 2
      %s2264 = smul.u32 %s2263, 3
      %s2265 = smul.addr %s2264, 4
      %s2266 = scalar_lea.vmem %s183, %s2265
      %v2267 = vld [vmem:[%s2266] sm:$0xf]
      %v2268 = vld [vmem:[%s2266 + $0x4] sm:$0xf]
      %v2269 = vld [vmem:[%s2266 + $0xc] sm:$0xf]
      %v2270 = vld [vmem:[%s2266 + $0x10] sm:$0xf]
      %v2271 = vld [vmem:[%s2266 + $0x18] sm:$0xf]
      %v2272 = vld [vmem:[%s2266 + $0x1c] sm:$0xf]
      %v2273 = vld [vmem:[%s2266 + $0x24] sm:$0xf]
      %v2274 = vld [vmem:[%s2266 + $0x28] sm:$0xf]
      %v2275 = vld [vmem:[%s2266 + $0x30] sm:$0xf]
      %v2276 = vld [vmem:[%s2266 + $0x34] sm:$0xf]
      %v2277 = vld [vmem:[%s2266 + $0x3c] sm:$0xf]
      %v2278 = vld [vmem:[%s2266 + $0x40] sm:$0xf]
      %v2279 = vld [vmem:[%s2266 + $0x48] sm:$0xf]
      %v2280 = vld [vmem:[%s2266 + $0x4c] sm:$0xf]
      %v2281 = vld [vmem:[%s2266 + $0x54] sm:$0xf]
      %v2282 = vld [vmem:[%s2266 + $0x58] sm:$0xf]
      %v2283 = vld [vmem:[%s2266 + $0x60] sm:$0xf]
      %v2284 = vld [vmem:[%s2266 + $0x64] sm:$0xf]
      %v2285 = vld [vmem:[%s2266 + $0x6c] sm:$0xf]
      %v2286 = vld [vmem:[%s2266 + $0x70] sm:$0xf]
      %v2287 = vld [vmem:[%s2266 + $0x78] sm:$0xf]
      %v2288 = vld [vmem:[%s2266 + $0x7c] sm:$0xf]
      %v2289 = vld [vmem:[%s2266 + $0x84] sm:$0xf]
      %v2290 = vld [vmem:[%s2266 + $0x88] sm:$0xf]
      %v2291 = vld [vmem:[%s2266 + $0x90] sm:$0xf]
      %v2292 = vld [vmem:[%s2266 + $0x94] sm:$0xf]
      %v2293 = vld [vmem:[%s2266 + $0x9c] sm:$0xf]
      %v2294 = vld [vmem:[%s2266 + $0xa0] sm:$0xf]
      %v2295 = vld [vmem:[%s2266 + $0xa8] sm:$0xf]
      %v2296 = vld [vmem:[%s2266 + $0xac] sm:$0xf]
      %v2297 = vld [vmem:[%s2266 + $0xb4] sm:$0xf]
      %v2298 = vld [vmem:[%s2266 + $0xb8] sm:$0xf]
      %v2331 = vunpack.c.l.b16 %v2267
      %v2332 = vunpack.c.l.b16 %v2268
      %v2333 = vunpack.c.l.b16 %v2269
      %v2334 = vunpack.c.l.b16 %v2270
      %v2335 = vunpack.c.l.b16 %v2271
      %v2336 = vunpack.c.l.b16 %v2272
      %v2337 = vunpack.c.l.b16 %v2273
      %v2338 = vunpack.c.l.b16 %v2274
      %v2339 = vunpack.c.l.b16 %v2275
      %v2340 = vunpack.c.l.b16 %v2276
      %v2341 = vunpack.c.l.b16 %v2277
      %v2342 = vunpack.c.l.b16 %v2278
      %v2343 = vunpack.c.l.b16 %v2279
      %v2344 = vunpack.c.l.b16 %v2280
      %v2345 = vunpack.c.l.b16 %v2281
      %v2346 = vunpack.c.l.b16 %v2282
      %v2347 = vunpack.c.l.b16 %v2283
      %v2348 = vunpack.c.l.b16 %v2284
      %v2349 = vunpack.c.l.b16 %v2285
      %v2350 = vunpack.c.l.b16 %v2286
      %v2351 = vunpack.c.l.b16 %v2287
      %v2352 = vunpack.c.l.b16 %v2288
      %v2353 = vunpack.c.l.b16 %v2289
      %v2354 = vunpack.c.l.b16 %v2290
      %v2355 = vunpack.c.l.b16 %v2291
      %v2356 = vunpack.c.l.b16 %v2292
      %v2357 = vunpack.c.l.b16 %v2293
      %v2358 = vunpack.c.l.b16 %v2294
      %v2359 = vunpack.c.l.b16 %v2295
      %v2360 = vunpack.c.l.b16 %v2296
      %v2361 = vunpack.c.l.b16 %v2297
      %v2362 = vunpack.c.l.b16 %v2298
      %v2363 = vpack.c.b16 %v2332, %v2331
      %v2364 = vpack.c.b16 %v2334, %v2333
      %v2365 = vpack.c.b16 %v2336, %v2335
      %v2366 = vpack.c.b16 %v2338, %v2337
      %v2367 = vpack.c.b16 %v2340, %v2339
      %v2368 = vpack.c.b16 %v2342, %v2341
      %v2369 = vpack.c.b16 %v2344, %v2343
      %v2370 = vpack.c.b16 %v2346, %v2345
      %v2371 = vpack.c.b16 %v2348, %v2347
      %v2372 = vpack.c.b16 %v2350, %v2349
      %v2373 = vpack.c.b16 %v2352, %v2351
      %v2374 = vpack.c.b16 %v2354, %v2353
      %v2375 = vpack.c.b16 %v2356, %v2355
      %v2376 = vpack.c.b16 %v2358, %v2357
      %v2377 = vpack.c.b16 %v2360, %v2359
      %v2378 = vpack.c.b16 %v2362, %v2361
      %2379 = vrot.lane.b32.xlu0 %v2363, 24
      %v2380 = vpop.permute.xlu0 %2379
      %2381 = vrot.lane.b32.xlu0 %v2364, 24
      %v2382 = vpop.permute.xlu0 %2381
      %2383 = vrot.lane.b32.xlu0 %v2365, 24
      %v2384 = vpop.permute.xlu0 %2383
      %2385 = vrot.lane.b32.xlu0 %v2366, 24
      %v2386 = vpop.permute.xlu0 %2385
      %2387 = vrot.lane.b32.xlu0 %v2367, 24
      %v2388 = vpop.permute.xlu0 %2387
      %2389 = vrot.lane.b32.xlu0 %v2368, 24
      %v2390 = vpop.permute.xlu0 %2389
      %2391 = vrot.lane.b32.xlu0 %v2369, 24
      %v2392 = vpop.permute.xlu0 %2391
      %2393 = vrot.lane.b32.xlu0 %v2370, 24
      %v2394 = vpop.permute.xlu0 %2393
      %2395 = vrot.lane.b32.xlu0 %v2371, 24
      %v2396 = vpop.permute.xlu0 %2395
      %2397 = vrot.lane.b32.xlu0 %v2372, 24
      %v2398 = vpop.permute.xlu0 %2397
      %2399 = vrot.lane.b32.xlu0 %v2373, 24
      %v2400 = vpop.permute.xlu0 %2399
      %2401 = vrot.lane.b32.xlu0 %v2374, 24
      %v2402 = vpop.permute.xlu0 %2401
      %2403 = vrot.lane.b32.xlu0 %v2375, 24
      %v2404 = vpop.permute.xlu0 %2403
      %2405 = vrot.lane.b32.xlu0 %v2376, 24
      %v2406 = vpop.permute.xlu0 %2405
      %2407 = vrot.lane.b32.xlu0 %v2377, 24
      %v2408 = vpop.permute.xlu0 %2407
      %2409 = vrot.lane.b32.xlu0 %v2378, 24
      %v2410 = vpop.permute.xlu0 %2409
      %vm2427 = vcmask 228544
      %2428 = vst.msk [vmem:[#allocation2] sm:$0xff] %vm2427, %v2380
      %2429 = vst.msk [vmem:[#allocation2 + $0x8] sm:$0xff] %vm2427, %v2382
      %2430 = vst.msk [vmem:[#allocation2 + $0x10] sm:$0xff] %vm2427, %v2384
      %2431 = vst.msk [vmem:[#allocation2 + $0x18] sm:$0xff] %vm2427, %v2386
      %2432 = vst.msk [vmem:[#allocation2 + $0x20] sm:$0xff] %vm2427, %v2388
      %2433 = vst.msk [vmem:[#allocation2 + $0x28] sm:$0xff] %vm2427, %v2390
      %2434 = vst.msk [vmem:[#allocation2 + $0x30] sm:$0xff] %vm2427, %v2392
      %2435 = vst.msk [vmem:[#allocation2 + $0x38] sm:$0xff] %vm2427, %v2394
      %2436 = vst.msk [vmem:[#allocation2 + $0x40] sm:$0xff] %vm2427, %v2396
      %2437 = vst.msk [vmem:[#allocation2 + $0x48] sm:$0xff] %vm2427, %v2398
      %2438 = vst.msk [vmem:[#allocation2 + $0x50] sm:$0xff] %vm2427, %v2400
      %2439 = vst.msk [vmem:[#allocation2 + $0x58] sm:$0xff] %vm2427, %v2402
      %2440 = vst.msk [vmem:[#allocation2 + $0x60] sm:$0xff] %vm2427, %v2404
      %2441 = vst.msk [vmem:[#allocation2 + $0x68] sm:$0xff] %vm2427, %v2406
      %2442 = vst.msk [vmem:[#allocation2 + $0x70] sm:$0xff] %vm2427, %v2408
      %2443 = vst.msk [vmem:[#allocation2 + $0x78] sm:$0xff] %vm2427, %v2410
      %v2444 = vld [vmem:[%s2266] sm:$0xf]
      %v2445 = vld [vmem:[%s2266 + $0x4] sm:$0xf]
      %v2446 = vld [vmem:[%s2266 + $0x8] sm:$0x1]
      %v2447 = vld [vmem:[%s2266 + $0xc] sm:$0xf]
      %v2448 = vld [vmem:[%s2266 + $0x10] sm:$0xf]
      %v2449 = vld [vmem:[%s2266 + $0x14] sm:$0x1]
      %v2450 = vld [vmem:[%s2266 + $0x18] sm:$0xf]
      %v2451 = vld [vmem:[%s2266 + $0x1c] sm:$0xf]
      %v2452 = vld [vmem:[%s2266 + $0x20] sm:$0x1]
      %v2453 = vld [vmem:[%s2266 + $0x24] sm:$0xf]
      %v2454 = vld [vmem:[%s2266 + $0x28] sm:$0xf]
      %v2455 = vld [vmem:[%s2266 + $0x2c] sm:$0x1]
      %v2456 = vld [vmem:[%s2266 + $0x30] sm:$0xf]
      %v2457 = vld [vmem:[%s2266 + $0x34] sm:$0xf]
      %v2458 = vld [vmem:[%s2266 + $0x38] sm:$0x1]
      %v2459 = vld [vmem:[%s2266 + $0x3c] sm:$0xf]
      %v2460 = vld [vmem:[%s2266 + $0x40] sm:$0xf]
      %v2461 = vld [vmem:[%s2266 + $0x44] sm:$0x1]
      %v2462 = vld [vmem:[%s2266 + $0x48] sm:$0xf]
      %v2463 = vld [vmem:[%s2266 + $0x4c] sm:$0xf]
      %v2464 = vld [vmem:[%s2266 + $0x50] sm:$0x1]
      %v2465 = vld [vmem:[%s2266 + $0x54] sm:$0xf]
      %v2466 = vld [vmem:[%s2266 + $0x58] sm:$0xf]
      %v2467 = vld [vmem:[%s2266 + $0x5c] sm:$0x1]
      %v2468 = vld [vmem:[%s2266 + $0x60] sm:$0xf]
      %v2469 = vld [vmem:[%s2266 + $0x64] sm:$0xf]
      %v2470 = vld [vmem:[%s2266 + $0x68] sm:$0x1]
      %v2471 = vld [vmem:[%s2266 + $0x6c] sm:$0xf]
      %v2472 = vld [vmem:[%s2266 + $0x70] sm:$0xf]
      %v2473 = vld [vmem:[%s2266 + $0x74] sm:$0x1]
      %v2474 = vld [vmem:[%s2266 + $0x78] sm:$0xf]
      %v2475 = vld [vmem:[%s2266 + $0x7c] sm:$0xf]
      %v2476 = vld [vmem:[%s2266 + $0x80] sm:$0x1]
      %v2477 = vld [vmem:[%s2266 + $0x84] sm:$0xf]
      %v2478 = vld [vmem:[%s2266 + $0x88] sm:$0xf]
      %v2479 = vld [vmem:[%s2266 + $0x8c] sm:$0x1]
      %v2480 = vld [vmem:[%s2266 + $0x90] sm:$0xf]
      %v2481 = vld [vmem:[%s2266 + $0x94] sm:$0xf]
      %v2482 = vld [vmem:[%s2266 + $0x98] sm:$0x1]
      %v2483 = vld [vmem:[%s2266 + $0x9c] sm:$0xf]
      %v2484 = vld [vmem:[%s2266 + $0xa0] sm:$0xf]
      %v2485 = vld [vmem:[%s2266 + $0xa4] sm:$0x1]
      %v2486 = vld [vmem:[%s2266 + $0xa8] sm:$0xf]
      %v2487 = vld [vmem:[%s2266 + $0xac] sm:$0xf]
      %v2488 = vld [vmem:[%s2266 + $0xb0] sm:$0x1]
      %v2489 = vld [vmem:[%s2266 + $0xb4] sm:$0xf]
      %v2490 = vld [vmem:[%s2266 + $0xb8] sm:$0xf]
      %v2491 = vld [vmem:[%s2266 + $0xbc] sm:$0x1]
      %v2493 = vshrl.u32 %v2444, 16
      %v2495 = vrot.slane %v2493, 4
      %v2496 = vshll.u32 %v2444, 16
      %v2498 = vrot.slane %v2496, 5
      %v2499 = vor.u32 %v2495, %v2498
      %v2500 = vrot.slane %v2499, 4
      %v2502 = vshll.u32 %v2445, 16
      %v2504 = vrot.slane %v2502, 5
      %v2505 = vsel %vm394, %v2500, %v2504
      %v2506 = vshrl.u32 %v2445, 16
      %v2508 = vrot.slane %v2506, 4
      %v2509 = vor.u32 %v2508, %v2504
      %v2510 = vrot.slane %v2509, 4
      %v2512 = vshll.u32 %v2446, 16
      %v2514 = vrot.slane %v2512, 5
      %v2515 = vsel %vm394, %v2510, %v2514
      %v2517 = vshrl.u32 %v2447, 16
      %v2519 = vrot.slane %v2517, 4
      %v2520 = vshll.u32 %v2447, 16
      %v2522 = vrot.slane %v2520, 5
      %v2523 = vor.u32 %v2519, %v2522
      %v2524 = vrot.slane %v2523, 4
      %v2526 = vshll.u32 %v2448, 16
      %v2528 = vrot.slane %v2526, 5
      %v2529 = vsel %vm394, %v2524, %v2528
      %v2530 = vshrl.u32 %v2448, 16
      %v2532 = vrot.slane %v2530, 4
      %v2533 = vor.u32 %v2532, %v2528
      %v2534 = vrot.slane %v2533, 4
      %v2536 = vshll.u32 %v2449, 16
      %v2538 = vrot.slane %v2536, 5
      %v2539 = vsel %vm394, %v2534, %v2538
      %v2541 = vshrl.u32 %v2450, 16
      %v2543 = vrot.slane %v2541, 4
      %v2544 = vshll.u32 %v2450, 16
      %v2546 = vrot.slane %v2544, 5
      %v2547 = vor.u32 %v2543, %v2546
      %v2548 = vrot.slane %v2547, 4
      %v2550 = vshll.u32 %v2451, 16
      %v2552 = vrot.slane %v2550, 5
      %v2553 = vsel %vm394, %v2548, %v2552
      %v2554 = vshrl.u32 %v2451, 16
      %v2556 = vrot.slane %v2554, 4
      %v2557 = vor.u32 %v2556, %v2552
      %v2558 = vrot.slane %v2557, 4
      %v2560 = vshll.u32 %v2452, 16
      %v2562 = vrot.slane %v2560, 5
      %v2563 = vsel %vm394, %v2558, %v2562
      %v2565 = vshrl.u32 %v2453, 16
      %v2567 = vrot.slane %v2565, 4
      %v2568 = vshll.u32 %v2453, 16
      %v2570 = vrot.slane %v2568, 5
      %v2571 = vor.u32 %v2567, %v2570
      %v2572 = vrot.slane %v2571, 4
      %v2574 = vshll.u32 %v2454, 16
      %v2576 = vrot.slane %v2574, 5
      %v2577 = vsel %vm394, %v2572, %v2576
      %v2578 = vshrl.u32 %v2454, 16
      %v2580 = vrot.slane %v2578, 4
      %v2581 = vor.u32 %v2580, %v2576
      %v2582 = vrot.slane %v2581, 4
      %v2584 = vshll.u32 %v2455, 16
      %v2586 = vrot.slane %v2584, 5
      %v2587 = vsel %vm394, %v2582, %v2586
      %v2589 = vshrl.u32 %v2456, 16
      %v2591 = vrot.slane %v2589, 4
      %v2592 = vshll.u32 %v2456, 16
      %v2594 = vrot.slane %v2592, 5
      %v2595 = vor.u32 %v2591, %v2594
      %v2596 = vrot.slane %v2595, 4
      %v2598 = vshll.u32 %v2457, 16
      %v2600 = vrot.slane %v2598, 5
      %v2601 = vsel %vm394, %v2596, %v2600
      %v2602 = vshrl.u32 %v2457, 16
      %v2604 = vrot.slane %v2602, 4
      %v2605 = vor.u32 %v2604, %v2600
      %v2606 = vrot.slane %v2605, 4
      %v2608 = vshll.u32 %v2458, 16
      %v2610 = vrot.slane %v2608, 5
      %v2611 = vsel %vm394, %v2606, %v2610
      %v2613 = vshrl.u32 %v2459, 16
      %v2615 = vrot.slane %v2613, 4
      %v2616 = vshll.u32 %v2459, 16
      %v2618 = vrot.slane %v2616, 5
      %v2619 = vor.u32 %v2615, %v2618
      %v2620 = vrot.slane %v2619, 4
      %v2622 = vshll.u32 %v2460, 16
      %v2624 = vrot.slane %v2622, 5
      %v2625 = vsel %vm394, %v2620, %v2624
      %v2626 = vshrl.u32 %v2460, 16
      %v2628 = vrot.slane %v2626, 4
      %v2629 = vor.u32 %v2628, %v2624
      %v2630 = vrot.slane %v2629, 4
      %v2632 = vshll.u32 %v2461, 16
      %v2634 = vrot.slane %v2632, 5
      %v2635 = vsel %vm394, %v2630, %v2634
      %v2637 = vshrl.u32 %v2462, 16
      %v2639 = vrot.slane %v2637, 4
      %v2640 = vshll.u32 %v2462, 16
      %v2642 = vrot.slane %v2640, 5
      %v2643 = vor.u32 %v2639, %v2642
      %v2644 = vrot.slane %v2643, 4
      %v2646 = vshll.u32 %v2463, 16
      %v2648 = vrot.slane %v2646, 5
      %v2649 = vsel %vm394, %v2644, %v2648
      %v2650 = vshrl.u32 %v2463, 16
      %v2652 = vrot.slane %v2650, 4
      %v2653 = vor.u32 %v2652, %v2648
      %v2654 = vrot.slane %v2653, 4
      %v2656 = vshll.u32 %v2464, 16
      %v2658 = vrot.slane %v2656, 5
      %v2659 = vsel %vm394, %v2654, %v2658
      %v2661 = vshrl.u32 %v2465, 16
      %v2663 = vrot.slane %v2661, 4
      %v2664 = vshll.u32 %v2465, 16
      %v2666 = vrot.slane %v2664, 5
      %v2667 = vor.u32 %v2663, %v2666
      %v2668 = vrot.slane %v2667, 4
      %v2670 = vshll.u32 %v2466, 16
      %v2672 = vrot.slane %v2670, 5
      %v2673 = vsel %vm394, %v2668, %v2672
      %v2674 = vshrl.u32 %v2466, 16
      %v2676 = vrot.slane %v2674, 4
      %v2677 = vor.u32 %v2676, %v2672
      %v2678 = vrot.slane %v2677, 4
      %v2680 = vshll.u32 %v2467, 16
      %v2682 = vrot.slane %v2680, 5
      %v2683 = vsel %vm394, %v2678, %v2682
      %v2685 = vshrl.u32 %v2468, 16
      %v2687 = vrot.slane %v2685, 4
      %v2688 = vshll.u32 %v2468, 16
      %v2690 = vrot.slane %v2688, 5
      %v2691 = vor.u32 %v2687, %v2690
      %v2692 = vrot.slane %v2691, 4
      %v2694 = vshll.u32 %v2469, 16
      %v2696 = vrot.slane %v2694, 5
      %v2697 = vsel %vm394, %v2692, %v2696
      %v2698 = vshrl.u32 %v2469, 16
      %v2700 = vrot.slane %v2698, 4
      %v2701 = vor.u32 %v2700, %v2696
      %v2702 = vrot.slane %v2701, 4
      %v2704 = vshll.u32 %v2470, 16
      %v2706 = vrot.slane %v2704, 5
      %v2707 = vsel %vm394, %v2702, %v2706
      %v2709 = vshrl.u32 %v2471, 16
      %v2711 = vrot.slane %v2709, 4
      %v2712 = vshll.u32 %v2471, 16
      %v2714 = vrot.slane %v2712, 5
      %v2715 = vor.u32 %v2711, %v2714
      %v2716 = vrot.slane %v2715, 4
      %v2718 = vshll.u32 %v2472, 16
      %v2720 = vrot.slane %v2718, 5
      %v2721 = vsel %vm394, %v2716, %v2720
      %v2722 = vshrl.u32 %v2472, 16
      %v2724 = vrot.slane %v2722, 4
      %v2725 = vor.u32 %v2724, %v2720
      %v2726 = vrot.slane %v2725, 4
      %v2728 = vshll.u32 %v2473, 16
      %v2730 = vrot.slane %v2728, 5
      %v2731 = vsel %vm394, %v2726, %v2730
      %v2733 = vshrl.u32 %v2474, 16
      %v2735 = vrot.slane %v2733, 4
      %v2736 = vshll.u32 %v2474, 16
      %v2738 = vrot.slane %v2736, 5
      %v2739 = vor.u32 %v2735, %v2738
      %v2740 = vrot.slane %v2739, 4
      %v2742 = vshll.u32 %v2475, 16
      %v2744 = vrot.slane %v2742, 5
      %v2745 = vsel %vm394, %v2740, %v2744
      %v2746 = vshrl.u32 %v2475, 16
      %v2748 = vrot.slane %v2746, 4
      %v2749 = vor.u32 %v2748, %v2744
      %v2750 = vrot.slane %v2749, 4
      %v2752 = vshll.u32 %v2476, 16
      %v2754 = vrot.slane %v2752, 5
      %v2755 = vsel %vm394, %v2750, %v2754
      %v2757 = vshrl.u32 %v2477, 16
      %v2759 = vrot.slane %v2757, 4
      %v2760 = vshll.u32 %v2477, 16
      %v2762 = vrot.slane %v2760, 5
      %v2763 = vor.u32 %v2759, %v2762
      %v2764 = vrot.slane %v2763, 4
      %v2766 = vshll.u32 %v2478, 16
      %v2768 = vrot.slane %v2766, 5
      %v2769 = vsel %vm394, %v2764, %v2768
      %v2770 = vshrl.u32 %v2478, 16
      %v2772 = vrot.slane %v2770, 4
      %v2773 = vor.u32 %v2772, %v2768
      %v2774 = vrot.slane %v2773, 4
      %v2776 = vshll.u32 %v2479, 16
      %v2778 = vrot.slane %v2776, 5
      %v2779 = vsel %vm394, %v2774, %v2778
      %v2781 = vshrl.u32 %v2480, 16
      %v2783 = vrot.slane %v2781, 4
      %v2784 = vshll.u32 %v2480, 16
      %v2786 = vrot.slane %v2784, 5
      %v2787 = vor.u32 %v2783, %v2786
      %v2788 = vrot.slane %v2787, 4
      %v2790 = vshll.u32 %v2481, 16
      %v2792 = vrot.slane %v2790, 5
      %v2793 = vsel %vm394, %v2788, %v2792
      %v2794 = vshrl.u32 %v2481, 16
      %v2796 = vrot.slane %v2794, 4
      %v2797 = vor.u32 %v2796, %v2792
      %v2798 = vrot.slane %v2797, 4
      %v2800 = vshll.u32 %v2482, 16
      %v2802 = vrot.slane %v2800, 5
      %v2803 = vsel %vm394, %v2798, %v2802
      %v2805 = vshrl.u32 %v2483, 16
      %v2807 = vrot.slane %v2805, 4
      %v2808 = vshll.u32 %v2483, 16
      %v2810 = vrot.slane %v2808, 5
      %v2811 = vor.u32 %v2807, %v2810
      %v2812 = vrot.slane %v2811, 4
      %v2814 = vshll.u32 %v2484, 16
      %v2816 = vrot.slane %v2814, 5
      %v2817 = vsel %vm394, %v2812, %v2816
      %v2818 = vshrl.u32 %v2484, 16
      %v2820 = vrot.slane %v2818, 4
      %v2821 = vor.u32 %v2820, %v2816
      %v2822 = vrot.slane %v2821, 4
      %v2824 = vshll.u32 %v2485, 16
      %v2826 = vrot.slane %v2824, 5
      %v2827 = vsel %vm394, %v2822, %v2826
      %v2829 = vshrl.u32 %v2486, 16
      %v2831 = vrot.slane %v2829, 4
      %v2832 = vshll.u32 %v2486, 16
      %v2834 = vrot.slane %v2832, 5
      %v2835 = vor.u32 %v2831, %v2834
      %v2836 = vrot.slane %v2835, 4
      %v2838 = vshll.u32 %v2487, 16
      %v2840 = vrot.slane %v2838, 5
      %v2841 = vsel %vm394, %v2836, %v2840
      %v2842 = vshrl.u32 %v2487, 16
      %v2844 = vrot.slane %v2842, 4
      %v2845 = vor.u32 %v2844, %v2840
      %v2846 = vrot.slane %v2845, 4
      %v2848 = vshll.u32 %v2488, 16
      %v2850 = vrot.slane %v2848, 5
      %v2851 = vsel %vm394, %v2846, %v2850
      %v2853 = vshrl.u32 %v2489, 16
      %v2855 = vrot.slane %v2853, 4
      %v2856 = vshll.u32 %v2489, 16
      %v2858 = vrot.slane %v2856, 5
      %v2859 = vor.u32 %v2855, %v2858
      %v2860 = vrot.slane %v2859, 4
      %v2862 = vshll.u32 %v2490, 16
      %v2864 = vrot.slane %v2862, 5
      %v2865 = vsel %vm394, %v2860, %v2864
      %v2866 = vshrl.u32 %v2490, 16
      %v2868 = vrot.slane %v2866, 4
      %v2869 = vor.u32 %v2868, %v2864
      %v2870 = vrot.slane %v2869, 4
      %v2872 = vshll.u32 %v2491, 16
      %v2874 = vrot.slane %v2872, 5
      %v2875 = vsel %vm394, %v2870, %v2874
      %v2876 = vunpack.c.l.b16 %v2505
      %v2877 = vunpack.c.l.b16 %v2515
      %v2878 = vunpack.c.l.b16 %v2529
      %v2879 = vunpack.c.l.b16 %v2539
      %v2880 = vunpack.c.l.b16 %v2553
      %v2881 = vunpack.c.l.b16 %v2563
      %v2882 = vunpack.c.l.b16 %v2577
      %v2883 = vunpack.c.l.b16 %v2587
      %v2884 = vunpack.c.l.b16 %v2601
      %v2885 = vunpack.c.l.b16 %v2611
      %v2886 = vunpack.c.l.b16 %v2625
      %v2887 = vunpack.c.l.b16 %v2635
      %v2888 = vunpack.c.l.b16 %v2649
      %v2889 = vunpack.c.l.b16 %v2659
      %v2890 = vunpack.c.l.b16 %v2673
      %v2891 = vunpack.c.l.b16 %v2683
      %v2892 = vunpack.c.l.b16 %v2697
      %v2893 = vunpack.c.l.b16 %v2707
      %v2894 = vunpack.c.l.b16 %v2721
      %v2895 = vunpack.c.l.b16 %v2731
      %v2896 = vunpack.c.l.b16 %v2745
      %v2897 = vunpack.c.l.b16 %v2755
      %v2898 = vunpack.c.l.b16 %v2769
      %v2899 = vunpack.c.l.b16 %v2779
      %v2900 = vunpack.c.l.b16 %v2793
      %v2901 = vunpack.c.l.b16 %v2803
      %v2902 = vunpack.c.l.b16 %v2817
      %v2903 = vunpack.c.l.b16 %v2827
      %v2904 = vunpack.c.l.b16 %v2841
      %v2905 = vunpack.c.l.b16 %v2851
      %v2906 = vunpack.c.l.b16 %v2865
      %v2907 = vunpack.c.l.b16 %v2875
      %v2908 = vpack.c.b16 %v2877, %v2876
      %v2909 = vpack.c.b16 %v2879, %v2878
      %v2910 = vpack.c.b16 %v2881, %v2880
      %v2911 = vpack.c.b16 %v2883, %v2882
      %v2912 = vpack.c.b16 %v2885, %v2884
      %v2913 = vpack.c.b16 %v2887, %v2886
      %v2914 = vpack.c.b16 %v2889, %v2888
      %v2915 = vpack.c.b16 %v2891, %v2890
      %v2916 = vpack.c.b16 %v2893, %v2892
      %v2917 = vpack.c.b16 %v2895, %v2894
      %v2918 = vpack.c.b16 %v2897, %v2896
      %v2919 = vpack.c.b16 %v2899, %v2898
      %v2920 = vpack.c.b16 %v2901, %v2900
      %v2921 = vpack.c.b16 %v2903, %v2902
      %v2922 = vpack.c.b16 %v2905, %v2904
      %v2923 = vpack.c.b16 %v2907, %v2906
      %2924 = vrot.lane.b32.xlu0 %v2908, 28
      %v2925 = vpop.permute.xlu0 %2924
      %2926 = vrot.lane.b32.xlu0 %v2909, 28
      %v2927 = vpop.permute.xlu0 %2926
      %2928 = vrot.lane.b32.xlu0 %v2910, 28
      %v2929 = vpop.permute.xlu0 %2928
      %2930 = vrot.lane.b32.xlu0 %v2911, 28
      %v2931 = vpop.permute.xlu0 %2930
      %2932 = vrot.lane.b32.xlu0 %v2912, 28
      %v2933 = vpop.permute.xlu0 %2932
      %2934 = vrot.lane.b32.xlu0 %v2913, 28
      %v2935 = vpop.permute.xlu0 %2934
      %2936 = vrot.lane.b32.xlu0 %v2914, 28
      %v2937 = vpop.permute.xlu0 %2936
      %2938 = vrot.lane.b32.xlu0 %v2915, 28
      %v2939 = vpop.permute.xlu0 %2938
      %2940 = vrot.lane.b32.xlu0 %v2916, 28
      %v2941 = vpop.permute.xlu0 %2940
      %2942 = vrot.lane.b32.xlu0 %v2917, 28
      %v2943 = vpop.permute.xlu0 %2942
      %2944 = vrot.lane.b32.xlu0 %v2918, 28
      %v2945 = vpop.permute.xlu0 %2944
      %2946 = vrot.lane.b32.xlu0 %v2919, 28
      %v2947 = vpop.permute.xlu0 %2946
      %2948 = vrot.lane.b32.xlu0 %v2920, 28
      %v2949 = vpop.permute.xlu0 %2948
      %2950 = vrot.lane.b32.xlu0 %v2921, 28
      %v2951 = vpop.permute.xlu0 %2950
      %2952 = vrot.lane.b32.xlu0 %v2922, 28
      %v2953 = vpop.permute.xlu0 %2952
      %2954 = vrot.lane.b32.xlu0 %v2923, 28
      %v2955 = vpop.permute.xlu0 %2954
      %vm2972 = vcmask 261344
      %2973 = vst.msk [vmem:[#allocation2] sm:$0xff] %vm2972, %v2925
      %2974 = vst.msk [vmem:[#allocation2 + $0x8] sm:$0xff] %vm2972, %v2927
      %2975 = vst.msk [vmem:[#allocation2 + $0x10] sm:$0xff] %vm2972, %v2929
      %2976 = vst.msk [vmem:[#allocation2 + $0x18] sm:$0xff] %vm2972, %v2931
      %2977 = vst.msk [vmem:[#allocation2 + $0x20] sm:$0xff] %vm2972, %v2933
      %2978 = vst.msk [vmem:[#allocation2 + $0x28] sm:$0xff] %vm2972, %v2935
      %2979 = vst.msk [vmem:[#allocation2 + $0x30] sm:$0xff] %vm2972, %v2937
      %2980 = vst.msk [vmem:[#allocation2 + $0x38] sm:$0xff] %vm2972, %v2939
      %2981 = vst.msk [vmem:[#allocation2 + $0x40] sm:$0xff] %vm2972, %v2941
      %2982 = vst.msk [vmem:[#allocation2 + $0x48] sm:$0xff] %vm2972, %v2943
      %2983 = vst.msk [vmem:[#allocation2 + $0x50] sm:$0xff] %vm2972, %v2945
      %2984 = vst.msk [vmem:[#allocation2 + $0x58] sm:$0xff] %vm2972, %v2947
      %2985 = vst.msk [vmem:[#allocation2 + $0x60] sm:$0xff] %vm2972, %v2949
      %2986 = vst.msk [vmem:[#allocation2 + $0x68] sm:$0xff] %vm2972, %v2951
      %2987 = vst.msk [vmem:[#allocation2 + $0x70] sm:$0xff] %vm2972, %v2953
      %2988 = vst.msk [vmem:[#allocation2 + $0x78] sm:$0xff] %vm2972, %v2955
      %v2989 = vld [vmem:[%s2266] sm:$0xe]
      %v2990 = vld [vmem:[%s2266 + $0x4] sm:$0xf]
      %v2991 = vld [vmem:[%s2266 + $0x8] sm:$0x1]
      %v2992 = vld [vmem:[%s2266 + $0xc] sm:$0xe]
      %v2993 = vld [vmem:[%s2266 + $0x10] sm:$0xf]
      %v2994 = vld [vmem:[%s2266 + $0x14] sm:$0x1]
      %v2995 = vld [vmem:[%s2266 + $0x18] sm:$0xe]
      %v2996 = vld [vmem:[%s2266 + $0x1c] sm:$0xf]
      %v2997 = vld [vmem:[%s2266 + $0x20] sm:$0x1]
      %v2998 = vld [vmem:[%s2266 + $0x24] sm:$0xe]
      %v2999 = vld [vmem:[%s2266 + $0x28] sm:$0xf]
      %v3000 = vld [vmem:[%s2266 + $0x2c] sm:$0x1]
      %v3001 = vld [vmem:[%s2266 + $0x30] sm:$0xe]
      %v3002 = vld [vmem:[%s2266 + $0x34] sm:$0xf]
      %v3003 = vld [vmem:[%s2266 + $0x38] sm:$0x1]
      %v3004 = vld [vmem:[%s2266 + $0x3c] sm:$0xe]
      %v3005 = vld [vmem:[%s2266 + $0x40] sm:$0xf]
      %v3006 = vld [vmem:[%s2266 + $0x44] sm:$0x1]
      %v3007 = vld [vmem:[%s2266 + $0x48] sm:$0xe]
      %v3008 = vld [vmem:[%s2266 + $0x4c] sm:$0xf]
      %v3009 = vld [vmem:[%s2266 + $0x50] sm:$0x1]
      %v3010 = vld [vmem:[%s2266 + $0x54] sm:$0xe]
      %v3011 = vld [vmem:[%s2266 + $0x58] sm:$0xf]
      %v3012 = vld [vmem:[%s2266 + $0x5c] sm:$0x1]
      %v3013 = vld [vmem:[%s2266 + $0x60] sm:$0xe]
      %v3014 = vld [vmem:[%s2266 + $0x64] sm:$0xf]
      %v3015 = vld [vmem:[%s2266 + $0x68] sm:$0x1]
      %v3016 = vld [vmem:[%s2266 + $0x6c] sm:$0xe]
      %v3017 = vld [vmem:[%s2266 + $0x70] sm:$0xf]
      %v3018 = vld [vmem:[%s2266 + $0x74] sm:$0x1]
      %v3019 = vld [vmem:[%s2266 + $0x78] sm:$0xe]
      %v3020 = vld [vmem:[%s2266 + $0x7c] sm:$0xf]
      %v3021 = vld [vmem:[%s2266 + $0x80] sm:$0x1]
      %v3022 = vld [vmem:[%s2266 + $0x84] sm:$0xe]
      %v3023 = vld [vmem:[%s2266 + $0x88] sm:$0xf]
      %v3024 = vld [vmem:[%s2266 + $0x8c] sm:$0x1]
      %v3025 = vld [vmem:[%s2266 + $0x90] sm:$0xe]
      %v3026 = vld [vmem:[%s2266 + $0x94] sm:$0xf]
      %v3027 = vld [vmem:[%s2266 + $0x98] sm:$0x1]
      %v3028 = vld [vmem:[%s2266 + $0x9c] sm:$0xe]
      %v3029 = vld [vmem:[%s2266 + $0xa0] sm:$0xf]
      %v3030 = vld [vmem:[%s2266 + $0xa4] sm:$0x1]
      %v3031 = vld [vmem:[%s2266 + $0xa8] sm:$0xe]
      %v3032 = vld [vmem:[%s2266 + $0xac] sm:$0xf]
      %v3033 = vld [vmem:[%s2266 + $0xb0] sm:$0x1]
      %v3034 = vld [vmem:[%s2266 + $0xb4] sm:$0xe]
      %v3035 = vld [vmem:[%s2266 + $0xb8] sm:$0xf]
      %v3036 = vld [vmem:[%s2266 + $0xbc] sm:$0x1]
      %v3085 = vrot.slane %v2989, 5
      %v3086 = vrot.slane %v3085, 4
      %v3087 = vrot.slane %v2990, 5
      %v3088 = vsel %vm990, %v3086, %v3087
      %v3089 = vrot.slane %v3087, 4
      %v3090 = vrot.slane %v2991, 5
      %v3091 = vsel %vm990, %v3089, %v3090
      %v3092 = vrot.slane %v2992, 5
      %v3093 = vrot.slane %v3092, 4
      %v3094 = vrot.slane %v2993, 5
      %v3095 = vsel %vm990, %v3093, %v3094
      %v3096 = vrot.slane %v3094, 4
      %v3097 = vrot.slane %v2994, 5
      %v3098 = vsel %vm990, %v3096, %v3097
      %v3099 = vrot.slane %v2995, 5
      %v3100 = vrot.slane %v3099, 4
      %v3101 = vrot.slane %v2996, 5
      %v3102 = vsel %vm990, %v3100, %v3101
      %v3103 = vrot.slane %v3101, 4
      %v3104 = vrot.slane %v2997, 5
      %v3105 = vsel %vm990, %v3103, %v3104
      %v3106 = vrot.slane %v2998, 5
      %v3107 = vrot.slane %v3106, 4
      %v3108 = vrot.slane %v2999, 5
      %v3109 = vsel %vm990, %v3107, %v3108
      %v3110 = vrot.slane %v3108, 4
      %v3111 = vrot.slane %v3000, 5
      %v3112 = vsel %vm990, %v3110, %v3111
      %v3113 = vrot.slane %v3001, 5
      %v3114 = vrot.slane %v3113, 4
      %v3115 = vrot.slane %v3002, 5
      %v3116 = vsel %vm990, %v3114, %v3115
      %v3117 = vrot.slane %v3115, 4
      %v3118 = vrot.slane %v3003, 5
      %v3119 = vsel %vm990, %v3117, %v3118
      %v3120 = vrot.slane %v3004, 5
      %v3121 = vrot.slane %v3120, 4
      %v3122 = vrot.slane %v3005, 5
      %v3123 = vsel %vm990, %v3121, %v3122
      %v3124 = vrot.slane %v3122, 4
      %v3125 = vrot.slane %v3006, 5
      %v3126 = vsel %vm990, %v3124, %v3125
      %v3127 = vrot.slane %v3007, 5
      %v3128 = vrot.slane %v3127, 4
      %v3129 = vrot.slane %v3008, 5
      %v3130 = vsel %vm990, %v3128, %v3129
      %v3131 = vrot.slane %v3129, 4
      %v3132 = vrot.slane %v3009, 5
      %v3133 = vsel %vm990, %v3131, %v3132
      %v3134 = vrot.slane %v3010, 5
      %v3135 = vrot.slane %v3134, 4
      %v3136 = vrot.slane %v3011, 5
      %v3137 = vsel %vm990, %v3135, %v3136
      %v3138 = vrot.slane %v3136, 4
      %v3139 = vrot.slane %v3012, 5
      %v3140 = vsel %vm990, %v3138, %v3139
      %v3141 = vrot.slane %v3013, 5
      %v3142 = vrot.slane %v3141, 4
      %v3143 = vrot.slane %v3014, 5
      %v3144 = vsel %vm990, %v3142, %v3143
      %v3145 = vrot.slane %v3143, 4
      %v3146 = vrot.slane %v3015, 5
      %v3147 = vsel %vm990, %v3145, %v3146
      %v3148 = vrot.slane %v3016, 5
      %v3149 = vrot.slane %v3148, 4
      %v3150 = vrot.slane %v3017, 5
      %v3151 = vsel %vm990, %v3149, %v3150
      %v3152 = vrot.slane %v3150, 4
      %v3153 = vrot.slane %v3018, 5
      %v3154 = vsel %vm990, %v3152, %v3153
      %v3155 = vrot.slane %v3019, 5
      %v3156 = vrot.slane %v3155, 4
      %v3157 = vrot.slane %v3020, 5
      %v3158 = vsel %vm990, %v3156, %v3157
      %v3159 = vrot.slane %v3157, 4
      %v3160 = vrot.slane %v3021, 5
      %v3161 = vsel %vm990, %v3159, %v3160
      %v3162 = vrot.slane %v3022, 5
      %v3163 = vrot.slane %v3162, 4
      %v3164 = vrot.slane %v3023, 5
      %v3165 = vsel %vm990, %v3163, %v3164
      %v3166 = vrot.slane %v3164, 4
      %v3167 = vrot.slane %v3024, 5
      %v3168 = vsel %vm990, %v3166, %v3167
      %v3169 = vrot.slane %v3025, 5
      %v3170 = vrot.slane %v3169, 4
      %v3171 = vrot.slane %v3026, 5
      %v3172 = vsel %vm990, %v3170, %v3171
      %v3173 = vrot.slane %v3171, 4
      %v3174 = vrot.slane %v3027, 5
      %v3175 = vsel %vm990, %v3173, %v3174
      %v3176 = vrot.slane %v3028, 5
      %v3177 = vrot.slane %v3176, 4
      %v3178 = vrot.slane %v3029, 5
      %v3179 = vsel %vm990, %v3177, %v3178
      %v3180 = vrot.slane %v3178, 4
      %v3181 = vrot.slane %v3030, 5
      %v3182 = vsel %vm990, %v3180, %v3181
      %v3183 = vrot.slane %v3031, 5
      %v3184 = vrot.slane %v3183, 4
      %v3185 = vrot.slane %v3032, 5
      %v3186 = vsel %vm990, %v3184, %v3185
      %v3187 = vrot.slane %v3185, 4
      %v3188 = vrot.slane %v3033, 5
      %v3189 = vsel %vm990, %v3187, %v3188
      %v3190 = vrot.slane %v3034, 5
      %v3191 = vrot.slane %v3190, 4
      %v3192 = vrot.slane %v3035, 5
      %v3193 = vsel %vm990, %v3191, %v3192
      %v3194 = vrot.slane %v3192, 4
      %v3195 = vrot.slane %v3036, 5
      %v3196 = vsel %vm990, %v3194, %v3195
      %v3197 = vunpack.c.l.b16 %v3088
      %v3198 = vunpack.c.l.b16 %v3091
      %v3199 = vunpack.c.l.b16 %v3095
      %v3200 = vunpack.c.l.b16 %v3098
      %v3201 = vunpack.c.l.b16 %v3102
      %v3202 = vunpack.c.l.b16 %v3105
      %v3203 = vunpack.c.l.b16 %v3109
      %v3204 = vunpack.c.l.b16 %v3112
      %v3205 = vunpack.c.l.b16 %v3116
      %v3206 = vunpack.c.l.b16 %v3119
      %v3207 = vunpack.c.l.b16 %v3123
      %v3208 = vunpack.c.l.b16 %v3126
      %v3209 = vunpack.c.l.b16 %v3130
      %v3210 = vunpack.c.l.b16 %v3133
      %v3211 = vunpack.c.l.b16 %v3137
      %v3212 = vunpack.c.l.b16 %v3140
      %v3213 = vunpack.c.l.b16 %v3144
      %v3214 = vunpack.c.l.b16 %v3147
      %v3215 = vunpack.c.l.b16 %v3151
      %v3216 = vunpack.c.l.b16 %v3154
      %v3217 = vunpack.c.l.b16 %v3158
      %v3218 = vunpack.c.l.b16 %v3161
      %v3219 = vunpack.c.l.b16 %v3165
      %v3220 = vunpack.c.l.b16 %v3168
      %v3221 = vunpack.c.l.b16 %v3172
      %v3222 = vunpack.c.l.b16 %v3175
      %v3223 = vunpack.c.l.b16 %v3179
      %v3224 = vunpack.c.l.b16 %v3182
      %v3225 = vunpack.c.l.b16 %v3186
      %v3226 = vunpack.c.l.b16 %v3189
      %v3227 = vunpack.c.l.b16 %v3193
      %v3228 = vunpack.c.l.b16 %v3196
      %v3229 = vpack.c.b16 %v3198, %v3197
      %v3230 = vpack.c.b16 %v3200, %v3199
      %v3231 = vpack.c.b16 %v3202, %v3201
      %v3232 = vpack.c.b16 %v3204, %v3203
      %v3233 = vpack.c.b16 %v3206, %v3205
      %v3234 = vpack.c.b16 %v3208, %v3207
      %v3235 = vpack.c.b16 %v3210, %v3209
      %v3236 = vpack.c.b16 %v3212, %v3211
      %v3237 = vpack.c.b16 %v3214, %v3213
      %v3238 = vpack.c.b16 %v3216, %v3215
      %v3239 = vpack.c.b16 %v3218, %v3217
      %v3240 = vpack.c.b16 %v3220, %v3219
      %v3241 = vpack.c.b16 %v3222, %v3221
      %v3242 = vpack.c.b16 %v3224, %v3223
      %v3243 = vpack.c.b16 %v3226, %v3225
      %v3244 = vpack.c.b16 %v3228, %v3227
      %3245 = vrot.lane.b32.xlu0 %v3229, 32
      %v3246 = vpop.permute.xlu0 %3245
      %3247 = vrot.lane.b32.xlu0 %v3230, 32
      %v3248 = vpop.permute.xlu0 %3247
      %3249 = vrot.lane.b32.xlu0 %v3231, 32
      %v3250 = vpop.permute.xlu0 %3249
      %3251 = vrot.lane.b32.xlu0 %v3232, 32
      %v3252 = vpop.permute.xlu0 %3251
      %3253 = vrot.lane.b32.xlu0 %v3233, 32
      %v3254 = vpop.permute.xlu0 %3253
      %3255 = vrot.lane.b32.xlu0 %v3234, 32
      %v3256 = vpop.permute.xlu0 %3255
      %3257 = vrot.lane.b32.xlu0 %v3235, 32
      %v3258 = vpop.permute.xlu0 %3257
      %3259 = vrot.lane.b32.xlu0 %v3236, 32
      %v3260 = vpop.permute.xlu0 %3259
      %3261 = vrot.lane.b32.xlu0 %v3237, 32
      %v3262 = vpop.permute.xlu0 %3261
      %3263 = vrot.lane.b32.xlu0 %v3238, 32
      %v3264 = vpop.permute.xlu0 %3263
      %3265 = vrot.lane.b32.xlu0 %v3239, 32
      %v3266 = vpop.permute.xlu0 %3265
      %3267 = vrot.lane.b32.xlu0 %v3240, 32
      %v3268 = vpop.permute.xlu0 %3267
      %3269 = vrot.lane.b32.xlu0 %v3241, 32
      %v3270 = vpop.permute.xlu0 %3269
      %3271 = vrot.lane.b32.xlu0 %v3242, 32
      %v3272 = vpop.permute.xlu0 %3271
      %3273 = vrot.lane.b32.xlu0 %v3243, 32
      %v3274 = vpop.permute.xlu0 %3273
      %3275 = vrot.lane.b32.xlu0 %v3244, 32
      %v3276 = vpop.permute.xlu0 %3275
      %vm3293 = vcmask 294144
      %3294 = vst.msk [vmem:[#allocation2] sm:$0xff] %vm3293, %v3246
      %3295 = vst.msk [vmem:[#allocation2 + $0x8] sm:$0xff] %vm3293, %v3248
      %3296 = vst.msk [vmem:[#allocation2 + $0x10] sm:$0xff] %vm3293, %v3250
      %3297 = vst.msk [vmem:[#allocation2 + $0x18] sm:$0xff] %vm3293, %v3252
      %3298 = vst.msk [vmem:[#allocation2 + $0x20] sm:$0xff] %vm3293, %v3254
      %3299 = vst.msk [vmem:[#allocation2 + $0x28] sm:$0xff] %vm3293, %v3256
      %3300 = vst.msk [vmem:[#allocation2 + $0x30] sm:$0xff] %vm3293, %v3258
      %3301 = vst.msk [vmem:[#allocation2 + $0x38] sm:$0xff] %vm3293, %v3260
      %3302 = vst.msk [vmem:[#allocation2 + $0x40] sm:$0xff] %vm3293, %v3262
      %3303 = vst.msk [vmem:[#allocation2 + $0x48] sm:$0xff] %vm3293, %v3264
      %3304 = vst.msk [vmem:[#allocation2 + $0x50] sm:$0xff] %vm3293, %v3266
      %3305 = vst.msk [vmem:[#allocation2 + $0x58] sm:$0xff] %vm3293, %v3268
      %3306 = vst.msk [vmem:[#allocation2 + $0x60] sm:$0xff] %vm3293, %v3270
      %3307 = vst.msk [vmem:[#allocation2 + $0x68] sm:$0xff] %vm3293, %v3272
      %3308 = vst.msk [vmem:[#allocation2 + $0x70] sm:$0xff] %vm3293, %v3274
      %3309 = vst.msk [vmem:[#allocation2 + $0x78] sm:$0xff] %vm3293, %v3276
      %v3310 = vld [vmem:[#allocation2] sm:$0xff]
      %v3311 = vld [vmem:[#allocation2 + $0x8] sm:$0xff]
      %v3312 = vld [vmem:[#allocation2 + $0x10] sm:$0xff]
      %v3313 = vld [vmem:[#allocation2 + $0x18] sm:$0xff]
      %v3314 = vld [vmem:[#allocation2 + $0x20] sm:$0xff]
      %v3315 = vld [vmem:[#allocation2 + $0x28] sm:$0xff]
      %v3316 = vld [vmem:[#allocation2 + $0x30] sm:$0xff]
      %v3317 = vld [vmem:[#allocation2 + $0x38] sm:$0xff]
      %v3318 = vld [vmem:[#allocation2 + $0x40] sm:$0xff]
      %v3319 = vld [vmem:[#allocation2 + $0x48] sm:$0xff]
      %v3320 = vld [vmem:[#allocation2 + $0x50] sm:$0xff]
      %v3321 = vld [vmem:[#allocation2 + $0x58] sm:$0xff]
      %v3322 = vld [vmem:[#allocation2 + $0x60] sm:$0xff]
      %v3323 = vld [vmem:[#allocation2 + $0x68] sm:$0xff]
      %v3324 = vld [vmem:[#allocation2 + $0x70] sm:$0xff]
      %v3325 = vld [vmem:[#allocation2 + $0x78] sm:$0xff]
      %v3326 = vld [vmem:[%s1] sm:$0xf]
      %v3327 = vld [vmem:[%s1 + $0x4] sm:$0xf]
      %v3328 = vld [vmem:[%s1 + $0x8] sm:$0xf]
      %v3329 = vld [vmem:[%s1 + $0xc] sm:$0xf]
      %v3330 = vld [vmem:[%s1 + $0x10] sm:$0x3]
      %v3331 = vld [vmem:[%s2] sm:$0x1]
      %v3333 = vlaneseq
      %v3334 = vshrl.u32 %v3333, 7
      %v3335 = vsub.s32 0, %v3334
      %v3336 = vrot.slane %v3331, %v3335
      %v3343 = vunpack.c.l.b16 %v3326
      %v3344 = vunpack.c.l.b16 %v3327
      %v3345 = vunpack.c.l.b16 %v3328
      %v3346 = vunpack.c.l.b16 %v3329
      %v3347 = vunpack.c.l.b16 %v3330
      %v3348 = vpack.c.b16 %v3344, %v3343
      %v3349 = vpack.c.b16 %v3346, %v3345
      %v3350 = vpack.c.b16 %v3347, %v3347
      %vm3353 = vcmask 293888
      %v3355 = vsel %vm3353, %v3310, 0
      %v3358 = vsel %vm3353, %v3311, 0
      %v3361 = vsel %vm3353, %v3312, 0
      %v3364 = vsel %vm3353, %v3313, 0
      %v3367 = vsel %vm3353, %v3314, 0
      %v3370 = vsel %vm3353, %v3315, 0
      %v3373 = vsel %vm3353, %v3316, 0
      %v3376 = vsel %vm3353, %v3317, 0
      %v3379 = vsel %vm3353, %v3318, 0
      %v3382 = vsel %vm3353, %v3319, 0
      %v3385 = vsel %vm3353, %v3320, 0
      %v3388 = vsel %vm3353, %v3321, 0
      %v3391 = vsel %vm3353, %v3322, 0
      %v3394 = vsel %vm3353, %v3323, 0
      %v3397 = vsel %vm3353, %v3324, 0
      %v3400 = vsel %vm3353, %v3325, 0
      %vm3402 = vcmask 1041408
      %v3404 = vsel %vm3402, %v3350, 0
      %3406 = vmatprep.subr.bf16.mxu0 0
      %3407 = vmatpush1.bf16.msra.mxu0 %v3348
      %3408 = vmatprep.subr.bf16.mxu0 0
      %3409 = vmatpush1.bf16.msra.mxu0 %v3349
      %3410 = vmatprep.subr.bf16.mxu0 0
      %3411 = vmatpush1.bf16.msra.mxu0 %v3404
      %3412 = vmatprep.subr.bf16.mxu0 0
      %3413 = vmatpush1.bf16.msra.mxu0 0
      %3414 = vmatprep.subr.bf16.mxu0 0
      %3415 = vmatpush1.bf16.msra.mxu0 0
      %3416 = vmatprep.subr.bf16.mxu0 0
      %3417 = vmatpush1.bf16.msra.mxu0 0
      %3418 = vmatprep.subr.bf16.mxu0 0
      %3419 = vmatpush1.bf16.msra.mxu0 0
      %3420 = vmatprep.subr.bf16.mxu0 0
      %3421 = vmatpush1.bf16.msra.mxu0 0
      %3422 = vmatprep.subr.bf16.mxu0 0
      %3423 = vmatpush1.bf16.msra.mxu0 0
      %3424 = vmatprep.subr.bf16.mxu0 0
      %3425 = vmatpush1.bf16.msra.mxu0 0
      %3426 = vmatprep.subr.bf16.mxu0 0
      %3427 = vmatpush1.bf16.msra.mxu0 0
      %3428 = vmatprep.subr.bf16.mxu0 0
      %3429 = vmatpush1.bf16.msra.mxu0 0
      %3430 = vmatprep.subr.bf16.mxu0 0
      %3431 = vmatpush1.bf16.msra.mxu0 0
      %3432 = vmatprep.subr.bf16.mxu0 0
      %3433 = vmatpush1.bf16.msra.mxu0 0
      %3434 = vmatprep.subr.bf16.mxu0 0
      %3435 = vmatpush1.bf16.msra.mxu0 0
      %3436 = vmatprep.subr.bf16.mxu0 0
      %3437 = vmatpush1.bf16.msra.mxu0 0
      %3438 = vmatprep.mubr.bf16.mxu0 0
      %3439 = vmatmul.mubr.bf16.gmra.mrb[0].mxu0 %v3355
      %v3440 = vpop.f32.mrb[0].mxu0
      %v3441 = vadd.f32 %v3336, %v3440
      %v3442 = vpop.f32.mrb[0].mxu0
      %v3443 = vpop.f32.mrb[0].mxu0
      %v3444 = vadd.f32 %v3336, %v3443
      %v3445 = vpop.f32.mrb[0].mxu0
      %3446 = vmatprep.mubr.bf16.mxu0 0
      %3447 = vmatmul.mubr.bf16.gmra.mrb[0].mxu0 %v3358
      %v3448 = vpop.f32.mrb[0].mxu0
      %v3449 = vadd.f32 %v3336, %v3448
      %v3450 = vpop.f32.mrb[0].mxu0
      %v3451 = vpop.f32.mrb[0].mxu0
      %v3452 = vadd.f32 %v3336, %v3451
      %v3453 = vpop.f32.mrb[0].mxu0
      %3454 = vmatprep.mubr.bf16.mxu0 0
      %3455 = vmatmul.mubr.bf16.gmra.mrb[0].mxu0 %v3361
      %v3456 = vpop.f32.mrb[0].mxu0
      %v3457 = vadd.f32 %v3336, %v3456
      %v3458 = vpop.f32.mrb[0].mxu0
      %v3459 = vpop.f32.mrb[0].mxu0
      %v3460 = vadd.f32 %v3336, %v3459
      %v3461 = vpop.f32.mrb[0].mxu0
      %3462 = vmatprep.mubr.bf16.mxu0 0
      %3463 = vmatmul.mubr.bf16.gmra.mrb[0].mxu0 %v3364
      %v3464 = vpop.f32.mrb[0].mxu0
      %v3465 = vadd.f32 %v3336, %v3464
      %v3466 = vpop.f32.mrb[0].mxu0
      %v3467 = vpop.f32.mrb[0].mxu0
      %v3468 = vadd.f32 %v3336, %v3467
      %v3469 = vpop.f32.mrb[0].mxu0
      %3470 = vmatprep.mubr.bf16.mxu0 0
      %3471 = vmatmul.mubr.bf16.gmra.mrb[0].mxu0 %v3367
      %v3472 = vpop.f32.mrb[0].mxu0
      %v3473 = vadd.f32 %v3336, %v3472
      %v3474 = vpop.f32.mrb[0].mxu0
      %v3475 = vpop.f32.mrb[0].mxu0
      %v3476 = vadd.f32 %v3336, %v3475
      %v3477 = vpop.f32.mrb[0].mxu0
      %3478 = vmatprep.mubr.bf16.mxu0 0
      %3479 = vmatmul.mubr.bf16.gmra.mrb[0].mxu0 %v3370
      %v3480 = vpop.f32.mrb[0].mxu0
      %v3481 = vadd.f32 %v3336, %v3480
      %v3482 = vpop.f32.mrb[0].mxu0
      %v3483 = vpop.f32.mrb[0].mxu0
      %v3484 = vadd.f32 %v3336, %v3483
      %v3485 = vpop.f32.mrb[0].mxu0
      %3486 = vmatprep.mubr.bf16.mxu0 0
      %3487 = vmatmul.mubr.bf16.gmra.mrb[0].mxu0 %v3373
      %v3488 = vpop.f32.mrb[0].mxu0
      %v3489 = vadd.f32 %v3336, %v3488
      %v3490 = vpop.f32.mrb[0].mxu0
      %v3491 = vpop.f32.mrb[0].mxu0
      %v3492 = vadd.f32 %v3336, %v3491
      %v3493 = vpop.f32.mrb[0].mxu0
      %3494 = vmatprep.mubr.bf16.mxu0 0
      %3495 = vmatmul.mubr.bf16.gmra.mrb[0].mxu0 %v3376
      %v3496 = vpop.f32.mrb[0].mxu0
      %v3497 = vadd.f32 %v3336, %v3496
      %v3498 = vpop.f32.mrb[0].mxu0
      %v3499 = vpop.f32.mrb[0].mxu0
      %v3500 = vadd.f32 %v3336, %v3499
      %v3501 = vpop.f32.mrb[0].mxu0
      %3502 = vmatprep.mubr.bf16.mxu0 0
      %3503 = vmatmul.mubr.bf16.gmra.mrb[0].mxu0 %v3379
      %v3504 = vpop.f32.mrb[0].mxu0
      %v3505 = vadd.f32 %v3336, %v3504
      %v3506 = vpop.f32.mrb[0].mxu0
      %v3507 = vpop.f32.mrb[0].mxu0
      %v3508 = vadd.f32 %v3336, %v3507
      %v3509 = vpop.f32.mrb[0].mxu0
      %3510 = vmatprep.mubr.bf16.mxu0 0
      %3511 = vmatmul.mubr.bf16.gmra.mrb[0].mxu0 %v3382
      %v3512 = vpop.f32.mrb[0].mxu0
      %v3513 = vadd.f32 %v3336, %v3512
      %v3514 = vpop.f32.mrb[0].mxu0
      %v3515 = vpop.f32.mrb[0].mxu0
      %v3516 = vadd.f32 %v3336, %v3515
      %v3517 = vpop.f32.mrb[0].mxu0
      %3518 = vmatprep.mubr.bf16.mxu0 0
      %3519 = vmatmul.mubr.bf16.gmra.mrb[0].mxu0 %v3385
      %v3520 = vpop.f32.mrb[0].mxu0
      %v3521 = vadd.f32 %v3336, %v3520
      %v3522 = vpop.f32.mrb[0].mxu0
      %v3523 = vpop.f32.mrb[0].mxu0
      %v3524 = vadd.f32 %v3336, %v3523
      %v3525 = vpop.f32.mrb[0].mxu0
      %3526 = vmatprep.mubr.bf16.mxu0 0
      %3527 = vmatmul.mubr.bf16.gmra.mrb[0].mxu0 %v3388
      %v3528 = vpop.f32.mrb[0].mxu0
      %v3529 = vadd.f32 %v3336, %v3528
      %v3530 = vpop.f32.mrb[0].mxu0
      %v3531 = vpop.f32.mrb[0].mxu0
      %v3532 = vadd.f32 %v3336, %v3531
      %v3533 = vpop.f32.mrb[0].mxu0
      %3534 = vmatprep.mubr.bf16.mxu0 0
      %3535 = vmatmul.mubr.bf16.gmra.mrb[0].mxu0 %v3391
      %v3536 = vpop.f32.mrb[0].mxu0
      %v3537 = vadd.f32 %v3336, %v3536
      %v3538 = vpop.f32.mrb[0].mxu0
      %v3539 = vpop.f32.mrb[0].mxu0
      %v3540 = vadd.f32 %v3336, %v3539
      %v3541 = vpop.f32.mrb[0].mxu0
      %3542 = vmatprep.mubr.bf16.mxu0 0
      %3543 = vmatmul.mubr.bf16.gmra.mrb[0].mxu0 %v3394
      %v3544 = vpop.f32.mrb[0].mxu0
      %v3545 = vadd.f32 %v3336, %v3544
      %v3546 = vpop.f32.mrb[0].mxu0
      %v3547 = vpop.f32.mrb[0].mxu0
      %v3548 = vadd.f32 %v3336, %v3547
      %v3549 = vpop.f32.mrb[0].mxu0
      %3550 = vmatprep.mubr.bf16.mxu0 0
      %3551 = vmatmul.mubr.bf16.gmra.mrb[0].mxu0 %v3397
      %v3552 = vpop.f32.mrb[0].mxu0
      %v3553 = vadd.f32 %v3336, %v3552
      %v3554 = vpop.f32.mrb[0].mxu0
      %v3555 = vpop.f32.mrb[0].mxu0
      %v3556 = vadd.f32 %v3336, %v3555
      %v3557 = vpop.f32.mrb[0].mxu0
      %3558 = vmatprep.mubr.bf16.mxu0 0
      %3559 = vmatmul.mubr.bf16.gmra.mrb[0].mxu0 %v3400
      %v3560 = vpop.f32.mrb[0].mxu0
      %v3561 = vadd.f32 %v3336, %v3560
      %v3562 = vpop.f32.mrb[0].mxu0
      %v3563 = vpop.f32.mrb[0].mxu0
      %v3564 = vadd.f32 %v3336, %v3563
      %v3565 = vpop.f32.mrb[0].mxu0
      %3566 = vdwg.mxu0
      %v3567 = vmax.f32 %v3441, 0.0
      %v3568 = vmax.f32 %v3444, 0.0
      %v3569 = vmax.f32 %v3449, 0.0
      %v3570 = vmax.f32 %v3452, 0.0
      %v3571 = vmax.f32 %v3457, 0.0
      %v3572 = vmax.f32 %v3460, 0.0
      %v3573 = vmax.f32 %v3465, 0.0
      %v3574 = vmax.f32 %v3468, 0.0
      %v3575 = vmax.f32 %v3473, 0.0
      %v3576 = vmax.f32 %v3476, 0.0
      %v3577 = vmax.f32 %v3481, 0.0
      %v3578 = vmax.f32 %v3484, 0.0
      %v3579 = vmax.f32 %v3489, 0.0
      %v3580 = vmax.f32 %v3492, 0.0
      %v3581 = vmax.f32 %v3497, 0.0
      %v3582 = vmax.f32 %v3500, 0.0
      %v3583 = vmax.f32 %v3505, 0.0
      %v3584 = vmax.f32 %v3508, 0.0
      %v3585 = vmax.f32 %v3513, 0.0
      %v3586 = vmax.f32 %v3516, 0.0
      %v3587 = vmax.f32 %v3521, 0.0
      %v3588 = vmax.f32 %v3524, 0.0
      %v3589 = vmax.f32 %v3529, 0.0
      %v3590 = vmax.f32 %v3532, 0.0
      %v3591 = vmax.f32 %v3537, 0.0
      %v3592 = vmax.f32 %v3540, 0.0
      %v3593 = vmax.f32 %v3545, 0.0
      %v3594 = vmax.f32 %v3548, 0.0
      %v3595 = vmax.f32 %v3553, 0.0
      %v3596 = vmax.f32 %v3556, 0.0
      %v3597 = vmax.f32 %v3561, 0.0
      %v3598 = vmax.f32 %v3564, 0.0
      %3599 = vst [vmem:[%s192] sm:$0xff] %v3567
      %3600 = vst [vmem:[%s192 + $0x8] sm:$0xff] %v3568
      %3601 = vst [vmem:[%s192 + $0x10] sm:$0xff] %v3569
      %3602 = vst [vmem:[%s192 + $0x18] sm:$0xff] %v3570
      %3603 = vst [vmem:[%s192 + $0x20] sm:$0xff] %v3571
      %3604 = vst [vmem:[%s192 + $0x28] sm:$0xff] %v3572
      %3605 = vst [vmem:[%s192 + $0x30] sm:$0xff] %v3573
      %3606 = vst [vmem:[%s192 + $0x38] sm:$0xff] %v3574
      %3607 = vst [vmem:[%s192 + $0x40] sm:$0xff] %v3575
      %3608 = vst [vmem:[%s192 + $0x48] sm:$0xff] %v3576
      %3609 = vst [vmem:[%s192 + $0x50] sm:$0xff] %v3577
      %3610 = vst [vmem:[%s192 + $0x58] sm:$0xff] %v3578
      %3611 = vst [vmem:[%s192 + $0x60] sm:$0xff] %v3579
      %3612 = vst [vmem:[%s192 + $0x68] sm:$0xff] %v3580
      %3613 = vst [vmem:[%s192 + $0x70] sm:$0xff] %v3581
      %3614 = vst [vmem:[%s192 + $0x78] sm:$0xff] %v3582
      %3615 = vst [vmem:[%s192 + $0x80] sm:$0xff] %v3583
      %3616 = vst [vmem:[%s192 + $0x88] sm:$0xff] %v3584
      %3617 = vst [vmem:[%s192 + $0x90] sm:$0xff] %v3585
      %3618 = vst [vmem:[%s192 + $0x98] sm:$0xff] %v3586
      %3619 = vst [vmem:[%s192 + $0xa0] sm:$0xff] %v3587
      %3620 = vst [vmem:[%s192 + $0xa8] sm:$0xff] %v3588
      %3621 = vst [vmem:[%s192 + $0xb0] sm:$0xff] %v3589
      %3622 = vst [vmem:[%s192 + $0xb8] sm:$0xff] %v3590
      %3623 = vst [vmem:[%s192 + $0xc0] sm:$0xff] %v3591
      %3624 = vst [vmem:[%s192 + $0xc8] sm:$0xff] %v3592
      %3625 = vst [vmem:[%s192 + $0xd0] sm:$0xff] %v3593
      %3626 = vst [vmem:[%s192 + $0xd8] sm:$0xff] %v3594
      %3627 = vst [vmem:[%s192 + $0xe0] sm:$0xff] %v3595
      %3628 = vst [vmem:[%s192 + $0xe8] sm:$0xff] %v3596
      %3629 = vst [vmem:[%s192 + $0xf0] sm:$0xff] %v3597
      %3630 = vst [vmem:[%s192 + $0xf8] sm:$0xff] %v3598
      %s3631 = smul.u32 32, %s19
      %p3632 = scmp.lt.s32.totalorder %s18, 1
      %s3633 = scalar_select %p3632, %s18, 1
      %p3634 = scmp.lt.s32.totalorder %s3631, 31
      %s3635 = scalar_select %p3634, %s3631, 31
      %s3636 = smul.addr %s3633, 32
      %s3637 = sadd.s32 %s3635, %s3636
      %s3638 = smul.addr %s3637, 8
      %s3639 = scalar_lea.vmem %s3, %s3638
      // Predicated region
      $region33: #{conv_forward.1} parent=31 // pred_check
        %p3640 = pneg %p114
      $region34: #{conv_forward.1} parent=31 // pred_check_branch
        %3642 = sbr.rel (%p3640) target = $region36
      $region35: #{conv_forward.1} parent=31 // pred_region
        %s3643 = smul.u32 32, %s19
      $region36: #{conv_forward.1} parent=31 // pred_fallthru
        _
    $region32: #{conv_forward.1} parent=5 // pred_fallthru
      _
    %p3644 = scmp.le.s32.totalorder 2, %s9
    // Predicated region
    $region37: #{conv_forward.1} parent=5 // pred_check
      %p3645 = pneg %p3644
    $region38: #{conv_forward.1} parent=5 // pred_check_branch
      %3647 = sbr.rel (%p3645) target = $region40
    $region39: #{conv_forward.1} parent=5 // pred_region
      %s3648 = ssub.s32 %s9, 2
      // Predicated region
      $region41: #{conv_forward.1} parent=39 // pred_check
        %p3649 = pneg %p120
      $region42: #{conv_forward.1} parent=39 // pred_check_branch
        %3651 = sbr.rel (%p3649) target = $region44
      $region43: #{conv_forward.1} parent=39 // pred_region
        %s3652 = smul.u32 32, %s21
        %p3653 = scmp.lt.s32.totalorder %s20, 1
        %s3654 = scalar_select %p3653, %s20, 1
        %p3655 = scmp.lt.s32.totalorder %s3652, 31
        %s3656 = scalar_select %p3655, %s3652, 31
        %s3657 = smul.addr %s3654, 32
        %s3658 = sadd.s32 %s3656, %s3657
        %s3659 = smul.addr %s3658, 8
        %s3660 = scalar_lea.vmem %s3, %s3659
      $region44: #{conv_forward.1} parent=39 // pred_fallthru
        _
    $region40: #{conv_forward.1} parent=5 // pred_fallthru
      _
  $region6: #{conv_forward.1} parent=0 // loop_footer
    %s13 = sadd.s32 1, %s9
  $region7: #{conv_forward.1} parent=0 // loop_footer_branch
    %8 = sbr.rel target = $region3
  $region8: #{conv_forward.1} parent=0 // loop_exit
    _

</llo_original>
